<compile_context>
chip_gen: v7x
topology: tpu7x:2x2x1
jax: 0.10.0
libtpu: 0.0.40
codegen_flags: <defaults>
</compile_context>

<pallas_src>
import jax
import jax.numpy as jnp
from jax import lax
from jax.experimental import pallas as pl
from jax.experimental.pallas import tpu as pltpu

LANE = 128
SUBLANE_BF16 = 16


def _round_up(x, m):
    return (x + m - 1) // m * m


def _conv3x3_kernel(x_ref, w_ref, b_ref, o_ref, xk_ref):
    # x_ref : (1, H_p, W_c, Cin_p)    bf16, full padded image (resident across row tiles)
    # w_ref : (3, 3*Cin_p, Cout_p)    bf16, kw-major packed weights (resident)
    # b_ref : (1, Cout_p)             f32 bias (resident)
    # o_ref : (1, TH, W_c, Cout_p)    output row tile
    # xk_ref: (1, TH, W_c, 3*Cin_p)   bf16 scratch: kh-packed operand for the current tile
    rt = pl.program_id(1)
    _, th, w_c, cout_p = o_ref.shape
    cin3 = xk_ref.shape[-1]
    cin_p = cin3 // 3
    m = th * w_c
    row0 = rt * th

    # Fold the 3 kh taps into the contraction dim: row slices are on a non-tiled dim and the
    # destination lane offsets are multiples of 128 -> plain aligned copies (no relayouts).
    for kh in range(3):
        xk_ref[:, :, :, kh * cin_p:(kh + 1) * cin_p] = x_ref[:, pl.ds(row0 + kh, th), :, :]

    packed = xk_ref[...].reshape(m, cin3)          # tile-aligned merge (W_c % 16 == 0)

    # One bf16 MXU matmul per kw with K = 3*Cin_p, f32 accumulation.  The kw spatial shift
    # is applied to the f32 result with an XLU roll; the contaminated trailing columns of
    # each row (w >= W_c - 2 >= Wo) are width padding and are sliced off by the wrapper.
    acc = jnp.dot(packed, w_ref[0], preferred_element_type=jnp.float32)
    for kw in (1, 2):
        part = jnp.dot(packed, w_ref[kw], preferred_element_type=jnp.float32)
        acc = acc + pltpu.roll(part, shift=m - kw, axis=0)

    # Bias in the epilogue, fused with the down-cast right before the single store.
    o_ref[...] = (acc + b_ref[...]).astype(o_ref.dtype).reshape(1, th, w_c, cout_p)


def zero_conv2d_forward(x_nchw, weight_oihw, bias, *, row_tile=None):
    """3x3 VALID conv (+bias): NCHW in / NCHW out, Pallas TPU implicit-GEMM kernel."""
    N, Cin, H, W = x_nchw.shape
    Cout, Cin_w, KH, KW = weight_oihw.shape
    assert (Cin_w, KH, KW) == (Cin, 3, 3)
    Ho, Wo = H - 2, W - 2
    assert Ho >= 1 and Wo >= 1, "spatial dims must be >= 3 for a VALID 3x3 conv"

    compute_dtype = jnp.bfloat16                   # MXU operands; accumulation stays f32
    out_dtype = x_nchw.dtype
    out_isz = jnp.dtype(out_dtype).itemsize

    Cin_p = _round_up(Cin, LANE)
    Cout_p = _round_up(Cout, LANE)
    # Compute/store width: >= W (so the +2 shifted columns stay inside the block) and a
    # multiple of the bf16 sublane tile so every in-kernel merge/store is tile-aligned.
    W_c = _round_up(W, SUBLANE_BF16)

    # ---- VMEM-budget-derived row tile & limit (v7x: 64 MiB/TC, v5e/v6e: 128 MiB) ----
    try:
        vmem_cap = int(pltpu.get_tpu_info().vmem_capacity_bytes)
    except Exception:
        vmem_cap = 64 * 1024 * 1024                # conservative: v7x per-TensorCore VMEM
    budget = (vmem_cap * 4) // 5

    w_bytes = 3 * (3 * Cin_p) * Cout_p * 2 + 2 * Cout_p * 4        # packed weights + bias
    fixed = (Ho + 2) * W_c * Cin_p * 2 + w_bytes                   # resident image (1 buf)
    per_th = W_c * (Cin_p * 2                      # H_p round-up growth
                    + 2 * Cout_p * out_isz         # double-buffered output tile
                    + 2 * 3 * Cin_p * 2            # xk scratch + packed operand value
                    + 2 * Cout_p * 4)              # f32 accumulator + matmul result
    if row_tile is None:
        th = (budget - fixed) // per_th if budget > fixed else 1
        th = min(th, 8192 // max(W_c, 1))          # keep per-dot M bounded
    else:
        th = row_tile
    th = int(max(1, min(th, Ho)))
    n_rt = -(-Ho // th)
    Ho_p = n_rt * th
    H_p = Ho_p + 2                                 # >= H, halo rows never leave the block
    need = H_p * W_c * Cin_p * 2 + w_bytes + per_th * th

    # ---- layout: NCHW -> NHWC, pad, cast to bf16 ----
    # TODO(synk): keep the surrounding model in NHWC (and channels unpadded in HBM, padded
    # once into VMEM) to drop the transpose round trips and the HBM inflation at tiny
    # channel counts; for Cin/Cout << 128 an im2col K=9*Cin contraction (or plain XLA conv)
    # is the better regime.
    x = jnp.transpose(x_nchw, (0, 2, 3, 1))
    x = jnp.pad(x, ((0, 0), (0, H_p - H), (0, W_c - W), (0, Cin_p - Cin)))
    x = x.astype(compute_dtype)

    # (Cout, Cin, 3, 3) -> kw-major packed (3, 3*Cin_p, Cout_p):
    #   w_packed[kw, kh*Cin_p + ci, co] = weight[co, ci, kh, kw]
    w = jnp.transpose(weight_oihw, (3, 2, 1, 0))            # (KW, KH, Cin, Cout)
    w = jnp.pad(w, ((0, 0), (0, 0), (0, Cin_p - Cin), (0, Cout_p - Cout)))
    w = w.reshape(3, 3 * Cin_p, Cout_p).astype(compute_dtype)
    b = jnp.pad(bias.astype(jnp.float32), (0, Cout_p - Cout)).reshape(1, Cout_p)

    flops = 2 * N * Ho * Wo * Cout * Cin * 9
    bytes_accessed = int(x.size * 2 + w.size * 2 + b.size * 4
                         + N * Ho_p * W_c * Cout_p * out_isz)

    def run(single_buffer):
        def spec(shape, index_map, resident):
            if resident and single_buffer:
                # Resident blocks (constant index_map) don't need double buffering.
                return pl.BlockSpec(shape, index_map, pipeline_mode=pl.Buffered(1))
            return pl.BlockSpec(shape, index_map)

        extra = 0 if single_buffer else (H_p * W_c * Cin_p * 2
                                         + 3 * (3 * Cin_p) * Cout_p * 2)
        vmem_limit = int(min(vmem_cap * 9 // 10, need + extra + (16 << 20)))

        return pl.pallas_call(
            _conv3x3_kernel,
            out_shape=jax.ShapeDtypeStruct((N, Ho_p, W_c, Cout_p), out_dtype),
            grid_spec=pltpu.PrefetchScalarGridSpec(
                num_scalar_prefetch=0,
                grid=(N, n_rt),
                in_specs=[
                    # Full padded image per batch element; constant along the row-tile
                    # axis => DMA'd once per image, halo rows reused from VMEM.
                    # TODO(synk): halo row-tiled block / manual DMA for images whose full
                    # padded frame exceeds the VMEM budget (today we only shrink th).
                    spec((1, H_p, W_c, Cin_p), lambda n, rt: (n, 0, 0, 0), True),
                    spec((3, 3 * Cin_p, Cout_p), lambda n, rt: (0, 0, 0), True),
                    spec((1, Cout_p), lambda n, rt: (0, 0), True),
                ],
                out_specs=pl.BlockSpec((1, th, W_c, Cout_p),
                                       lambda n, rt: (n, rt, 0, 0)),
                scratch_shapes=[pltpu.VMEM((1, th, W_c, 3 * Cin_p), compute_dtype)],
            ),
            compiler_params=pltpu.CompilerParams(
                # No reduction grid axis (taps + Cin reduced in-kernel) => both axes are
                # parallel, so the grid can shard across v7x's two TensorCores.
                dimension_semantics=("parallel", "parallel"),
                vmem_limit_bytes=vmem_limit,
            ),
            cost_estimate=pl.CostEstimate(flops=flops, transcendentals=0,
                                          bytes_accessed=bytes_accessed),
        )(x, w, b)

    try:
        out = run(single_buffer=True)
    except Exception:
        # pipeline_mode=pl.Buffered(1) unavailable on this jax build -> default pipelining.
        out = run(single_buffer=False)

    out = out[:, :Ho, :Wo, :Cout]                  # strip row/col/channel padding
    return jnp.transpose(out, (0, 3, 1, 2))        # NHWC -> NCHW


if __name__ == "__main__":
    key = jax.random.PRNGKey(0)
    kx, kw_key, kb = jax.random.split(key, 3)

    N, Cin, H, W = 2, 4, 16, 16
    Cout = 8
    x = jax.random.normal(kx, (N, Cin, H, W), dtype=jnp.float32)
    weight = jax.random.normal(kw_key, (Cout, Cin, 3, 3), dtype=jnp.float32) * 0.1
    bias = jax.random.normal(kb, (Cout,), dtype=jnp.float32) * 0.1

    out = jax.block_until_ready(zero_conv2d_forward(x, weight, bias))

    # Pure-JAX reference with the same bf16-rounded operands (kernel feeds the MXU bf16 and
    # accumulates in f32), f32 accumulation forced via HIGHEST precision.
    x_r = x.astype(jnp.bfloat16).astype(jnp.float32)
    w_r = weight.astype(jnp.bfloat16).astype(jnp.float32)
    ref = lax.conv_general_dilated(
        x_r, w_r, window_strides=(1, 1), padding="VALID",
        dimension_numbers=("NCHW", "OIHW", "NCHW"),
        precision=lax.Precision.HIGHEST,
    ) + bias.reshape(1, Cout, 1, 1)

    assert out.shape == ref.shape == (N, Cout, H - 2, W - 2)
    max_err = float(jnp.max(jnp.abs(out - ref)))
    assert max_err < 2e-2, f"max abs err {max_err}"
    print("KERNEL_OK")
</pallas_src>

<mosaic_0001>
module attributes {stable_mosaic.version = 11 : i64} {
  func.func @_conv3x3_kernel(%arg0: i32, %arg1: i32, %arg2: memref<1x16x16x128xbf16, #tpu.memory_space<vmem>>, %arg3: memref<3x384x128xbf16, #tpu.memory_space<vmem>>, %arg4: memref<1x128xf32, #tpu.memory_space<vmem>>, %arg5: memref<1x14x16x128xf32, #tpu.memory_space<vmem>>, %arg6: memref<1x14x16x384xbf16, #tpu.memory_space<vmem>>) attributes {dimension_semantics = [#tpu.dimension_semantics<parallel>, #tpu.dimension_semantics<parallel>], iteration_bounds = array<i64: 2, 1>, scalar_prefetch = 0 : i64, scratch_operands = 1 : i64, tpu.core_type = #tpu.core_type<tc>, window_params = [{pipeline_mode = #tpu.pipeline_mode<synchronous>, transform_indices = @transform_0, window_bounds = array<i64: 1, 16, 16, 128>}, {pipeline_mode = #tpu.pipeline_mode<synchronous>, transform_indices = @transform_1, window_bounds = array<i64: 3, 384, 128>}, {pipeline_mode = #tpu.pipeline_mode<synchronous>, transform_indices = @transform_2, window_bounds = array<i64: 1, 128>}, {transform_indices = @transform_3, window_bounds = array<i64: 1, 14, 16, 128>}]} {
    %c14_i32 = arith.constant 14 : i32
    %0 = arith.muli %arg1, %c14_i32 : i32
    %c0_i32 = arith.constant 0 : i32
    %1 = arith.addi %0, %c0_i32 : i32
    %c0 = arith.constant 0 : index
    %2 = arith.index_cast %1 : i32 to index
    %c0_0 = arith.constant 0 : index
    %c0_1 = arith.constant 0 : index
    %3 = vector.load %arg2[%c0, %2, %c0_0, %c0_1] : memref<1x16x16x128xbf16, #tpu.memory_space<vmem>>, vector<1x14x16x128xbf16>
    %c0_2 = arith.constant 0 : index
    %c0_3 = arith.constant 0 : index
    %c0_4 = arith.constant 0 : index
    %c0_5 = arith.constant 0 : index
    %4 = vector.load %arg6[%c0_2, %c0_3, %c0_4, %c0_5] : memref<1x14x16x384xbf16, #tpu.memory_space<vmem>>, vector<1x14x16x128xbf16>
    tpu.vector_store %arg6[%c0_2, %c0_3, %c0_4, %c0_5], %3 {strides = array<i32>} : memref<1x14x16x384xbf16, #tpu.memory_space<vmem>>, vector<1x14x16x128xbf16>,
    %c1_i32 = arith.constant 1 : i32
    %5 = arith.addi %0, %c1_i32 : i32
    %c0_6 = arith.constant 0 : index
    %6 = arith.index_cast %5 : i32 to index
    %c0_7 = arith.constant 0 : index
    %c0_8 = arith.constant 0 : index
    %7 = vector.load %arg2[%c0_6, %6, %c0_7, %c0_8] : memref<1x16x16x128xbf16, #tpu.memory_space<vmem>>, vector<1x14x16x128xbf16>
    %c0_9 = arith.constant 0 : index
    %c0_10 = arith.constant 0 : index
    %c0_11 = arith.constant 0 : index
    %c128 = arith.constant 128 : index
    %8 = vector.load %arg6[%c0_9, %c0_10, %c0_11, %c128] : memref<1x14x16x384xbf16, #tpu.memory_space<vmem>>, vector<1x14x16x128xbf16>
    tpu.vector_store %arg6[%c0_9, %c0_10, %c0_11, %c128], %7 {strides = array<i32>} : memref<1x14x16x384xbf16, #tpu.memory_space<vmem>>, vector<1x14x16x128xbf16>,
    %c2_i32 = arith.constant 2 : i32
    %9 = arith.addi %0, %c2_i32 : i32
    %c0_12 = arith.constant 0 : index
    %10 = arith.index_cast %9 : i32 to index
    %c0_13 = arith.constant 0 : index
    %c0_14 = arith.constant 0 : index
    %11 = vector.load %arg2[%c0_12, %10, %c0_13, %c0_14] : memref<1x16x16x128xbf16, #tpu.memory_space<vmem>>, vector<1x14x16x128xbf16>
    %c0_15 = arith.constant 0 : index
    %c0_16 = arith.constant 0 : index
    %c0_17 = arith.constant 0 : index
    %c256 = arith.constant 256 : index
    %12 = vector.load %arg6[%c0_15, %c0_16, %c0_17, %c256] : memref<1x14x16x384xbf16, #tpu.memory_space<vmem>>, vector<1x14x16x128xbf16>
    tpu.vector_store %arg6[%c0_15, %c0_16, %c0_17, %c256], %11 {strides = array<i32>} : memref<1x14x16x384xbf16, #tpu.memory_space<vmem>>, vector<1x14x16x128xbf16>,
    %c0_18 = arith.constant 0 : index
    %c0_19 = arith.constant 0 : index
    %c0_20 = arith.constant 0 : index
    %c0_21 = arith.constant 0 : index
    %13 = vector.load %arg6[%c0_18, %c0_19, %c0_20, %c0_21] : memref<1x14x16x384xbf16, #tpu.memory_space<vmem>>, vector<1x14x16x384xbf16>
    %14 = vector.shape_cast %13 : vector<1x14x16x384xbf16> to vector<224x384xbf16>
    %c0_22 = arith.constant 0 : index
    %c0_23 = arith.constant 0 : index
    %c0_24 = arith.constant 0 : index
    %15 = vector.load %arg3[%c0_22, %c0_23, %c0_24] : memref<3x384x128xbf16, #tpu.memory_space<vmem>>, vector<1x384x128xbf16>
    %16 = vector.shape_cast %15 : vector<1x384x128xbf16> to vector<384x128xbf16>
    %cst = arith.constant dense<0.000000e+00> : vector<224x128xf32>
    %17 = tpu.matmul %14, %16, %cst {dimension_numbers = #tpu.dot_dimension_numbers<[1], [0], [0], [1], [0, 0, 1, 1], [], []>} : vector<224x384xbf16>, vector<384x128xbf16>, vector<224x128xf32> -> vector<224x128xf32>
    %c1 = arith.constant 1 : index
    %c0_25 = arith.constant 0 : index
    %c0_26 = arith.constant 0 : index
    %18 = vector.load %arg3[%c1, %c0_25, %c0_26] : memref<3x384x128xbf16, #tpu.memory_space<vmem>>, vector<1x384x128xbf16>
    %19 = vector.shape_cast %18 : vector<1x384x128xbf16> to vector<384x128xbf16>
    %cst_27 = arith.constant dense<0.000000e+00> : vector<224x128xf32>
    %20 = tpu.matmul %14, %19, %cst_27 {dimension_numbers = #tpu.dot_dimension_numbers<[1], [0], [0], [1], [0, 0, 1, 1], [], []>} : vector<224x384xbf16>, vector<384x128xbf16>, vector<224x128xf32> -> vector<224x128xf32>
    %c223_i32 = arith.constant 223 : i32
    %21 = tpu.dynamic_rotate %20 by %c223_i32 dim 0 : vector<224x128xf32>, i32 -> vector<224x128xf32>
    %22 = arith.addf %17, %21 : vector<224x128xf32>
    %c2 = arith.constant 2 : index
    %c0_28 = arith.constant 0 : index
    %c0_29 = arith.constant 0 : index
    %23 = vector.load %arg3[%c2, %c0_28, %c0_29] : memref<3x384x128xbf16, #tpu.memory_space<vmem>>, vector<1x384x128xbf16>
    %24 = vector.shape_cast %23 : vector<1x384x128xbf16> to vector<384x128xbf16>
    %cst_30 = arith.constant dense<0.000000e+00> : vector<224x128xf32>
    %25 = tpu.matmul %14, %24, %cst_30 {dimension_numbers = #tpu.dot_dimension_numbers<[1], [0], [0], [1], [0, 0, 1, 1], [], []>} : vector<224x384xbf16>, vector<384x128xbf16>, vector<224x128xf32> -> vector<224x128xf32>
    %c222_i32 = arith.constant 222 : i32
    %26 = tpu.dynamic_rotate %25 by %c222_i32 dim 0 : vector<224x128xf32>, i32 -> vector<224x128xf32>
    %27 = arith.addf %22, %26 : vector<224x128xf32>
    %c0_31 = arith.constant 0 : index
    %c0_32 = arith.constant 0 : index
    %28 = vector.load %arg4[%c0_31, %c0_32] : memref<1x128xf32, #tpu.memory_space<vmem>>, vector<1x128xf32>
    %29 = vector.broadcast %28 : vector<1x128xf32> to vector<224x128xf32>
    %30 = arith.addf %27, %29 : vector<224x128xf32>
    %31 = vector.shape_cast %30 : vector<224x128xf32> to vector<1x14x16x128xf32>
    %c0_33 = arith.constant 0 : index
    %c0_34 = arith.constant 0 : index
    %c0_35 = arith.constant 0 : index
    %c0_36 = arith.constant 0 : index
    %32 = vector.load %arg5[%c0_33, %c0_34, %c0_35, %c0_36] : memref<1x14x16x128xf32, #tpu.memory_space<vmem>>, vector<1x14x16x128xf32>
    tpu.vector_store %arg5[%c0_33, %c0_34, %c0_35, %c0_36], %31 {strides = array<i32>} : memref<1x14x16x128xf32, #tpu.memory_space<vmem>>, vector<1x14x16x128xf32>,
    return
  }
  func.func @transform_0(%arg0: i32, %arg1: i32) -> (i32, i32, i32, i32) {
    %c0_i32 = arith.constant 0 : i32
    %c0_i32_0 = arith.constant 0 : i32
    %c0_i32_1 = arith.constant 0 : i32
    %c0_i32_2 = arith.constant 0 : i32
    return %arg0, %c0_i32, %c0_i32_0, %c0_i32_1 : i32, i32, i32, i32
  }
  func.func @transform_1(%arg0: i32, %arg1: i32) -> (i32, i32, i32) {
    %c0_i32 = arith.constant 0 : i32
    %c0_i32_0 = arith.constant 0 : i32
    %c0_i32_1 = arith.constant 0 : i32
    %c0_i32_2 = arith.constant 0 : i32
    return %c0_i32, %c0_i32_0, %c0_i32_1 : i32, i32, i32
  }
  func.func @transform_2(%arg0: i32, %arg1: i32) -> (i32, i32) {
    %c0_i32 = arith.constant 0 : i32
    %c0_i32_0 = arith.constant 0 : i32
    %c0_i32_1 = arith.constant 0 : i32
    return %c0_i32, %c0_i32_0 : i32, i32
  }
  func.func @transform_3(%arg0: i32, %arg1: i32) -> (i32, i32, i32, i32) {
    %c0_i32 = arith.constant 0 : i32
    %c0_i32_0 = arith.constant 0 : i32
    %c0_i32_1 = arith.constant 0 : i32
    return %arg0, %arg1, %c0_i32, %c0_i32_0 : i32, i32, i32, i32
  }
}

module attributes {stable_mosaic.version = 11 : i64} {
  func.func @_conv3x3_kernel(%arg0: i32, %arg1: i32, %arg2: memref<1x16x16x128xbf16, #tpu.memory_space<vmem>>, %arg3: memref<3x384x128xbf16, #tpu.memory_space<vmem>>, %arg4: memref<1x128xf32, #tpu.memory_space<vmem>>, %arg5: memref<1x14x16x128xf32, #tpu.memory_space<vmem>>, %arg6: memref<1x14x16x384xbf16, #tpu.memory_space<vmem>>) attributes {dimension_semantics = [#tpu.dimension_semantics<parallel>, #tpu.dimension_semantics<parallel>], iteration_bounds = array<i64: 2, 1>, scalar_prefetch = 0 : i64, scratch_operands = 1 : i64, tpu.core_type = #tpu.core_type<tc>, window_params = [{transform_indices = @transform_0, window_bounds = array<i64: 1, 16, 16, 128>}, {pipeline_mode = #tpu.pipeline_mode<synchronous>, transform_indices = @transform_1, window_bounds = array<i64: 3, 384, 128>}, {pipeline_mode = #tpu.pipeline_mode<synchronous>, transform_indices = @transform_2, window_bounds = array<i64: 1, 128>}, {transform_indices = @transform_3, window_bounds = array<i64: 1, 14, 16, 128>}]} {
    %c14_i32 = arith.constant 14 : i32
    %0 = arith.muli %arg1, %c14_i32 : i32
    %c0_i32 = arith.constant 0 : i32
    %1 = arith.addi %0, %c0_i32 : i32
    %c0 = arith.constant 0 : index
    %2 = arith.index_cast %1 : i32 to index
    %c0_0 = arith.constant 0 : index
    %c0_1 = arith.constant 0 : index
    %3 = vector.load %arg2[%c0, %2, %c0_0, %c0_1] : memref<1x16x16x128xbf16, #tpu.memory_space<vmem>>, vector<1x14x16x128xbf16>
    %c0_2 = arith.constant 0 : index
    %c0_3 = arith.constant 0 : index
    %c0_4 = arith.constant 0 : index
    %c0_5 = arith.constant 0 : index
    %4 = vector.load %arg6[%c0_2, %c0_3, %c0_4, %c0_5] : memref<1x14x16x384xbf16, #tpu.memory_space<vmem>>, vector<1x14x16x128xbf16>
    tpu.vector_store %arg6[%c0_2, %c0_3, %c0_4, %c0_5], %3 {strides = array<i32>} : memref<1x14x16x384xbf16, #tpu.memory_space<vmem>>, vector<1x14x16x128xbf16>,
    %c1_i32 = arith.constant 1 : i32
    %5 = arith.addi %0, %c1_i32 : i32
    %c0_6 = arith.constant 0 : index
    %6 = arith.index_cast %5 : i32 to index
    %c0_7 = arith.constant 0 : index
    %c0_8 = arith.constant 0 : index
    %7 = vector.load %arg2[%c0_6, %6, %c0_7, %c0_8] : memref<1x16x16x128xbf16, #tpu.memory_space<vmem>>, vector<1x14x16x128xbf16>
    %c0_9 = arith.constant 0 : index
    %c0_10 = arith.constant 0 : index
    %c0_11 = arith.constant 0 : index
    %c128 = arith.constant 128 : index
    %8 = vector.load %arg6[%c0_9, %c0_10, %c0_11, %c128] : memref<1x14x16x384xbf16, #tpu.memory_space<vmem>>, vector<1x14x16x128xbf16>
    tpu.vector_store %arg6[%c0_9, %c0_10, %c0_11, %c128], %7 {strides = array<i32>} : memref<1x14x16x384xbf16, #tpu.memory_space<vmem>>, vector<1x14x16x128xbf16>,
    %c2_i32 = arith.constant 2 : i32
    %9 = arith.addi %0, %c2_i32 : i32
    %c0_12 = arith.constant 0 : index
    %10 = arith.index_cast %9 : i32 to index
    %c0_13 = arith.constant 0 : index
    %c0_14 = arith.constant 0 : index
    %11 = vector.load %arg2[%c0_12, %10, %c0_13, %c0_14] : memref<1x16x16x128xbf16, #tpu.memory_space<vmem>>, vector<1x14x16x128xbf16>
    %c0_15 = arith.constant 0 : index
    %c0_16 = arith.constant 0 : index
    %c0_17 = arith.constant 0 : index
    %c256 = arith.constant 256 : index
    %12 = vector.load %arg6[%c0_15, %c0_16, %c0_17, %c256] : memref<1x14x16x384xbf16, #tpu.memory_space<vmem>>, vector<1x14x16x128xbf16>
    tpu.vector_store %arg6[%c0_15, %c0_16, %c0_17, %c256], %11 {strides = array<i32>} : memref<1x14x16x384xbf16, #tpu.memory_space<vmem>>, vector<1x14x16x128xbf16>,
    %c0_18 = arith.constant 0 : index
    %c0_19 = arith.constant 0 : index
    %c0_20 = arith.constant 0 : index
    %c0_21 = arith.constant 0 : index
    %13 = vector.load %arg6[%c0_18, %c0_19, %c0_20, %c0_21] : memref<1x14x16x384xbf16, #tpu.memory_space<vmem>>, vector<1x14x16x384xbf16>
    %14 = vector.shape_cast %13 : vector<1x14x16x384xbf16> to vector<224x384xbf16>
    %c0_22 = arith.constant 0 : index
    %c0_23 = arith.constant 0 : index
    %c0_24 = arith.constant 0 : index
    %15 = vector.load %arg3[%c0_22, %c0_23, %c0_24] : memref<3x384x128xbf16, #tpu.memory_space<vmem>>, vector<1x384x128xbf16>
    %16 = vector.shape_cast %15 : vector<1x384x128xbf16> to vector<384x128xbf16>
    %cst = arith.constant dense<0.000000e+00> : vector<224x128xf32>
    %17 = tpu.matmul %14, %16, %cst {dimension_numbers = #tpu.dot_dimension_numbers<[1], [0], [0], [1], [0, 0, 1, 1], [], []>} : vector<224x384xbf16>, vector<384x128xbf16>, vector<224x128xf32> -> vector<224x128xf32>
    %c1 = arith.constant 1 : index
    %c0_25 = arith.constant 0 : index
    %c0_26 = arith.constant 0 : index
    %18 = vector.load %arg3[%c1, %c0_25, %c0_26] : memref<3x384x128xbf16, #tpu.memory_space<vmem>>, vector<1x384x128xbf16>
    %19 = vector.shape_cast %18 : vector<1x384x128xbf16> to vector<384x128xbf16>
    %cst_27 = arith.constant dense<0.000000e+00> : vector<224x128xf32>
    %20 = tpu.matmul %14, %19, %cst_27 {dimension_numbers = #tpu.dot_dimension_numbers<[1], [0], [0], [1], [0, 0, 1, 1], [], []>} : vector<224x384xbf16>, vector<384x128xbf16>, vector<224x128xf32> -> vector<224x128xf32>
    %c223_i32 = arith.constant 223 : i32
    %21 = tpu.dynamic_rotate %20 by %c223_i32 dim 0 : vector<224x128xf32>, i32 -> vector<224x128xf32>
    %22 = arith.addf %17, %21 : vector<224x128xf32>
    %c2 = arith.constant 2 : index
    %c0_28 = arith.constant 0 : index
    %c0_29 = arith.constant 0 : index
    %23 = vector.load %arg3[%c2, %c0_28, %c0_29] : memref<3x384x128xbf16, #tpu.memory_space<vmem>>, vector<1x384x128xbf16>
    %24 = vector.shape_cast %23 : vector<1x384x128xbf16> to vector<384x128xbf16>
    %cst_30 = arith.constant dense<0.000000e+00> : vector<224x128xf32>
    %25 = tpu.matmul %14, %24, %cst_30 {dimension_numbers = #tpu.dot_dimension_numbers<[1], [0], [0], [1], [0, 0, 1, 1], [], []>} : vector<224x384xbf16>, vector<384x128xbf16>, vector<224x128xf32> -> vector<224x128xf32>
    %c222_i32 = arith.constant 222 : i32
    %26 = tpu.dynamic_rotate %25 by %c222_i32 dim 0 : vector<224x128xf32>, i32 -> vector<224x128xf32>
    %27 = arith.addf %22, %26 : vector<224x128xf32>
    %c0_31 = arith.constant 0 : index
    %c0_32 = arith.constant 0 : index
    %28 = vector.load %arg4[%c0_31, %c0_32] : memref<1x128xf32, #tpu.memory_space<vmem>>, vector<1x128xf32>
    %29 = vector.broadcast %28 : vector<1x128xf32> to vector<224x128xf32>
    %30 = arith.addf %27, %29 : vector<224x128xf32>
    %31 = vector.shape_cast %30 : vector<224x128xf32> to vector<1x14x16x128xf32>
    %c0_33 = arith.constant 0 : index
    %c0_34 = arith.constant 0 : index
    %c0_35 = arith.constant 0 : index
    %c0_36 = arith.constant 0 : index
    %32 = vector.load %arg5[%c0_33, %c0_34, %c0_35, %c0_36] : memref<1x14x16x128xf32, #tpu.memory_space<vmem>>, vector<1x14x16x128xf32>
    tpu.vector_store %arg5[%c0_33, %c0_34, %c0_35, %c0_36], %31 {strides = array<i32>} : memref<1x14x16x128xf32, #tpu.memory_space<vmem>>, vector<1x14x16x128xf32>,
    return
  }
  func.func @transform_0(%arg0: i32, %arg1: i32) -> (i32, i32, i32, i32) {
    %c0_i32 = arith.constant 0 : i32
    %c0_i32_0 = arith.constant 0 : i32
    %c0_i32_1 = arith.constant 0 : i32
    %c0_i32_2 = arith.constant 0 : i32
    return %arg0, %c0_i32, %c0_i32_0, %c0_i32_1 : i32, i32, i32, i32
  }
  func.func @transform_1(%arg0: i32, %arg1: i32) -> (i32, i32, i32) {
    %c0_i32 = arith.constant 0 : i32
    %c0_i32_0 = arith.constant 0 : i32
    %c0_i32_1 = arith.constant 0 : i32
    %c0_i32_2 = arith.constant 0 : i32
    return %c0_i32, %c0_i32_0, %c0_i32_1 : i32, i32, i32
  }
  func.func @transform_2(%arg0: i32, %arg1: i32) -> (i32, i32) {
    %c0_i32 = arith.constant 0 : i32
    %c0_i32_0 = arith.constant 0 : i32
    %c0_i32_1 = arith.constant 0 : i32
    return %c0_i32, %c0_i32_0 : i32, i32
  }
  func.func @transform_3(%arg0: i32, %arg1: i32) -> (i32, i32, i32, i32) {
    %c0_i32 = arith.constant 0 : i32
    %c0_i32_0 = arith.constant 0 : i32
    %c0_i32_1 = arith.constant 0 : i32
    return %arg0, %arg1, %c0_i32, %c0_i32_0 : i32, i32, i32, i32
  }
}

</mosaic_0001>

<llo_original>
// kernel: tpu_custom_call.1
$region0: #{tpu_custom_call.1}
  #allocation0 [shape = 'u32[]', space=smem, size = 0x4, offset = 0x4, fixed_abs, tag = 'smem constant byte address 0x4 - core index']
  #allocation1 [shape = 'u32[144,128]{1,0:T(1,128)}', space=vmem, size = 0x12000, scoped, tag = 'internal scratch']
  #allocation2 [shape = 'bf16[1,14,16,384]{3,2,1,0:T(16,128)(2,1)}', space=vmem, size = 0x2a000, scoped, tag = 'scratch operand']
  %s0 = inlined_call_operand.hbm [shape: bf16[2,16,16,128], index: 0, kind: input, shape index: {}]
  %s1 = inlined_call_operand.hbm [shape: bf16[3,384,128], index: 1, kind: input, shape index: {}]
  %s2 = inlined_call_operand.vmem [shape: f32[1,128], index: 2, kind: input, shape index: {}]
  %s3 = inlined_call_operand.hbm [shape: f32[2,14,16,128], index: 3, kind: output, shape index: {}]
  %s4 = sld [smem:[#allocation0]]
  $region53: #{tpu_custom_call.1} parent=0
    _
  %s6 = ssub.s32 1, %s4
  %s7 = scalar_select 0, %s6, %s4
  $region1: #{tpu_custom_call.1} parent=0
    #allocation3 [shape = 'u8[65536]{0}', space=vmem, size = 0x10000, scoped, tag = 'input window, operand 0, single buffered']
    #allocation4 [shape = 's32[2]{0}', space=sflag, size = 0x8, scoped, tag = 'scoped memory for tpu_custom_call.1']
    #allocation5 [shape = 's32[2]{0}', space=sflag, size = 0x8, scoped, tag = 'scoped memory for tpu_custom_call.1']
    #allocation6 [shape = 'u8[294912]{0}', space=vmem, size = 0x48000, scoped, tag = 'input window, operand 1, single buffered']
    #allocation7 [shape = 's32[1]{0}', space=sflag, size = 0x4, scoped, tag = 'scoped memory for tpu_custom_call.1']
    #allocation8 [shape = 'u8[229376]{0}', space=vmem, size = 0x38000, scoped, tag = 'output window, operand 0']
    %8 = vsyncpa [#allocation4], 0
    %9 = vsyncpa [#allocation7], 0
    %10 = vsyncpa [#allocation5], 0
    %s11 = scalar_lea.sflag [#allocation5], 1
    %12 = vsyncpa %s11, 0
    loop: start=0, step=1, limit=4
    $region2: #{tpu_custom_call.1} parent=1 // loop_pre_header
      _
    $region3: #{tpu_custom_call.1} parent=1 // loop_header
      %s14 = sphi 0, %s18
      %p15 = scmp.ge.s32.totalorder %s14, 4
      %s21 = sphi 0, %s33
      %s22 = sphi 0, %s29
      %s23 = sphi 0, %s21
      %s24 = sphi 0, %s22
      %s25 = sphi 0, %s23
      %s26 = sphi 0, %s24
      %s36 = sphi 0, %s38
      %s39 = sphi 0, %s36
      %s40 = sphi 0, %s39
      %s56 = sphi 0, %s40
      %s60 = sphi 0, %s60
      %s62 = sphi 0, %s60
      %s63 = sphi 0, %s62
      %s77 = sphi 0, %s63
      %s81 = sphi 0, %s81
      %s83 = sphi 0, %s81
      %s84 = sphi 0, %s83
      %s98 = sphi 0, %s84
      %s106 = sphi 0, %s108
      %s109 = sphi 0, %s106
      %s110 = sphi 0, %s109
      %s126 = sphi 0, %s110
    $region4: #{tpu_custom_call.1} parent=1 // loop_header_branch
      %17 = sbr.rel (%p15) target = $region8
    $region5: #{tpu_custom_call.1} parent=1 // loop_body
      %s19 = ssub.s32 %s14, 1
      %s20 = ssub.s32 %s14, 2
      %s27 = sadd.s32 1, %s22
      %p28 = scmp.ge.s32.totalorder %s27, 1
      %s29 = scalar_select %p28, 0, %s27
      %s30 = sadd.s32 1, %s21
      %s31 = scalar_select %p28, %s30, %s21
      %p32 = scmp.ge.s32.totalorder %s31, 2
      %s33 = scalar_select %p32, 0, %s31
      %s34 = ssub.s32 %s21, %s33
      %p35 = scmp.eq.s32.totalorder %s34, 0
      %s37 = sadd.s32 %s36, 1
      %s38 = scalar_select %p35, %s36, %s37
      %p41 = pneg %p35
      %p42 = scmp.eq.s32.totalorder %s14, 1
      %p43 = por %p41, %p42
      %p44 = scmp.ne.s32.totalorder %s36, %s39
      %p45 = scmp.eq.s32.totalorder %s14, 0
      %p46 = por %p44, %p45
      %p47 = scmp.ne.s32.totalorder %s36, %s39
      %p48 = scmp.eq.s32.totalorder %s19, 1
      %p49 = por %p47, %p48
      %p50 = scmp.ne.s32.totalorder %s39, %s40
      %p51 = scmp.eq.s32.totalorder %s19, 0
      %p52 = por %p50, %p51
      %p53 = scmp.ne.s32.totalorder %s39, %s40
      %p54 = scmp.eq.s32.totalorder %s20, 1
      %p55 = por %p53, %p54
      %p57 = scmp.ne.s32.totalorder %s40, %s56
      %p58 = scmp.eq.s32.totalorder %s20, 0
      %p59 = por %p57, %p58
      %s61 = sadd.s32 %s60, 1
      %p64 = scmp.eq.s32.totalorder %s14, 1
      %p65 = scmp.ne.s32.totalorder %s60, %s62
      %p66 = scmp.eq.s32.totalorder %s14, 0
      %p67 = por %p65, %p66
      %p68 = scmp.ne.s32.totalorder %s60, %s62
      %p69 = scmp.eq.s32.totalorder %s19, 1
      %p70 = por %p68, %p69
      %p71 = scmp.ne.s32.totalorder %s62, %s63
      %p72 = scmp.eq.s32.totalorder %s19, 0
      %p73 = por %p71, %p72
      %p74 = scmp.ne.s32.totalorder %s62, %s63
      %p75 = scmp.eq.s32.totalorder %s20, 1
      %p76 = por %p74, %p75
      %p78 = scmp.ne.s32.totalorder %s63, %s77
      %p79 = scmp.eq.s32.totalorder %s20, 0
      %p80 = por %p78, %p79
      %s82 = sadd.s32 %s81, 1
      %p85 = scmp.eq.s32.totalorder %s14, 1
      %p86 = scmp.ne.s32.totalorder %s81, %s83
      %p87 = scmp.eq.s32.totalorder %s14, 0
      %p88 = por %p86, %p87
      %p89 = scmp.ne.s32.totalorder %s81, %s83
      %p90 = scmp.eq.s32.totalorder %s19, 1
      %p91 = por %p89, %p90
      %p92 = scmp.ne.s32.totalorder %s83, %s84
      %p93 = scmp.eq.s32.totalorder %s19, 0
      %p94 = por %p92, %p93
      %p95 = scmp.ne.s32.totalorder %s83, %s84
      %p96 = scmp.eq.s32.totalorder %s20, 1
      %p97 = por %p95, %p96
      %p99 = scmp.ne.s32.totalorder %s84, %s98
      %p100 = scmp.eq.s32.totalorder %s20, 0
      %p101 = por %p99, %p100
      %s102 = ssub.s32 %s21, %s33
      %s103 = ssub.s32 %s22, %s29
      %s104 = sor.u32 %s102, %s103
      %p105 = scmp.eq.s32.totalorder %s104, 0
      %s107 = sadd.s32 %s106, 1
      %s108 = scalar_select %p105, %s106, %s107
      %p111 = pneg %p105
      %p112 = scmp.eq.s32.totalorder %s14, 1
      %p113 = por %p111, %p112
      %p114 = scmp.ne.s32.totalorder %s106, %s109
      %p115 = scmp.eq.s32.totalorder %s14, 0
      %p116 = por %p114, %p115
      %p117 = scmp.ne.s32.totalorder %s106, %s109
      %p118 = scmp.eq.s32.totalorder %s19, 1
      %p119 = por %p117, %p118
      %p120 = scmp.ne.s32.totalorder %s109, %s110
      %p121 = scmp.eq.s32.totalorder %s19, 0
      %p122 = por %p120, %p121
      %p123 = scmp.ne.s32.totalorder %s109, %s110
      %p124 = scmp.eq.s32.totalorder %s20, 1
      %p125 = por %p123, %p124
      %p127 = scmp.ne.s32.totalorder %s110, %s126
      %p128 = scmp.eq.s32.totalorder %s20, 0
      %p129 = por %p127, %p128
      %p130 = scmp.le.s32.totalorder 1, %s14
      %p131 = scmp.lt.s32.totalorder %s14, 3
      %p132 = pnand %p130, %p131
      %p133 = pneg %p132
      // Predicated region
      $region9: #{tpu_custom_call.1} parent=5 // pred_check
        _
      $region10: #{tpu_custom_call.1} parent=5 // pred_check_branch
        %135 = sbr.rel (%p132) target = $region12
      $region11: #{tpu_custom_call.1} parent=5 // pred_region
        %s136 = ssub.s32 %s14, 1
        // Predicated region
        $region13: #{tpu_custom_call.1} parent=11 // pred_check
          %p137 = pneg %p52
        $region14: #{tpu_custom_call.1} parent=11 // pred_check_branch
          %139 = sbr.rel (%p137) target = $region16
        $region15: #{tpu_custom_call.1} parent=11 // pred_region
          %s141 = ssub.s32 2048, 2048
          %142 = vsyncadd [#allocation4], %s141
          %s143 = smul.addr %s23, 32
          %s144 = smul.addr %s143, 64
          %s145 = scalar_lea.hbm %s0, %s144
          %s146 = sshll.u32 [#allocation3], 4
          %s147 = int_to_ptr.vmem [resolvable:$true] %s146
          %152 = dma.hbm_to_vmem [thread:$0]  %s145, 2048, %s147, [#allocation4], 64, 64, 4
        $region16: #{tpu_custom_call.1} parent=11 // pred_fallthru
          _
        // Predicated region
        $region17: #{tpu_custom_call.1} parent=11 // pred_check
          %p153 = pneg %p73
        $region18: #{tpu_custom_call.1} parent=11 // pred_check_branch
          %155 = sbr.rel (%p153) target = $region20
        $region19: #{tpu_custom_call.1} parent=11 // pred_region
          %s157 = ssub.s32 9216, 9216
          %158 = vsyncadd [#allocation7], %s157
          %s159 = sshll.u32 [#allocation6], 4
          %s160 = int_to_ptr.vmem [resolvable:$true] %s159
          %165 = dma.hbm_to_vmem [thread:$0]  %s1, 9216, %s160, [#allocation7], 64, 64, 4
        $region20: #{tpu_custom_call.1} parent=11 // pred_fallthru
          _
        // Predicated region
        $region21: #{tpu_custom_call.1} parent=11 // pred_check
          %p166 = pneg %p94
        $region22: #{tpu_custom_call.1} parent=11 // pred_check_branch
          %168 = sbr.rel (%p166) target = $region24
        $region23: #{tpu_custom_call.1} parent=11 // pred_region
          _
        $region24: #{tpu_custom_call.1} parent=11 // pred_fallthru
          _
      $region12: #{tpu_custom_call.1} parent=5 // pred_fallthru
        _
      %p169 = scmp.lt.s32.totalorder %s14, 2
      // Predicated region
      $region25: #{tpu_custom_call.1} parent=5 // pred_check
        %p170 = pneg %p169
      $region26: #{tpu_custom_call.1} parent=5 // pred_check_branch
        %172 = sbr.rel (%p170) target = $region28
      $region27: #{tpu_custom_call.1} parent=5 // pred_region
        _
      $region28: #{tpu_custom_call.1} parent=5 // pred_fallthru
        _
      %p173 = scmp.le.s32.totalorder 1, %s14
      %p174 = scmp.lt.s32.totalorder %s14, 3
      %p175 = pnand %p173, %p174
      %p176 = pneg %p175
      // Predicated region
      $region29: #{tpu_custom_call.1} parent=5 // pred_check
        _
      $region30: #{tpu_custom_call.1} parent=5 // pred_check_branch
        %178 = sbr.rel (%p175) target = $region32
      $region31: #{tpu_custom_call.1} parent=5 // pred_region
        %s179 = ssub.s32 %s14, 1
        // Predicated region
        $region33: #{tpu_custom_call.1} parent=31 // pred_check
          %p180 = pneg %p52
        $region34: #{tpu_custom_call.1} parent=31 // pred_check_branch
          %182 = sbr.rel (%p180) target = $region36
        $region35: #{tpu_custom_call.1} parent=31 // pred_region
          %183 = dma.done [#allocation4], 2048
        $region36: #{tpu_custom_call.1} parent=31 // pred_fallthru
          _
        // Predicated region
        $region37: #{tpu_custom_call.1} parent=31 // pred_check
          %p184 = pneg %p73
        $region38: #{tpu_custom_call.1} parent=31 // pred_check_branch
          %186 = sbr.rel (%p184) target = $region40
        $region39: #{tpu_custom_call.1} parent=31 // pred_region
          %187 = dma.done [#allocation7], 9216
        $region40: #{tpu_custom_call.1} parent=31 // pred_fallthru
          _
        %p188 = pneg %p52
        %p189 = pneg %p49
        %p190 = pneg %p73
        %p191 = pneg %p70
        %p192 = pneg %p94
        %p193 = pneg %p91
        %p194 = pneg %p122
        %p195 = pneg %p119
        %s196 = sand.u32 %s109, 1
        %s197 = scalar_lea.sflag [#allocation5], %s196
        %s198 = sand.u32 %s109, 1
        %s199 = smul.addr %s198, 224
        %s200 = scalar_lea.vmem [#allocation8], %s199
        %s201 = smul.u32 14, %s24
        %s203 = smul.u32 %s24, 14
        %s204 = smul.u32 %s203, 2
        %s205 = smul.addr %s204, 4
        %s206 = scalar_lea.vmem [#allocation3], %s205
        %v207 = vld [vmem:[%s206] sm:$0xf]
        %v208 = vld [vmem:[%s206 + $0x4] sm:$0xf]
        %v209 = vld [vmem:[%s206 + $0x8] sm:$0xf]
        %v210 = vld [vmem:[%s206 + $0xc] sm:$0xf]
        %v211 = vld [vmem:[%s206 + $0x10] sm:$0xf]
        %v212 = vld [vmem:[%s206 + $0x14] sm:$0xf]
        %v213 = vld [vmem:[%s206 + $0x18] sm:$0xf]
        %v214 = vld [vmem:[%s206 + $0x1c] sm:$0xf]
        %v215 = vld [vmem:[%s206 + $0x20] sm:$0xf]
        %v216 = vld [vmem:[%s206 + $0x24] sm:$0xf]
        %v217 = vld [vmem:[%s206 + $0x28] sm:$0xf]
        %v218 = vld [vmem:[%s206 + $0x2c] sm:$0xf]
        %v219 = vld [vmem:[%s206 + $0x30] sm:$0xf]
        %v220 = vld [vmem:[%s206 + $0x34] sm:$0xf]
        %v221 = vld [vmem:[%s206 + $0x38] sm:$0xf]
        %v222 = vld [vmem:[%s206 + $0x3c] sm:$0xf]
        %v223 = vld [vmem:[%s206 + $0x40] sm:$0xf]
        %v224 = vld [vmem:[%s206 + $0x44] sm:$0xf]
        %v225 = vld [vmem:[%s206 + $0x48] sm:$0xf]
        %v226 = vld [vmem:[%s206 + $0x4c] sm:$0xf]
        %v227 = vld [vmem:[%s206 + $0x50] sm:$0xf]
        %v228 = vld [vmem:[%s206 + $0x54] sm:$0xf]
        %v229 = vld [vmem:[%s206 + $0x58] sm:$0xf]
        %v230 = vld [vmem:[%s206 + $0x5c] sm:$0xf]
        %v231 = vld [vmem:[%s206 + $0x60] sm:$0xf]
        %v232 = vld [vmem:[%s206 + $0x64] sm:$0xf]
        %v233 = vld [vmem:[%s206 + $0x68] sm:$0xf]
        %v234 = vld [vmem:[%s206 + $0x6c] sm:$0xf]
        %v263 = vunpack.c.l.b16 %v207
        %v264 = vunpack.c.l.b16 %v208
        %v265 = vunpack.c.l.b16 %v209
        %v266 = vunpack.c.l.b16 %v210
        %v267 = vunpack.c.l.b16 %v211
        %v268 = vunpack.c.l.b16 %v212
        %v269 = vunpack.c.l.b16 %v213
        %v270 = vunpack.c.l.b16 %v214
        %v271 = vunpack.c.l.b16 %v215
        %v272 = vunpack.c.l.b16 %v216
        %v273 = vunpack.c.l.b16 %v217
        %v274 = vunpack.c.l.b16 %v218
        %v275 = vunpack.c.l.b16 %v219
        %v276 = vunpack.c.l.b16 %v220
        %v277 = vunpack.c.l.b16 %v221
        %v278 = vunpack.c.l.b16 %v222
        %v279 = vunpack.c.l.b16 %v223
        %v280 = vunpack.c.l.b16 %v224
        %v281 = vunpack.c.l.b16 %v225
        %v282 = vunpack.c.l.b16 %v226
        %v283 = vunpack.c.l.b16 %v227
        %v284 = vunpack.c.l.b16 %v228
        %v285 = vunpack.c.l.b16 %v229
        %v286 = vunpack.c.l.b16 %v230
        %v287 = vunpack.c.l.b16 %v231
        %v288 = vunpack.c.l.b16 %v232
        %v289 = vunpack.c.l.b16 %v233
        %v290 = vunpack.c.l.b16 %v234
        %v291 = vpack.c.b16 %v264, %v263
        %v292 = vpack.c.b16 %v266, %v265
        %v293 = vpack.c.b16 %v268, %v267
        %v294 = vpack.c.b16 %v270, %v269
        %v295 = vpack.c.b16 %v272, %v271
        %v296 = vpack.c.b16 %v274, %v273
        %v297 = vpack.c.b16 %v276, %v275
        %v298 = vpack.c.b16 %v278, %v277
        %v299 = vpack.c.b16 %v280, %v279
        %v300 = vpack.c.b16 %v282, %v281
        %v301 = vpack.c.b16 %v284, %v283
        %v302 = vpack.c.b16 %v286, %v285
        %v303 = vpack.c.b16 %v288, %v287
        %v304 = vpack.c.b16 %v290, %v289
        %319 = vst [vmem:[#allocation2] sm:$0xff] %v291
        %320 = vst [vmem:[#allocation2 + $0x18] sm:$0xff] %v292
        %321 = vst [vmem:[#allocation2 + $0x30] sm:$0xff] %v293
        %322 = vst [vmem:[#allocation2 + $0x48] sm:$0xff] %v294
        %323 = vst [vmem:[#allocation2 + $0x60] sm:$0xff] %v295
        %324 = vst [vmem:[#allocation2 + $0x78] sm:$0xff] %v296
        %325 = vst [vmem:[#allocation2 + $0x90] sm:$0xff] %v297
        %326 = vst [vmem:[#allocation2 + $0xa8] sm:$0xff] %v298
        %327 = vst [vmem:[#allocation2 + $0xc0] sm:$0xff] %v299
        %328 = vst [vmem:[#allocation2 + $0xd8] sm:$0xff] %v300
        %329 = vst [vmem:[#allocation2 + $0xf0] sm:$0xff] %v301
        %330 = vst [vmem:[#allocation2 + $0x108] sm:$0xff] %v302
        %331 = vst [vmem:[#allocation2 + $0x120] sm:$0xff] %v303
        %332 = vst [vmem:[#allocation2 + $0x138] sm:$0xff] %v304
        %s333 = sadd.s32 %s203, 1
        %s334 = smul.u32 %s333, 2
        %s335 = smul.addr %s334, 4
        %s336 = scalar_lea.vmem [#allocation3], %s335
        %v337 = vld [vmem:[%s336] sm:$0xf]
        %v338 = vld [vmem:[%s336 + $0x4] sm:$0xf]
        %v339 = vld [vmem:[%s336 + $0x8] sm:$0xf]
        %v340 = vld [vmem:[%s336 + $0xc] sm:$0xf]
        %v341 = vld [vmem:[%s336 + $0x10] sm:$0xf]
        %v342 = vld [vmem:[%s336 + $0x14] sm:$0xf]
        %v343 = vld [vmem:[%s336 + $0x18] sm:$0xf]
        %v344 = vld [vmem:[%s336 + $0x1c] sm:$0xf]
        %v345 = vld [vmem:[%s336 + $0x20] sm:$0xf]
        %v346 = vld [vmem:[%s336 + $0x24] sm:$0xf]
        %v347 = vld [vmem:[%s336 + $0x28] sm:$0xf]
        %v348 = vld [vmem:[%s336 + $0x2c] sm:$0xf]
        %v349 = vld [vmem:[%s336 + $0x30] sm:$0xf]
        %v350 = vld [vmem:[%s336 + $0x34] sm:$0xf]
        %v351 = vld [vmem:[%s336 + $0x38] sm:$0xf]
        %v352 = vld [vmem:[%s336 + $0x3c] sm:$0xf]
        %v353 = vld [vmem:[%s336 + $0x40] sm:$0xf]
        %v354 = vld [vmem:[%s336 + $0x44] sm:$0xf]
        %v355 = vld [vmem:[%s336 + $0x48] sm:$0xf]
        %v356 = vld [vmem:[%s336 + $0x4c] sm:$0xf]
        %v357 = vld [vmem:[%s336 + $0x50] sm:$0xf]
        %v358 = vld [vmem:[%s336 + $0x54] sm:$0xf]
        %v359 = vld [vmem:[%s336 + $0x58] sm:$0xf]
        %v360 = vld [vmem:[%s336 + $0x5c] sm:$0xf]
        %v361 = vld [vmem:[%s336 + $0x60] sm:$0xf]
        %v362 = vld [vmem:[%s336 + $0x64] sm:$0xf]
        %v363 = vld [vmem:[%s336 + $0x68] sm:$0xf]
        %v364 = vld [vmem:[%s336 + $0x6c] sm:$0xf]
        %v393 = vunpack.c.l.b16 %v337
        %v394 = vunpack.c.l.b16 %v338
        %v395 = vunpack.c.l.b16 %v339
        %v396 = vunpack.c.l.b16 %v340
        %v397 = vunpack.c.l.b16 %v341
        %v398 = vunpack.c.l.b16 %v342
        %v399 = vunpack.c.l.b16 %v343
        %v400 = vunpack.c.l.b16 %v344
        %v401 = vunpack.c.l.b16 %v345
        %v402 = vunpack.c.l.b16 %v346
        %v403 = vunpack.c.l.b16 %v347
        %v404 = vunpack.c.l.b16 %v348
        %v405 = vunpack.c.l.b16 %v349
        %v406 = vunpack.c.l.b16 %v350
        %v407 = vunpack.c.l.b16 %v351
        %v408 = vunpack.c.l.b16 %v352
        %v409 = vunpack.c.l.b16 %v353
        %v410 = vunpack.c.l.b16 %v354
        %v411 = vunpack.c.l.b16 %v355
        %v412 = vunpack.c.l.b16 %v356
        %v413 = vunpack.c.l.b16 %v357
        %v414 = vunpack.c.l.b16 %v358
        %v415 = vunpack.c.l.b16 %v359
        %v416 = vunpack.c.l.b16 %v360
        %v417 = vunpack.c.l.b16 %v361
        %v418 = vunpack.c.l.b16 %v362
        %v419 = vunpack.c.l.b16 %v363
        %v420 = vunpack.c.l.b16 %v364
        %v421 = vpack.c.b16 %v394, %v393
        %v422 = vpack.c.b16 %v396, %v395
        %v423 = vpack.c.b16 %v398, %v397
        %v424 = vpack.c.b16 %v400, %v399
        %v425 = vpack.c.b16 %v402, %v401
        %v426 = vpack.c.b16 %v404, %v403
        %v427 = vpack.c.b16 %v406, %v405
        %v428 = vpack.c.b16 %v408, %v407
        %v429 = vpack.c.b16 %v410, %v409
        %v430 = vpack.c.b16 %v412, %v411
        %v431 = vpack.c.b16 %v414, %v413
        %v432 = vpack.c.b16 %v416, %v415
        %v433 = vpack.c.b16 %v418, %v417
        %v434 = vpack.c.b16 %v420, %v419
        %449 = vst [vmem:[#allocation2 + $0x8] sm:$0xff] %v421
        %450 = vst [vmem:[#allocation2 + $0x20] sm:$0xff] %v422
        %451 = vst [vmem:[#allocation2 + $0x38] sm:$0xff] %v423
        %452 = vst [vmem:[#allocation2 + $0x50] sm:$0xff] %v424
        %453 = vst [vmem:[#allocation2 + $0x68] sm:$0xff] %v425
        %454 = vst [vmem:[#allocation2 + $0x80] sm:$0xff] %v426
        %455 = vst [vmem:[#allocation2 + $0x98] sm:$0xff] %v427
        %456 = vst [vmem:[#allocation2 + $0xb0] sm:$0xff] %v428
        %457 = vst [vmem:[#allocation2 + $0xc8] sm:$0xff] %v429
        %458 = vst [vmem:[#allocation2 + $0xe0] sm:$0xff] %v430
        %459 = vst [vmem:[#allocation2 + $0xf8] sm:$0xff] %v431
        %460 = vst [vmem:[#allocation2 + $0x110] sm:$0xff] %v432
        %461 = vst [vmem:[#allocation2 + $0x128] sm:$0xff] %v433
        %462 = vst [vmem:[#allocation2 + $0x140] sm:$0xff] %v434
        %s463 = sadd.s32 %s203, 2
        %s464 = smul.u32 %s463, 2
        %s465 = smul.addr %s464, 4
        %s466 = scalar_lea.vmem [#allocation3], %s465
        %v467 = vld [vmem:[%s466] sm:$0xf]
        %v468 = vld [vmem:[%s466 + $0x4] sm:$0xf]
        %v469 = vld [vmem:[%s466 + $0x8] sm:$0xf]
        %v470 = vld [vmem:[%s466 + $0xc] sm:$0xf]
        %v471 = vld [vmem:[%s466 + $0x10] sm:$0xf]
        %v472 = vld [vmem:[%s466 + $0x14] sm:$0xf]
        %v473 = vld [vmem:[%s466 + $0x18] sm:$0xf]
        %v474 = vld [vmem:[%s466 + $0x1c] sm:$0xf]
        %v475 = vld [vmem:[%s466 + $0x20] sm:$0xf]
        %v476 = vld [vmem:[%s466 + $0x24] sm:$0xf]
        %v477 = vld [vmem:[%s466 + $0x28] sm:$0xf]
        %v478 = vld [vmem:[%s466 + $0x2c] sm:$0xf]
        %v479 = vld [vmem:[%s466 + $0x30] sm:$0xf]
        %v480 = vld [vmem:[%s466 + $0x34] sm:$0xf]
        %v481 = vld [vmem:[%s466 + $0x38] sm:$0xf]
        %v482 = vld [vmem:[%s466 + $0x3c] sm:$0xf]
        %v483 = vld [vmem:[%s466 + $0x40] sm:$0xf]
        %v484 = vld [vmem:[%s466 + $0x44] sm:$0xf]
        %v485 = vld [vmem:[%s466 + $0x48] sm:$0xf]
        %v486 = vld [vmem:[%s466 + $0x4c] sm:$0xf]
        %v487 = vld [vmem:[%s466 + $0x50] sm:$0xf]
        %v488 = vld [vmem:[%s466 + $0x54] sm:$0xf]
        %v489 = vld [vmem:[%s466 + $0x58] sm:$0xf]
        %v490 = vld [vmem:[%s466 + $0x5c] sm:$0xf]
        %v491 = vld [vmem:[%s466 + $0x60] sm:$0xf]
        %v492 = vld [vmem:[%s466 + $0x64] sm:$0xf]
        %v493 = vld [vmem:[%s466 + $0x68] sm:$0xf]
        %v494 = vld [vmem:[%s466 + $0x6c] sm:$0xf]
        %v523 = vunpack.c.l.b16 %v467
        %v524 = vunpack.c.l.b16 %v468
        %v525 = vunpack.c.l.b16 %v469
        %v526 = vunpack.c.l.b16 %v470
        %v527 = vunpack.c.l.b16 %v471
        %v528 = vunpack.c.l.b16 %v472
        %v529 = vunpack.c.l.b16 %v473
        %v530 = vunpack.c.l.b16 %v474
        %v531 = vunpack.c.l.b16 %v475
        %v532 = vunpack.c.l.b16 %v476
        %v533 = vunpack.c.l.b16 %v477
        %v534 = vunpack.c.l.b16 %v478
        %v535 = vunpack.c.l.b16 %v479
        %v536 = vunpack.c.l.b16 %v480
        %v537 = vunpack.c.l.b16 %v481
        %v538 = vunpack.c.l.b16 %v482
        %v539 = vunpack.c.l.b16 %v483
        %v540 = vunpack.c.l.b16 %v484
        %v541 = vunpack.c.l.b16 %v485
        %v542 = vunpack.c.l.b16 %v486
        %v543 = vunpack.c.l.b16 %v487
        %v544 = vunpack.c.l.b16 %v488
        %v545 = vunpack.c.l.b16 %v489
        %v546 = vunpack.c.l.b16 %v490
        %v547 = vunpack.c.l.b16 %v491
        %v548 = vunpack.c.l.b16 %v492
        %v549 = vunpack.c.l.b16 %v493
        %v550 = vunpack.c.l.b16 %v494
        %v551 = vpack.c.b16 %v524, %v523
        %v552 = vpack.c.b16 %v526, %v525
        %v553 = vpack.c.b16 %v528, %v527
        %v554 = vpack.c.b16 %v530, %v529
        %v555 = vpack.c.b16 %v532, %v531
        %v556 = vpack.c.b16 %v534, %v533
        %v557 = vpack.c.b16 %v536, %v535
        %v558 = vpack.c.b16 %v538, %v537
        %v559 = vpack.c.b16 %v540, %v539
        %v560 = vpack.c.b16 %v542, %v541
        %v561 = vpack.c.b16 %v544, %v543
        %v562 = vpack.c.b16 %v546, %v545
        %v563 = vpack.c.b16 %v548, %v547
        %v564 = vpack.c.b16 %v550, %v549
        %579 = vst [vmem:[#allocation2 + $0x10] sm:$0xff] %v551
        %580 = vst [vmem:[#allocation2 + $0x28] sm:$0xff] %v552
        %581 = vst [vmem:[#allocation2 + $0x40] sm:$0xff] %v553
        %582 = vst [vmem:[#allocation2 + $0x58] sm:$0xff] %v554
        %583 = vst [vmem:[#allocation2 + $0x70] sm:$0xff] %v555
        %584 = vst [vmem:[#allocation2 + $0x88] sm:$0xff] %v556
        %585 = vst [vmem:[#allocation2 + $0xa0] sm:$0xff] %v557
        %586 = vst [vmem:[#allocation2 + $0xb8] sm:$0xff] %v558
        %587 = vst [vmem:[#allocation2 + $0xd0] sm:$0xff] %v559
        %588 = vst [vmem:[#allocation2 + $0xe8] sm:$0xff] %v560
        %589 = vst [vmem:[#allocation2 + $0x100] sm:$0xff] %v561
        %590 = vst [vmem:[#allocation2 + $0x118] sm:$0xff] %v562
        %591 = vst [vmem:[#allocation2 + $0x130] sm:$0xff] %v563
        %592 = vst [vmem:[#allocation2 + $0x148] sm:$0xff] %v564
        %v593 = vld [vmem:[#allocation2] sm:$0xff]
        %v594 = vld [vmem:[#allocation2 + $0x8] sm:$0xff]
        %v595 = vld [vmem:[#allocation2 + $0x10] sm:$0xff]
        %v596 = vld [vmem:[#allocation2 + $0x18] sm:$0xff]
        %v597 = vld [vmem:[#allocation2 + $0x20] sm:$0xff]
        %v598 = vld [vmem:[#allocation2 + $0x28] sm:$0xff]
        %v599 = vld [vmem:[#allocation2 + $0x30] sm:$0xff]
        %v600 = vld [vmem:[#allocation2 + $0x38] sm:$0xff]
        %v601 = vld [vmem:[#allocation2 + $0x40] sm:$0xff]
        %v602 = vld [vmem:[#allocation2 + $0x48] sm:$0xff]
        %v603 = vld [vmem:[#allocation2 + $0x50] sm:$0xff]
        %v604 = vld [vmem:[#allocation2 + $0x58] sm:$0xff]
        %v605 = vld [vmem:[#allocation2 + $0x60] sm:$0xff]
        %v606 = vld [vmem:[#allocation2 + $0x68] sm:$0xff]
        %v607 = vld [vmem:[#allocation2 + $0x70] sm:$0xff]
        %v608 = vld [vmem:[#allocation2 + $0x78] sm:$0xff]
        %v609 = vld [vmem:[#allocation2 + $0x80] sm:$0xff]
        %v610 = vld [vmem:[#allocation2 + $0x88] sm:$0xff]
        %v611 = vld [vmem:[#allocation2 + $0x90] sm:$0xff]
        %v612 = vld [vmem:[#allocation2 + $0x98] sm:$0xff]
        %v613 = vld [vmem:[#allocation2 + $0xa0] sm:$0xff]
        %v614 = vld [vmem:[#allocation2 + $0xa8] sm:$0xff]
        %v615 = vld [vmem:[#allocation2 + $0xb0] sm:$0xff]
        %v616 = vld [vmem:[#allocation2 + $0xb8] sm:$0xff]
        %v617 = vld [vmem:[#allocation2 + $0xc0] sm:$0xff]
        %v618 = vld [vmem:[#allocation2 + $0xc8] sm:$0xff]
        %v619 = vld [vmem:[#allocation2 + $0xd0] sm:$0xff]
        %v620 = vld [vmem:[#allocation2 + $0xd8] sm:$0xff]
        %v621 = vld [vmem:[#allocation2 + $0xe0] sm:$0xff]
        %v622 = vld [vmem:[#allocation2 + $0xe8] sm:$0xff]
        %v623 = vld [vmem:[#allocation2 + $0xf0] sm:$0xff]
        %v624 = vld [vmem:[#allocation2 + $0xf8] sm:$0xff]
        %v625 = vld [vmem:[#allocation2 + $0x100] sm:$0xff]
        %v626 = vld [vmem:[#allocation2 + $0x108] sm:$0xff]
        %v627 = vld [vmem:[#allocation2 + $0x110] sm:$0xff]
        %v628 = vld [vmem:[#allocation2 + $0x118] sm:$0xff]
        %v629 = vld [vmem:[#allocation2 + $0x120] sm:$0xff]
        %v630 = vld [vmem:[#allocation2 + $0x128] sm:$0xff]
        %v631 = vld [vmem:[#allocation2 + $0x130] sm:$0xff]
        %v632 = vld [vmem:[#allocation2 + $0x138] sm:$0xff]
        %v633 = vld [vmem:[#allocation2 + $0x140] sm:$0xff]
        %v634 = vld [vmem:[#allocation2 + $0x148] sm:$0xff]
        %v635 = vld [vmem:[#allocation6] sm:$0xf]
        %v636 = vld [vmem:[#allocation6 + $0x4] sm:$0xf]
        %v637 = vld [vmem:[#allocation6 + $0x8] sm:$0xf]
        %v638 = vld [vmem:[#allocation6 + $0xc] sm:$0xf]
        %v639 = vld [vmem:[#allocation6 + $0x10] sm:$0xf]
        %v640 = vld [vmem:[#allocation6 + $0x14] sm:$0xf]
        %v641 = vld [vmem:[#allocation6 + $0x18] sm:$0xf]
        %v642 = vld [vmem:[#allocation6 + $0x1c] sm:$0xf]
        %v643 = vld [vmem:[#allocation6 + $0x20] sm:$0xf]
        %v644 = vld [vmem:[#allocation6 + $0x24] sm:$0xf]
        %v645 = vld [vmem:[#allocation6 + $0x28] sm:$0xf]
        %v646 = vld [vmem:[#allocation6 + $0x2c] sm:$0xf]
        %v647 = vld [vmem:[#allocation6 + $0x30] sm:$0xf]
        %v648 = vld [vmem:[#allocation6 + $0x34] sm:$0xf]
        %v649 = vld [vmem:[#allocation6 + $0x38] sm:$0xf]
        %v650 = vld [vmem:[#allocation6 + $0x3c] sm:$0xf]
        %v651 = vld [vmem:[#allocation6 + $0x40] sm:$0xf]
        %v652 = vld [vmem:[#allocation6 + $0x44] sm:$0xf]
        %v653 = vld [vmem:[#allocation6 + $0x48] sm:$0xf]
        %v654 = vld [vmem:[#allocation6 + $0x4c] sm:$0xf]
        %v655 = vld [vmem:[#allocation6 + $0x50] sm:$0xf]
        %v656 = vld [vmem:[#allocation6 + $0x54] sm:$0xf]
        %v657 = vld [vmem:[#allocation6 + $0x58] sm:$0xf]
        %v658 = vld [vmem:[#allocation6 + $0x5c] sm:$0xf]
        %v659 = vld [vmem:[#allocation6 + $0x60] sm:$0xf]
        %v660 = vld [vmem:[#allocation6 + $0x64] sm:$0xf]
        %v661 = vld [vmem:[#allocation6 + $0x68] sm:$0xf]
        %v662 = vld [vmem:[#allocation6 + $0x6c] sm:$0xf]
        %v663 = vld [vmem:[#allocation6 + $0x70] sm:$0xf]
        %v664 = vld [vmem:[#allocation6 + $0x74] sm:$0xf]
        %v665 = vld [vmem:[#allocation6 + $0x78] sm:$0xf]
        %v666 = vld [vmem:[#allocation6 + $0x7c] sm:$0xf]
        %v667 = vld [vmem:[#allocation6 + $0x80] sm:$0xf]
        %v668 = vld [vmem:[#allocation6 + $0x84] sm:$0xf]
        %v669 = vld [vmem:[#allocation6 + $0x88] sm:$0xf]
        %v670 = vld [vmem:[#allocation6 + $0x8c] sm:$0xf]
        %v671 = vld [vmem:[#allocation6 + $0x90] sm:$0xf]
        %v672 = vld [vmem:[#allocation6 + $0x94] sm:$0xf]
        %v673 = vld [vmem:[#allocation6 + $0x98] sm:$0xf]
        %v674 = vld [vmem:[#allocation6 + $0x9c] sm:$0xf]
        %v675 = vld [vmem:[#allocation6 + $0xa0] sm:$0xf]
        %v676 = vld [vmem:[#allocation6 + $0xa4] sm:$0xf]
        %v677 = vld [vmem:[#allocation6 + $0xa8] sm:$0xf]
        %v678 = vld [vmem:[#allocation6 + $0xac] sm:$0xf]
        %v679 = vld [vmem:[#allocation6 + $0xb0] sm:$0xf]
        %v680 = vld [vmem:[#allocation6 + $0xb4] sm:$0xf]
        %v681 = vld [vmem:[#allocation6 + $0xb8] sm:$0xf]
        %v682 = vld [vmem:[#allocation6 + $0xbc] sm:$0xf]
        %s683 = scalar_lea.vmem [#allocation6], 192
        %v684 = vld [vmem:[%s683] sm:$0xf]
        %v685 = vld [vmem:[%s683 + $0x4] sm:$0xf]
        %v686 = vld [vmem:[%s683 + $0x8] sm:$0xf]
        %v687 = vld [vmem:[%s683 + $0xc] sm:$0xf]
        %v688 = vld [vmem:[%s683 + $0x10] sm:$0xf]
        %v689 = vld [vmem:[%s683 + $0x14] sm:$0xf]
        %v690 = vld [vmem:[%s683 + $0x18] sm:$0xf]
        %v691 = vld [vmem:[%s683 + $0x1c] sm:$0xf]
        %v692 = vld [vmem:[%s683 + $0x20] sm:$0xf]
        %v693 = vld [vmem:[%s683 + $0x24] sm:$0xf]
        %v694 = vld [vmem:[%s683 + $0x28] sm:$0xf]
        %v695 = vld [vmem:[%s683 + $0x2c] sm:$0xf]
        %v696 = vld [vmem:[%s683 + $0x30] sm:$0xf]
        %v697 = vld [vmem:[%s683 + $0x34] sm:$0xf]
        %v698 = vld [vmem:[%s683 + $0x38] sm:$0xf]
        %v699 = vld [vmem:[%s683 + $0x3c] sm:$0xf]
        %v700 = vld [vmem:[%s683 + $0x40] sm:$0xf]
        %v701 = vld [vmem:[%s683 + $0x44] sm:$0xf]
        %v702 = vld [vmem:[%s683 + $0x48] sm:$0xf]
        %v703 = vld [vmem:[%s683 + $0x4c] sm:$0xf]
        %v704 = vld [vmem:[%s683 + $0x50] sm:$0xf]
        %v705 = vld [vmem:[%s683 + $0x54] sm:$0xf]
        %v706 = vld [vmem:[%s683 + $0x58] sm:$0xf]
        %v707 = vld [vmem:[%s683 + $0x5c] sm:$0xf]
        %v708 = vld [vmem:[%s683 + $0x60] sm:$0xf]
        %v709 = vld [vmem:[%s683 + $0x64] sm:$0xf]
        %v710 = vld [vmem:[%s683 + $0x68] sm:$0xf]
        %v711 = vld [vmem:[%s683 + $0x6c] sm:$0xf]
        %v712 = vld [vmem:[%s683 + $0x70] sm:$0xf]
        %v713 = vld [vmem:[%s683 + $0x74] sm:$0xf]
        %v714 = vld [vmem:[%s683 + $0x78] sm:$0xf]
        %v715 = vld [vmem:[%s683 + $0x7c] sm:$0xf]
        %v716 = vld [vmem:[%s683 + $0x80] sm:$0xf]
        %v717 = vld [vmem:[%s683 + $0x84] sm:$0xf]
        %v718 = vld [vmem:[%s683 + $0x88] sm:$0xf]
        %v719 = vld [vmem:[%s683 + $0x8c] sm:$0xf]
        %v720 = vld [vmem:[%s683 + $0x90] sm:$0xf]
        %v721 = vld [vmem:[%s683 + $0x94] sm:$0xf]
        %v722 = vld [vmem:[%s683 + $0x98] sm:$0xf]
        %v723 = vld [vmem:[%s683 + $0x9c] sm:$0xf]
        %v724 = vld [vmem:[%s683 + $0xa0] sm:$0xf]
        %v725 = vld [vmem:[%s683 + $0xa4] sm:$0xf]
        %v726 = vld [vmem:[%s683 + $0xa8] sm:$0xf]
        %v727 = vld [vmem:[%s683 + $0xac] sm:$0xf]
        %v728 = vld [vmem:[%s683 + $0xb0] sm:$0xf]
        %v729 = vld [vmem:[%s683 + $0xb4] sm:$0xf]
        %v730 = vld [vmem:[%s683 + $0xb8] sm:$0xf]
        %v731 = vld [vmem:[%s683 + $0xbc] sm:$0xf]
        %v780 = vunpack.c.l.b16 %v684
        %v781 = vunpack.c.l.b16 %v685
        %v782 = vunpack.c.l.b16 %v686
        %v783 = vunpack.c.l.b16 %v687
        %v784 = vunpack.c.l.b16 %v688
        %v785 = vunpack.c.l.b16 %v689
        %v786 = vunpack.c.l.b16 %v690
        %v787 = vunpack.c.l.b16 %v691
        %v788 = vunpack.c.l.b16 %v692
        %v789 = vunpack.c.l.b16 %v693
        %v790 = vunpack.c.l.b16 %v694
        %v791 = vunpack.c.l.b16 %v695
        %v792 = vunpack.c.l.b16 %v696
        %v793 = vunpack.c.l.b16 %v697
        %v794 = vunpack.c.l.b16 %v698
        %v795 = vunpack.c.l.b16 %v699
        %v796 = vunpack.c.l.b16 %v700
        %v797 = vunpack.c.l.b16 %v701
        %v798 = vunpack.c.l.b16 %v702
        %v799 = vunpack.c.l.b16 %v703
        %v800 = vunpack.c.l.b16 %v704
        %v801 = vunpack.c.l.b16 %v705
        %v802 = vunpack.c.l.b16 %v706
        %v803 = vunpack.c.l.b16 %v707
        %v804 = vunpack.c.l.b16 %v708
        %v805 = vunpack.c.l.b16 %v709
        %v806 = vunpack.c.l.b16 %v710
        %v807 = vunpack.c.l.b16 %v711
        %v808 = vunpack.c.l.b16 %v712
        %v809 = vunpack.c.l.b16 %v713
        %v810 = vunpack.c.l.b16 %v714
        %v811 = vunpack.c.l.b16 %v715
        %v812 = vunpack.c.l.b16 %v716
        %v813 = vunpack.c.l.b16 %v717
        %v814 = vunpack.c.l.b16 %v718
        %v815 = vunpack.c.l.b16 %v719
        %v816 = vunpack.c.l.b16 %v720
        %v817 = vunpack.c.l.b16 %v721
        %v818 = vunpack.c.l.b16 %v722
        %v819 = vunpack.c.l.b16 %v723
        %v820 = vunpack.c.l.b16 %v724
        %v821 = vunpack.c.l.b16 %v725
        %v822 = vunpack.c.l.b16 %v726
        %v823 = vunpack.c.l.b16 %v727
        %v824 = vunpack.c.l.b16 %v728
        %v825 = vunpack.c.l.b16 %v729
        %v826 = vunpack.c.l.b16 %v730
        %v827 = vunpack.c.l.b16 %v731
        %v828 = vpack.c.b16 %v781, %v780
        %v829 = vpack.c.b16 %v783, %v782
        %v830 = vpack.c.b16 %v785, %v784
        %v831 = vpack.c.b16 %v787, %v786
        %v832 = vpack.c.b16 %v789, %v788
        %v833 = vpack.c.b16 %v791, %v790
        %v834 = vpack.c.b16 %v793, %v792
        %v835 = vpack.c.b16 %v795, %v794
        %v836 = vpack.c.b16 %v797, %v796
        %v837 = vpack.c.b16 %v799, %v798
        %v838 = vpack.c.b16 %v801, %v800
        %v839 = vpack.c.b16 %v803, %v802
        %v840 = vpack.c.b16 %v805, %v804
        %v841 = vpack.c.b16 %v807, %v806
        %v842 = vpack.c.b16 %v809, %v808
        %v843 = vpack.c.b16 %v811, %v810
        %v844 = vpack.c.b16 %v813, %v812
        %v845 = vpack.c.b16 %v815, %v814
        %v846 = vpack.c.b16 %v817, %v816
        %v847 = vpack.c.b16 %v819, %v818
        %v848 = vpack.c.b16 %v821, %v820
        %v849 = vpack.c.b16 %v823, %v822
        %v850 = vpack.c.b16 %v825, %v824
        %v851 = vpack.c.b16 %v827, %v826
        %876 = vmatprep.subr.bf16.mxu0 0
        %877 = vmatpush1.bf16.msra.mxu0 %v828
        %878 = vmatprep.subr.bf16.mxu0 0
        %879 = vmatpush1.bf16.msra.mxu0 %v829
        %880 = vmatprep.subr.bf16.mxu0 0
        %881 = vmatpush1.bf16.msra.mxu0 %v830
        %882 = vmatprep.subr.bf16.mxu0 0
        %883 = vmatpush1.bf16.msra.mxu0 %v831
        %884 = vmatprep.subr.bf16.mxu0 0
        %885 = vmatpush1.bf16.msra.mxu0 %v832
        %886 = vmatprep.subr.bf16.mxu0 0
        %887 = vmatpush1.bf16.msra.mxu0 %v833
        %888 = vmatprep.subr.bf16.mxu0 0
        %889 = vmatpush1.bf16.msra.mxu0 %v834
        %890 = vmatprep.subr.bf16.mxu0 0
        %891 = vmatpush1.bf16.msra.mxu0 %v835
        %892 = vmatprep.subr.bf16.mxu0 0
        %893 = vmatpush1.bf16.msra.mxu0 %v836
        %894 = vmatprep.subr.bf16.mxu0 0
        %895 = vmatpush1.bf16.msra.mxu0 %v837
        %896 = vmatprep.subr.bf16.mxu0 0
        %897 = vmatpush1.bf16.msra.mxu0 %v838
        %898 = vmatprep.subr.bf16.mxu0 0
        %899 = vmatpush1.bf16.msra.mxu0 %v839
        %900 = vmatprep.subr.bf16.mxu0 0
        %901 = vmatpush1.bf16.msra.mxu0 %v840
        %902 = vmatprep.subr.bf16.mxu0 0
        %903 = vmatpush1.bf16.msra.mxu0 %v841
        %904 = vmatprep.subr.bf16.mxu0 0
        %905 = vmatpush1.bf16.msra.mxu0 %v842
        %906 = vmatprep.subr.bf16.mxu0 0
        %907 = vmatpush1.bf16.msra.mxu0 %v843
        %908 = vmatprep.mubr.bf16.mxu0 %v594
        %909 = vmatmul.mubr.bf16.gmra.mrb[0].mxu0 %v593
        %v910 = vpop.f32.mrb[0].mxu0
        %v911 = vadd.f32 0.0, %v910
        %v912 = vpop.f32.mrb[0].mxu0
        %v913 = vpop.f32.mrb[0].mxu0
        %v914 = vadd.f32 0.0, %v913
        %v915 = vpop.f32.mrb[0].mxu0
        %916 = vmatprep.mubr.bf16.mxu0 %v597
        %917 = vmatmul.mubr.bf16.gmra.mrb[0].mxu0 %v596
        %v918 = vpop.f32.mrb[0].mxu0
        %v919 = vadd.f32 0.0, %v918
        %v920 = vpop.f32.mrb[0].mxu0
        %v921 = vpop.f32.mrb[0].mxu0
        %v922 = vadd.f32 0.0, %v921
        %v923 = vpop.f32.mrb[0].mxu0
        %924 = vmatprep.mubr.bf16.mxu0 %v600
        %925 = vmatmul.mubr.bf16.gmra.mrb[0].mxu0 %v599
        %v926 = vpop.f32.mrb[0].mxu0
        %v927 = vadd.f32 0.0, %v926
        %v928 = vpop.f32.mrb[0].mxu0
        %v929 = vpop.f32.mrb[0].mxu0
        %v930 = vadd.f32 0.0, %v929
        %v931 = vpop.f32.mrb[0].mxu0
        %932 = vmatprep.mubr.bf16.mxu0 %v603
        %933 = vmatmul.mubr.bf16.gmra.mrb[0].mxu0 %v602
        %v934 = vpop.f32.mrb[0].mxu0
        %v935 = vadd.f32 0.0, %v934
        %v936 = vpop.f32.mrb[0].mxu0
        %v937 = vpop.f32.mrb[0].mxu0
        %v938 = vadd.f32 0.0, %v937
        %v939 = vpop.f32.mrb[0].mxu0
        %940 = vmatprep.mubr.bf16.mxu0 %v606
        %941 = vmatmul.mubr.bf16.gmra.mrb[0].mxu0 %v605
        %v942 = vpop.f32.mrb[0].mxu0
        %v943 = vadd.f32 0.0, %v942
        %v944 = vpop.f32.mrb[0].mxu0
        %v945 = vpop.f32.mrb[0].mxu0
        %v946 = vadd.f32 0.0, %v945
        %v947 = vpop.f32.mrb[0].mxu0
        %948 = vmatprep.mubr.bf16.mxu0 %v609
        %949 = vmatmul.mubr.bf16.gmra.mrb[0].mxu0 %v608
        %v950 = vpop.f32.mrb[0].mxu0
        %v951 = vadd.f32 0.0, %v950
        %v952 = vpop.f32.mrb[0].mxu0
        %v953 = vpop.f32.mrb[0].mxu0
        %v954 = vadd.f32 0.0, %v953
        %v955 = vpop.f32.mrb[0].mxu0
        %956 = vmatprep.mubr.bf16.mxu0 %v612
        %957 = vmatmul.mubr.bf16.gmra.mrb[0].mxu0 %v611
        %v958 = vpop.f32.mrb[0].mxu0
        %v959 = vadd.f32 0.0, %v958
        %v960 = vpop.f32.mrb[0].mxu0
        %v961 = vpop.f32.mrb[0].mxu0
        %v962 = vadd.f32 0.0, %v961
        %v963 = vpop.f32.mrb[0].mxu0
        %964 = vmatprep.mubr.bf16.mxu0 %v615
        %965 = vmatmul.mubr.bf16.gmra.mrb[0].mxu0 %v614
        %v966 = vpop.f32.mrb[0].mxu0
        %v967 = vadd.f32 0.0, %v966
        %v968 = vpop.f32.mrb[0].mxu0
        %v969 = vpop.f32.mrb[0].mxu0
        %v970 = vadd.f32 0.0, %v969
        %v971 = vpop.f32.mrb[0].mxu0
        %972 = vmatprep.mubr.bf16.mxu0 %v618
        %973 = vmatmul.mubr.bf16.gmra.mrb[0].mxu0 %v617
        %v974 = vpop.f32.mrb[0].mxu0
        %v975 = vadd.f32 0.0, %v974
        %v976 = vpop.f32.mrb[0].mxu0
        %v977 = vpop.f32.mrb[0].mxu0
        %v978 = vadd.f32 0.0, %v977
        %v979 = vpop.f32.mrb[0].mxu0
        %980 = vmatprep.mubr.bf16.mxu0 %v621
        %981 = vmatmul.mubr.bf16.gmra.mrb[0].mxu0 %v620
        %v982 = vpop.f32.mrb[0].mxu0
        %v983 = vadd.f32 0.0, %v982
        %v984 = vpop.f32.mrb[0].mxu0
        %v985 = vpop.f32.mrb[0].mxu0
        %v986 = vadd.f32 0.0, %v985
        %v987 = vpop.f32.mrb[0].mxu0
        %988 = vmatprep.mubr.bf16.mxu0 %v624
        %989 = vmatmul.mubr.bf16.gmra.mrb[0].mxu0 %v623
        %v990 = vpop.f32.mrb[0].mxu0
        %v991 = vadd.f32 0.0, %v990
        %v992 = vpop.f32.mrb[0].mxu0
        %v993 = vpop.f32.mrb[0].mxu0
        %v994 = vadd.f32 0.0, %v993
        %v995 = vpop.f32.mrb[0].mxu0
        %996 = vmatprep.mubr.bf16.mxu0 %v627
        %997 = vmatmul.mubr.bf16.gmra.mrb[0].mxu0 %v626
        %v998 = vpop.f32.mrb[0].mxu0
        %v999 = vadd.f32 0.0, %v998
        %v1000 = vpop.f32.mrb[0].mxu0
        %v1001 = vpop.f32.mrb[0].mxu0
        %v1002 = vadd.f32 0.0, %v1001
        %v1003 = vpop.f32.mrb[0].mxu0
        %1004 = vmatprep.mubr.bf16.mxu0 %v630
        %1005 = vmatmul.mubr.bf16.gmra.mrb[0].mxu0 %v629
        %v1006 = vpop.f32.mrb[0].mxu0
        %v1007 = vadd.f32 0.0, %v1006
        %v1008 = vpop.f32.mrb[0].mxu0
        %v1009 = vpop.f32.mrb[0].mxu0
        %v1010 = vadd.f32 0.0, %v1009
        %v1011 = vpop.f32.mrb[0].mxu0
        %1012 = vmatprep.mubr.bf16.mxu0 %v633
        %1013 = vmatmul.mubr.bf16.gmra.mrb[0].mxu0 %v632
        %v1014 = vpop.f32.mrb[0].mxu0
        %v1015 = vadd.f32 0.0, %v1014
        %v1016 = vpop.f32.mrb[0].mxu0
        %v1017 = vpop.f32.mrb[0].mxu0
        %v1018 = vadd.f32 0.0, %v1017
        %v1019 = vpop.f32.mrb[0].mxu0
        %1020 = vdwg.mxu0
        %1021 = vmatprep.subr.bf16.mxu0 0
        %1022 = vmatpush1.bf16.msra.mxu0 %v844
        %1023 = vmatprep.subr.bf16.mxu0 0
        %1024 = vmatpush1.bf16.msra.mxu0 %v845
        %1025 = vmatprep.subr.bf16.mxu0 0
        %1026 = vmatpush1.bf16.msra.mxu0 %v846
        %1027 = vmatprep.subr.bf16.mxu0 0
        %1028 = vmatpush1.bf16.msra.mxu0 %v847
        %1029 = vmatprep.subr.bf16.mxu0 0
        %1030 = vmatpush1.bf16.msra.mxu0 %v848
        %1031 = vmatprep.subr.bf16.mxu0 0
        %1032 = vmatpush1.bf16.msra.mxu0 %v849
        %1033 = vmatprep.subr.bf16.mxu0 0
        %1034 = vmatpush1.bf16.msra.mxu0 %v850
        %1035 = vmatprep.subr.bf16.mxu0 0
        %1036 = vmatpush1.bf16.msra.mxu0 %v851
        %1037 = vmatprep.subr.bf16.mxu0 0
        %1038 = vmatpush1.bf16.msra.mxu0 0
        %1039 = vmatprep.subr.bf16.mxu0 0
        %1040 = vmatpush1.bf16.msra.mxu0 0
        %1041 = vmatprep.subr.bf16.mxu0 0
        %1042 = vmatpush1.bf16.msra.mxu0 0
        %1043 = vmatprep.subr.bf16.mxu0 0
        %1044 = vmatpush1.bf16.msra.mxu0 0
        %1045 = vmatprep.subr.bf16.mxu0 0
        %1046 = vmatpush1.bf16.msra.mxu0 0
        %1047 = vmatprep.subr.bf16.mxu0 0
        %1048 = vmatpush1.bf16.msra.mxu0 0
        %1049 = vmatprep.subr.bf16.mxu0 0
        %1050 = vmatpush1.bf16.msra.mxu0 0
        %1051 = vmatprep.subr.bf16.mxu0 0
        %1052 = vmatpush1.bf16.msra.mxu0 0
        %1053 = vmatprep.mubr.bf16.mxu0 0
        %1054 = vmatmul.mubr.bf16.gmra.mrb[0].mxu0 %v595
        %v1055 = vpop.f32.mrb[0].mxu0
        %v1056 = vadd.f32 %v911, %v1055
        %v1057 = vpop.f32.mrb[0].mxu0
        %v1058 = vpop.f32.mrb[0].mxu0
        %v1059 = vadd.f32 %v914, %v1058
        %v1060 = vpop.f32.mrb[0].mxu0
        %1061 = vmatprep.mubr.bf16.mxu0 0
        %1062 = vmatmul.mubr.bf16.gmra.mrb[0].mxu0 %v598
        %v1063 = vpop.f32.mrb[0].mxu0
        %v1064 = vadd.f32 %v919, %v1063
        %v1065 = vpop.f32.mrb[0].mxu0
        %v1066 = vpop.f32.mrb[0].mxu0
        %v1067 = vadd.f32 %v922, %v1066
        %v1068 = vpop.f32.mrb[0].mxu0
        %1069 = vmatprep.mubr.bf16.mxu0 0
        %1070 = vmatmul.mubr.bf16.gmra.mrb[0].mxu0 %v601
        %v1071 = vpop.f32.mrb[0].mxu0
        %v1072 = vadd.f32 %v927, %v1071
        %v1073 = vpop.f32.mrb[0].mxu0
        %v1074 = vpop.f32.mrb[0].mxu0
        %v1075 = vadd.f32 %v930, %v1074
        %v1076 = vpop.f32.mrb[0].mxu0
        %1077 = vmatprep.mubr.bf16.mxu0 0
        %1078 = vmatmul.mubr.bf16.gmra.mrb[0].mxu0 %v604
        %v1079 = vpop.f32.mrb[0].mxu0
        %v1080 = vadd.f32 %v935, %v1079
        %v1081 = vpop.f32.mrb[0].mxu0
        %v1082 = vpop.f32.mrb[0].mxu0
        %v1083 = vadd.f32 %v938, %v1082
        %v1084 = vpop.f32.mrb[0].mxu0
        %1085 = vmatprep.mubr.bf16.mxu0 0
        %1086 = vmatmul.mubr.bf16.gmra.mrb[0].mxu0 %v607
        %v1087 = vpop.f32.mrb[0].mxu0
        %v1088 = vadd.f32 %v943, %v1087
        %v1089 = vpop.f32.mrb[0].mxu0
        %v1090 = vpop.f32.mrb[0].mxu0
        %v1091 = vadd.f32 %v946, %v1090
        %v1092 = vpop.f32.mrb[0].mxu0
        %1093 = vmatprep.mubr.bf16.mxu0 0
        %1094 = vmatmul.mubr.bf16.gmra.mrb[0].mxu0 %v610
        %v1095 = vpop.f32.mrb[0].mxu0
        %v1096 = vadd.f32 %v951, %v1095
        %v1097 = vpop.f32.mrb[0].mxu0
        %v1098 = vpop.f32.mrb[0].mxu0
        %v1099 = vadd.f32 %v954, %v1098
        %v1100 = vpop.f32.mrb[0].mxu0
        %1101 = vmatprep.mubr.bf16.mxu0 0
        %1102 = vmatmul.mubr.bf16.gmra.mrb[0].mxu0 %v613
        %v1103 = vpop.f32.mrb[0].mxu0
        %v1104 = vadd.f32 %v959, %v1103
        %v1105 = vpop.f32.mrb[0].mxu0
        %v1106 = vpop.f32.mrb[0].mxu0
        %v1107 = vadd.f32 %v962, %v1106
        %v1108 = vpop.f32.mrb[0].mxu0
        %1109 = vmatprep.mubr.bf16.mxu0 0
        %1110 = vmatmul.mubr.bf16.gmra.mrb[0].mxu0 %v616
        %v1111 = vpop.f32.mrb[0].mxu0
        %v1112 = vadd.f32 %v967, %v1111
        %v1113 = vpop.f32.mrb[0].mxu0
        %v1114 = vpop.f32.mrb[0].mxu0
        %v1115 = vadd.f32 %v970, %v1114
        %v1116 = vpop.f32.mrb[0].mxu0
        %1117 = vmatprep.mubr.bf16.mxu0 0
        %1118 = vmatmul.mubr.bf16.gmra.mrb[0].mxu0 %v619
        %v1119 = vpop.f32.mrb[0].mxu0
        %v1120 = vadd.f32 %v975, %v1119
        %v1121 = vpop.f32.mrb[0].mxu0
        %v1122 = vpop.f32.mrb[0].mxu0
        %v1123 = vadd.f32 %v978, %v1122
        %v1124 = vpop.f32.mrb[0].mxu0
        %1125 = vmatprep.mubr.bf16.mxu0 0
        %1126 = vmatmul.mubr.bf16.gmra.mrb[0].mxu0 %v622
        %v1127 = vpop.f32.mrb[0].mxu0
        %v1128 = vadd.f32 %v983, %v1127
        %v1129 = vpop.f32.mrb[0].mxu0
        %v1130 = vpop.f32.mrb[0].mxu0
        %v1131 = vadd.f32 %v986, %v1130
        %v1132 = vpop.f32.mrb[0].mxu0
        %1133 = vmatprep.mubr.bf16.mxu0 0
        %1134 = vmatmul.mubr.bf16.gmra.mrb[0].mxu0 %v625
        %v1135 = vpop.f32.mrb[0].mxu0
        %v1136 = vadd.f32 %v991, %v1135
        %v1137 = vpop.f32.mrb[0].mxu0
        %v1138 = vpop.f32.mrb[0].mxu0
        %v1139 = vadd.f32 %v994, %v1138
        %v1140 = vpop.f32.mrb[0].mxu0
        %1141 = vmatprep.mubr.bf16.mxu0 0
        %1142 = vmatmul.mubr.bf16.gmra.mrb[0].mxu0 %v628
        %v1143 = vpop.f32.mrb[0].mxu0
        %v1144 = vadd.f32 %v999, %v1143
        %v1145 = vpop.f32.mrb[0].mxu0
        %v1146 = vpop.f32.mrb[0].mxu0
        %v1147 = vadd.f32 %v1002, %v1146
        %v1148 = vpop.f32.mrb[0].mxu0
        %1149 = vmatprep.mubr.bf16.mxu0 0
        %1150 = vmatmul.mubr.bf16.gmra.mrb[0].mxu0 %v631
        %v1151 = vpop.f32.mrb[0].mxu0
        %v1152 = vadd.f32 %v1007, %v1151
        %v1153 = vpop.f32.mrb[0].mxu0
        %v1154 = vpop.f32.mrb[0].mxu0
        %v1155 = vadd.f32 %v1010, %v1154
        %v1156 = vpop.f32.mrb[0].mxu0
        %1157 = vmatprep.mubr.bf16.mxu0 0
        %1158 = vmatmul.mubr.bf16.gmra.mrb[0].mxu0 %v634
        %v1159 = vpop.f32.mrb[0].mxu0
        %v1160 = vadd.f32 %v1015, %v1159
        %v1161 = vpop.f32.mrb[0].mxu0
        %v1162 = vpop.f32.mrb[0].mxu0
        %v1163 = vadd.f32 %v1018, %v1162
        %v1164 = vpop.f32.mrb[0].mxu0
        %1165 = vdwg.mxu0
        %v1166 = vrot.slane %v1056, 1
        %v1167 = vrot.slane %v1059, 1
        %v1168 = vrot.slane %v1064, 1
        %v1169 = vrot.slane %v1067, 1
        %v1170 = vrot.slane %v1072, 1
        %v1171 = vrot.slane %v1075, 1
        %v1172 = vrot.slane %v1080, 1
        %v1173 = vrot.slane %v1083, 1
        %v1174 = vrot.slane %v1088, 1
        %v1175 = vrot.slane %v1091, 1
        %v1176 = vrot.slane %v1096, 1
        %v1177 = vrot.slane %v1099, 1
        %v1178 = vrot.slane %v1104, 1
        %v1179 = vrot.slane %v1107, 1
        %v1180 = vrot.slane %v1112, 1
        %v1181 = vrot.slane %v1115, 1
        %v1182 = vrot.slane %v1120, 1
        %v1183 = vrot.slane %v1123, 1
        %v1184 = vrot.slane %v1128, 1
        %v1185 = vrot.slane %v1131, 1
        %v1186 = vrot.slane %v1136, 1
        %v1187 = vrot.slane %v1139, 1
        %v1188 = vrot.slane %v1144, 1
        %v1189 = vrot.slane %v1147, 1
        %v1190 = vrot.slane %v1152, 1
        %v1191 = vrot.slane %v1155, 1
        %v1192 = vrot.slane %v1160, 1
        %v1193 = vrot.slane %v1163, 1
        %v1194 = vlaneseq
        %v1195 = vshrl.u32 %v1194, 7
        %vm1196 = vcmp.lt.s32.totalorder %v1195, 7
        %v1197 = vsel %vm1196, %v1192, %v1193
        %v1198 = vsel %vm1196, %v1191, %v1192
        %v1199 = vsel %vm1196, %v1190, %v1191
        %v1200 = vsel %vm1196, %v1189, %v1190
        %v1201 = vsel %vm1196, %v1188, %v1189
        %v1202 = vsel %vm1196, %v1187, %v1188
        %v1203 = vsel %vm1196, %v1186, %v1187
        %v1204 = vsel %vm1196, %v1185, %v1186
        %v1205 = vsel %vm1196, %v1184, %v1185
        %v1206 = vsel %vm1196, %v1183, %v1184
        %v1207 = vsel %vm1196, %v1182, %v1183
        %v1208 = vsel %vm1196, %v1181, %v1182
        %v1209 = vsel %vm1196, %v1180, %v1181
        %v1210 = vsel %vm1196, %v1179, %v1180
        %v1211 = vsel %vm1196, %v1178, %v1179
        %v1212 = vsel %vm1196, %v1177, %v1178
        %v1213 = vsel %vm1196, %v1176, %v1177
        %v1214 = vsel %vm1196, %v1175, %v1176
        %v1215 = vsel %vm1196, %v1174, %v1175
        %v1216 = vsel %vm1196, %v1173, %v1174
        %v1217 = vsel %vm1196, %v1172, %v1173
        %v1218 = vsel %vm1196, %v1171, %v1172
        %v1219 = vsel %vm1196, %v1170, %v1171
        %v1220 = vsel %vm1196, %v1169, %v1170
        %v1221 = vsel %vm1196, %v1168, %v1169
        %v1222 = vsel %vm1196, %v1167, %v1168
        %v1223 = vsel %vm1196, %v1166, %v1167
        %v1224 = vsel %vm1196, %v1193, %v1166
        %v1273 = vunpack.c.l.b16 %v635
        %v1274 = vunpack.c.l.b16 %v636
        %v1275 = vunpack.c.l.b16 %v637
        %v1276 = vunpack.c.l.b16 %v638
        %v1277 = vunpack.c.l.b16 %v639
        %v1278 = vunpack.c.l.b16 %v640
        %v1279 = vunpack.c.l.b16 %v641
        %v1280 = vunpack.c.l.b16 %v642
        %v1281 = vunpack.c.l.b16 %v643
        %v1282 = vunpack.c.l.b16 %v644
        %v1283 = vunpack.c.l.b16 %v645
        %v1284 = vunpack.c.l.b16 %v646
        %v1285 = vunpack.c.l.b16 %v647
        %v1286 = vunpack.c.l.b16 %v648
        %v1287 = vunpack.c.l.b16 %v649
        %v1288 = vunpack.c.l.b16 %v650
        %v1289 = vunpack.c.l.b16 %v651
        %v1290 = vunpack.c.l.b16 %v652
        %v1291 = vunpack.c.l.b16 %v653
        %v1292 = vunpack.c.l.b16 %v654
        %v1293 = vunpack.c.l.b16 %v655
        %v1294 = vunpack.c.l.b16 %v656
        %v1295 = vunpack.c.l.b16 %v657
        %v1296 = vunpack.c.l.b16 %v658
        %v1297 = vunpack.c.l.b16 %v659
        %v1298 = vunpack.c.l.b16 %v660
        %v1299 = vunpack.c.l.b16 %v661
        %v1300 = vunpack.c.l.b16 %v662
        %v1301 = vunpack.c.l.b16 %v663
        %v1302 = vunpack.c.l.b16 %v664
        %v1303 = vunpack.c.l.b16 %v665
        %v1304 = vunpack.c.l.b16 %v666
        %v1305 = vunpack.c.l.b16 %v667
        %v1306 = vunpack.c.l.b16 %v668
        %v1307 = vunpack.c.l.b16 %v669
        %v1308 = vunpack.c.l.b16 %v670
        %v1309 = vunpack.c.l.b16 %v671
        %v1310 = vunpack.c.l.b16 %v672
        %v1311 = vunpack.c.l.b16 %v673
        %v1312 = vunpack.c.l.b16 %v674
        %v1313 = vunpack.c.l.b16 %v675
        %v1314 = vunpack.c.l.b16 %v676
        %v1315 = vunpack.c.l.b16 %v677
        %v1316 = vunpack.c.l.b16 %v678
        %v1317 = vunpack.c.l.b16 %v679
        %v1318 = vunpack.c.l.b16 %v680
        %v1319 = vunpack.c.l.b16 %v681
        %v1320 = vunpack.c.l.b16 %v682
        %v1321 = vpack.c.b16 %v1274, %v1273
        %v1322 = vpack.c.b16 %v1276, %v1275
        %v1323 = vpack.c.b16 %v1278, %v1277
        %v1324 = vpack.c.b16 %v1280, %v1279
        %v1325 = vpack.c.b16 %v1282, %v1281
        %v1326 = vpack.c.b16 %v1284, %v1283
        %v1327 = vpack.c.b16 %v1286, %v1285
        %v1328 = vpack.c.b16 %v1288, %v1287
        %v1329 = vpack.c.b16 %v1290, %v1289
        %v1330 = vpack.c.b16 %v1292, %v1291
        %v1331 = vpack.c.b16 %v1294, %v1293
        %v1332 = vpack.c.b16 %v1296, %v1295
        %v1333 = vpack.c.b16 %v1298, %v1297
        %v1334 = vpack.c.b16 %v1300, %v1299
        %v1335 = vpack.c.b16 %v1302, %v1301
        %v1336 = vpack.c.b16 %v1304, %v1303
        %v1337 = vpack.c.b16 %v1306, %v1305
        %v1338 = vpack.c.b16 %v1308, %v1307
        %v1339 = vpack.c.b16 %v1310, %v1309
        %v1340 = vpack.c.b16 %v1312, %v1311
        %v1341 = vpack.c.b16 %v1314, %v1313
        %v1342 = vpack.c.b16 %v1316, %v1315
        %v1343 = vpack.c.b16 %v1318, %v1317
        %v1344 = vpack.c.b16 %v1320, %v1319
        %1369 = vmatprep.subr.bf16.mxu0 0
        %1370 = vmatpush1.bf16.msra.mxu0 %v1321
        %1371 = vmatprep.subr.bf16.mxu0 0
        %1372 = vmatpush1.bf16.msra.mxu0 %v1322
        %1373 = vmatprep.subr.bf16.mxu0 0
        %1374 = vmatpush1.bf16.msra.mxu0 %v1323
        %1375 = vmatprep.subr.bf16.mxu0 0
        %1376 = vmatpush1.bf16.msra.mxu0 %v1324
        %1377 = vmatprep.subr.bf16.mxu0 0
        %1378 = vmatpush1.bf16.msra.mxu0 %v1325
        %1379 = vmatprep.subr.bf16.mxu0 0
        %1380 = vmatpush1.bf16.msra.mxu0 %v1326
        %1381 = vmatprep.subr.bf16.mxu0 0
        %1382 = vmatpush1.bf16.msra.mxu0 %v1327
        %1383 = vmatprep.subr.bf16.mxu0 0
        %1384 = vmatpush1.bf16.msra.mxu0 %v1328
        %1385 = vmatprep.subr.bf16.mxu0 0
        %1386 = vmatpush1.bf16.msra.mxu0 %v1329
        %1387 = vmatprep.subr.bf16.mxu0 0
        %1388 = vmatpush1.bf16.msra.mxu0 %v1330
        %1389 = vmatprep.subr.bf16.mxu0 0
        %1390 = vmatpush1.bf16.msra.mxu0 %v1331
        %1391 = vmatprep.subr.bf16.mxu0 0
        %1392 = vmatpush1.bf16.msra.mxu0 %v1332
        %1393 = vmatprep.subr.bf16.mxu0 0
        %1394 = vmatpush1.bf16.msra.mxu0 %v1333
        %1395 = vmatprep.subr.bf16.mxu0 0
        %1396 = vmatpush1.bf16.msra.mxu0 %v1334
        %1397 = vmatprep.subr.bf16.mxu0 0
        %1398 = vmatpush1.bf16.msra.mxu0 %v1335
        %1399 = vmatprep.subr.bf16.mxu0 0
        %1400 = vmatpush1.bf16.msra.mxu0 %v1336
        %1401 = vmatprep.mubr.bf16.mxu0 %v594
        %1402 = vmatmul.mubr.bf16.gmra.mrb[0].mxu0 %v593
        %v1403 = vpop.f32.mrb[0].mxu0
        %v1404 = vadd.f32 %v1223, %v1403
        %v1405 = vpop.f32.mrb[0].mxu0
        %v1406 = vpop.f32.mrb[0].mxu0
        %v1407 = vadd.f32 %v1222, %v1406
        %v1408 = vpop.f32.mrb[0].mxu0
        %1409 = vmatprep.mubr.bf16.mxu0 %v597
        %1410 = vmatmul.mubr.bf16.gmra.mrb[0].mxu0 %v596
        %v1411 = vpop.f32.mrb[0].mxu0
        %v1412 = vadd.f32 %v1221, %v1411
        %v1413 = vpop.f32.mrb[0].mxu0
        %v1414 = vpop.f32.mrb[0].mxu0
        %v1415 = vadd.f32 %v1220, %v1414
        %v1416 = vpop.f32.mrb[0].mxu0
        %1417 = vmatprep.mubr.bf16.mxu0 %v600
        %1418 = vmatmul.mubr.bf16.gmra.mrb[0].mxu0 %v599
        %v1419 = vpop.f32.mrb[0].mxu0
        %v1420 = vadd.f32 %v1219, %v1419
        %v1421 = vpop.f32.mrb[0].mxu0
        %v1422 = vpop.f32.mrb[0].mxu0
        %v1423 = vadd.f32 %v1218, %v1422
        %v1424 = vpop.f32.mrb[0].mxu0
        %1425 = vmatprep.mubr.bf16.mxu0 %v603
        %1426 = vmatmul.mubr.bf16.gmra.mrb[0].mxu0 %v602
        %v1427 = vpop.f32.mrb[0].mxu0
        %v1428 = vadd.f32 %v1217, %v1427
        %v1429 = vpop.f32.mrb[0].mxu0
        %v1430 = vpop.f32.mrb[0].mxu0
        %v1431 = vadd.f32 %v1216, %v1430
        %v1432 = vpop.f32.mrb[0].mxu0
        %1433 = vmatprep.mubr.bf16.mxu0 %v606
        %1434 = vmatmul.mubr.bf16.gmra.mrb[0].mxu0 %v605
        %v1435 = vpop.f32.mrb[0].mxu0
        %v1436 = vadd.f32 %v1215, %v1435
        %v1437 = vpop.f32.mrb[0].mxu0
        %v1438 = vpop.f32.mrb[0].mxu0
        %v1439 = vadd.f32 %v1214, %v1438
        %v1440 = vpop.f32.mrb[0].mxu0
        %1441 = vmatprep.mubr.bf16.mxu0 %v609
        %1442 = vmatmul.mubr.bf16.gmra.mrb[0].mxu0 %v608
        %v1443 = vpop.f32.mrb[0].mxu0
        %v1444 = vadd.f32 %v1213, %v1443
        %v1445 = vpop.f32.mrb[0].mxu0
        %v1446 = vpop.f32.mrb[0].mxu0
        %v1447 = vadd.f32 %v1212, %v1446
        %v1448 = vpop.f32.mrb[0].mxu0
        %1449 = vmatprep.mubr.bf16.mxu0 %v612
        %1450 = vmatmul.mubr.bf16.gmra.mrb[0].mxu0 %v611
        %v1451 = vpop.f32.mrb[0].mxu0
        %v1452 = vadd.f32 %v1211, %v1451
        %v1453 = vpop.f32.mrb[0].mxu0
        %v1454 = vpop.f32.mrb[0].mxu0
        %v1455 = vadd.f32 %v1210, %v1454
        %v1456 = vpop.f32.mrb[0].mxu0
        %1457 = vmatprep.mubr.bf16.mxu0 %v615
        %1458 = vmatmul.mubr.bf16.gmra.mrb[0].mxu0 %v614
        %v1459 = vpop.f32.mrb[0].mxu0
        %v1460 = vadd.f32 %v1209, %v1459
        %v1461 = vpop.f32.mrb[0].mxu0
        %v1462 = vpop.f32.mrb[0].mxu0
        %v1463 = vadd.f32 %v1208, %v1462
        %v1464 = vpop.f32.mrb[0].mxu0
        %1465 = vmatprep.mubr.bf16.mxu0 %v618
        %1466 = vmatmul.mubr.bf16.gmra.mrb[0].mxu0 %v617
        %v1467 = vpop.f32.mrb[0].mxu0
        %v1468 = vadd.f32 %v1207, %v1467
        %v1469 = vpop.f32.mrb[0].mxu0
        %v1470 = vpop.f32.mrb[0].mxu0
        %v1471 = vadd.f32 %v1206, %v1470
        %v1472 = vpop.f32.mrb[0].mxu0
        %1473 = vmatprep.mubr.bf16.mxu0 %v621
        %1474 = vmatmul.mubr.bf16.gmra.mrb[0].mxu0 %v620
        %v1475 = vpop.f32.mrb[0].mxu0
        %v1476 = vadd.f32 %v1205, %v1475
        %v1477 = vpop.f32.mrb[0].mxu0
        %v1478 = vpop.f32.mrb[0].mxu0
        %v1479 = vadd.f32 %v1204, %v1478
        %v1480 = vpop.f32.mrb[0].mxu0
        %1481 = vmatprep.mubr.bf16.mxu0 %v624
        %1482 = vmatmul.mubr.bf16.gmra.mrb[0].mxu0 %v623
        %v1483 = vpop.f32.mrb[0].mxu0
        %v1484 = vadd.f32 %v1203, %v1483
        %v1485 = vpop.f32.mrb[0].mxu0
        %v1486 = vpop.f32.mrb[0].mxu0
        %v1487 = vadd.f32 %v1202, %v1486
        %v1488 = vpop.f32.mrb[0].mxu0
        %1489 = vmatprep.mubr.bf16.mxu0 %v627
        %1490 = vmatmul.mubr.bf16.gmra.mrb[0].mxu0 %v626
        %v1491 = vpop.f32.mrb[0].mxu0
        %v1492 = vadd.f32 %v1201, %v1491
        %v1493 = vpop.f32.mrb[0].mxu0
        %v1494 = vpop.f32.mrb[0].mxu0
        %v1495 = vadd.f32 %v1200, %v1494
        %v1496 = vpop.f32.mrb[0].mxu0
        %1497 = vmatprep.mubr.bf16.mxu0 %v630
        %1498 = vmatmul.mubr.bf16.gmra.mrb[0].mxu0 %v629
        %v1499 = vpop.f32.mrb[0].mxu0
        %v1500 = vadd.f32 %v1199, %v1499
        %v1501 = vpop.f32.mrb[0].mxu0
        %v1502 = vpop.f32.mrb[0].mxu0
        %v1503 = vadd.f32 %v1198, %v1502
        %v1504 = vpop.f32.mrb[0].mxu0
        %1505 = vmatprep.mubr.bf16.mxu0 %v633
        %1506 = vmatmul.mubr.bf16.gmra.mrb[0].mxu0 %v632
        %v1507 = vpop.f32.mrb[0].mxu0
        %v1508 = vadd.f32 %v1197, %v1507
        %v1509 = vpop.f32.mrb[0].mxu0
        %v1510 = vpop.f32.mrb[0].mxu0
        %v1511 = vadd.f32 %v1224, %v1510
        %v1512 = vpop.f32.mrb[0].mxu0
        %1513 = vdwg.mxu0
        %1514 = vmatprep.subr.bf16.mxu0 0
        %1515 = vmatpush1.bf16.msra.mxu0 %v1337
        %1516 = vmatprep.subr.bf16.mxu0 0
        %1517 = vmatpush1.bf16.msra.mxu0 %v1338
        %1518 = vmatprep.subr.bf16.mxu0 0
        %1519 = vmatpush1.bf16.msra.mxu0 %v1339
        %1520 = vmatprep.subr.bf16.mxu0 0
        %1521 = vmatpush1.bf16.msra.mxu0 %v1340
        %1522 = vmatprep.subr.bf16.mxu0 0
        %1523 = vmatpush1.bf16.msra.mxu0 %v1341
        %1524 = vmatprep.subr.bf16.mxu0 0
        %1525 = vmatpush1.bf16.msra.mxu0 %v1342
        %1526 = vmatprep.subr.bf16.mxu0 0
        %1527 = vmatpush1.bf16.msra.mxu0 %v1343
        %1528 = vmatprep.subr.bf16.mxu0 0
        %1529 = vmatpush1.bf16.msra.mxu0 %v1344
        %1530 = vmatprep.subr.bf16.mxu0 0
        %1531 = vmatpush1.bf16.msra.mxu0 0
        %1532 = vmatprep.subr.bf16.mxu0 0
        %1533 = vmatpush1.bf16.msra.mxu0 0
        %1534 = vmatprep.subr.bf16.mxu0 0
        %1535 = vmatpush1.bf16.msra.mxu0 0
        %1536 = vmatprep.subr.bf16.mxu0 0
        %1537 = vmatpush1.bf16.msra.mxu0 0
        %1538 = vmatprep.subr.bf16.mxu0 0
        %1539 = vmatpush1.bf16.msra.mxu0 0
        %1540 = vmatprep.subr.bf16.mxu0 0
        %1541 = vmatpush1.bf16.msra.mxu0 0
        %1542 = vmatprep.subr.bf16.mxu0 0
        %1543 = vmatpush1.bf16.msra.mxu0 0
        %1544 = vmatprep.subr.bf16.mxu0 0
        %1545 = vmatpush1.bf16.msra.mxu0 0
        %1546 = vmatprep.mubr.bf16.mxu0 0
        %1547 = vmatmul.mubr.bf16.gmra.mrb[0].mxu0 %v595
        %v1548 = vpop.f32.mrb[0].mxu0
        %v1549 = vadd.f32 %v1404, %v1548
        %v1550 = vpop.f32.mrb[0].mxu0
        %v1551 = vpop.f32.mrb[0].mxu0
        %v1552 = vadd.f32 %v1407, %v1551
        %v1553 = vpop.f32.mrb[0].mxu0
        %1554 = vmatprep.mubr.bf16.mxu0 0
        %1555 = vmatmul.mubr.bf16.gmra.mrb[0].mxu0 %v598
        %v1556 = vpop.f32.mrb[0].mxu0
        %v1557 = vadd.f32 %v1412, %v1556
        %v1558 = vpop.f32.mrb[0].mxu0
        %v1559 = vpop.f32.mrb[0].mxu0
        %v1560 = vadd.f32 %v1415, %v1559
        %v1561 = vpop.f32.mrb[0].mxu0
        %1562 = vmatprep.mubr.bf16.mxu0 0
        %1563 = vmatmul.mubr.bf16.gmra.mrb[0].mxu0 %v601
        %v1564 = vpop.f32.mrb[0].mxu0
        %v1565 = vadd.f32 %v1420, %v1564
        %v1566 = vpop.f32.mrb[0].mxu0
        %v1567 = vpop.f32.mrb[0].mxu0
        %v1568 = vadd.f32 %v1423, %v1567
        %v1569 = vpop.f32.mrb[0].mxu0
        %1570 = vmatprep.mubr.bf16.mxu0 0
        %1571 = vmatmul.mubr.bf16.gmra.mrb[0].mxu0 %v604
        %v1572 = vpop.f32.mrb[0].mxu0
        %v1573 = vadd.f32 %v1428, %v1572
        %v1574 = vpop.f32.mrb[0].mxu0
        %v1575 = vpop.f32.mrb[0].mxu0
        %v1576 = vadd.f32 %v1431, %v1575
        %v1577 = vpop.f32.mrb[0].mxu0
        %1578 = vmatprep.mubr.bf16.mxu0 0
        %1579 = vmatmul.mubr.bf16.gmra.mrb[0].mxu0 %v607
        %v1580 = vpop.f32.mrb[0].mxu0
        %v1581 = vadd.f32 %v1436, %v1580
        %v1582 = vpop.f32.mrb[0].mxu0
        %v1583 = vpop.f32.mrb[0].mxu0
        %v1584 = vadd.f32 %v1439, %v1583
        %v1585 = vpop.f32.mrb[0].mxu0
        %1586 = vmatprep.mubr.bf16.mxu0 0
        %1587 = vmatmul.mubr.bf16.gmra.mrb[0].mxu0 %v610
        %v1588 = vpop.f32.mrb[0].mxu0
        %v1589 = vadd.f32 %v1444, %v1588
        %v1590 = vpop.f32.mrb[0].mxu0
        %v1591 = vpop.f32.mrb[0].mxu0
        %v1592 = vadd.f32 %v1447, %v1591
        %v1593 = vpop.f32.mrb[0].mxu0
        %1594 = vmatprep.mubr.bf16.mxu0 0
        %1595 = vmatmul.mubr.bf16.gmra.mrb[0].mxu0 %v613
        %v1596 = vpop.f32.mrb[0].mxu0
        %v1597 = vadd.f32 %v1452, %v1596
        %v1598 = vpop.f32.mrb[0].mxu0
        %v1599 = vpop.f32.mrb[0].mxu0
        %v1600 = vadd.f32 %v1455, %v1599
        %v1601 = vpop.f32.mrb[0].mxu0
        %1602 = vmatprep.mubr.bf16.mxu0 0
        %1603 = vmatmul.mubr.bf16.gmra.mrb[0].mxu0 %v616
        %v1604 = vpop.f32.mrb[0].mxu0
        %v1605 = vadd.f32 %v1460, %v1604
        %v1606 = vpop.f32.mrb[0].mxu0
        %v1607 = vpop.f32.mrb[0].mxu0
        %v1608 = vadd.f32 %v1463, %v1607
        %v1609 = vpop.f32.mrb[0].mxu0
        %1610 = vmatprep.mubr.bf16.mxu0 0
        %1611 = vmatmul.mubr.bf16.gmra.mrb[0].mxu0 %v619
        %v1612 = vpop.f32.mrb[0].mxu0
        %v1613 = vadd.f32 %v1468, %v1612
        %v1614 = vpop.f32.mrb[0].mxu0
        %v1615 = vpop.f32.mrb[0].mxu0
        %v1616 = vadd.f32 %v1471, %v1615
        %v1617 = vpop.f32.mrb[0].mxu0
        %1618 = vmatprep.mubr.bf16.mxu0 0
        %1619 = vmatmul.mubr.bf16.gmra.mrb[0].mxu0 %v622
        %v1620 = vpop.f32.mrb[0].mxu0
        %v1621 = vadd.f32 %v1476, %v1620
        %v1622 = vpop.f32.mrb[0].mxu0
        %v1623 = vpop.f32.mrb[0].mxu0
        %v1624 = vadd.f32 %v1479, %v1623
        %v1625 = vpop.f32.mrb[0].mxu0
        %1626 = vmatprep.mubr.bf16.mxu0 0
        %1627 = vmatmul.mubr.bf16.gmra.mrb[0].mxu0 %v625
        %v1628 = vpop.f32.mrb[0].mxu0
        %v1629 = vadd.f32 %v1484, %v1628
        %v1630 = vpop.f32.mrb[0].mxu0
        %v1631 = vpop.f32.mrb[0].mxu0
        %v1632 = vadd.f32 %v1487, %v1631
        %v1633 = vpop.f32.mrb[0].mxu0
        %1634 = vmatprep.mubr.bf16.mxu0 0
        %1635 = vmatmul.mubr.bf16.gmra.mrb[0].mxu0 %v628
        %v1636 = vpop.f32.mrb[0].mxu0
        %v1637 = vadd.f32 %v1492, %v1636
        %v1638 = vpop.f32.mrb[0].mxu0
        %v1639 = vpop.f32.mrb[0].mxu0
        %v1640 = vadd.f32 %v1495, %v1639
        %v1641 = vpop.f32.mrb[0].mxu0
        %1642 = vmatprep.mubr.bf16.mxu0 0
        %1643 = vmatmul.mubr.bf16.gmra.mrb[0].mxu0 %v631
        %v1644 = vpop.f32.mrb[0].mxu0
        %v1645 = vadd.f32 %v1500, %v1644
        %v1646 = vpop.f32.mrb[0].mxu0
        %v1647 = vpop.f32.mrb[0].mxu0
        %v1648 = vadd.f32 %v1503, %v1647
        %v1649 = vpop.f32.mrb[0].mxu0
        %1650 = vmatprep.mubr.bf16.mxu0 0
        %1651 = vmatmul.mubr.bf16.gmra.mrb[0].mxu0 %v634
        %v1652 = vpop.f32.mrb[0].mxu0
        %v1653 = vadd.f32 %v1508, %v1652
        %v1654 = vpop.f32.mrb[0].mxu0
        %v1655 = vpop.f32.mrb[0].mxu0
        %v1656 = vadd.f32 %v1511, %v1655
        %v1657 = vpop.f32.mrb[0].mxu0
        %1658 = vdwg.mxu0
        %s1659 = scalar_lea.vmem [#allocation6], 384
        %v1660 = vld [vmem:[%s1659] sm:$0xf]
        %v1661 = vld [vmem:[%s1659 + $0x4] sm:$0xf]
        %v1662 = vld [vmem:[%s1659 + $0x8] sm:$0xf]
        %v1663 = vld [vmem:[%s1659 + $0xc] sm:$0xf]
        %v1664 = vld [vmem:[%s1659 + $0x10] sm:$0xf]
        %v1665 = vld [vmem:[%s1659 + $0x14] sm:$0xf]
        %v1666 = vld [vmem:[%s1659 + $0x18] sm:$0xf]
        %v1667 = vld [vmem:[%s1659 + $0x1c] sm:$0xf]
        %v1668 = vld [vmem:[%s1659 + $0x20] sm:$0xf]
        %v1669 = vld [vmem:[%s1659 + $0x24] sm:$0xf]
        %v1670 = vld [vmem:[%s1659 + $0x28] sm:$0xf]
        %v1671 = vld [vmem:[%s1659 + $0x2c] sm:$0xf]
        %v1672 = vld [vmem:[%s1659 + $0x30] sm:$0xf]
        %v1673 = vld [vmem:[%s1659 + $0x34] sm:$0xf]
        %v1674 = vld [vmem:[%s1659 + $0x38] sm:$0xf]
        %v1675 = vld [vmem:[%s1659 + $0x3c] sm:$0xf]
        %v1676 = vld [vmem:[%s1659 + $0x40] sm:$0xf]
        %v1677 = vld [vmem:[%s1659 + $0x44] sm:$0xf]
        %v1678 = vld [vmem:[%s1659 + $0x48] sm:$0xf]
        %v1679 = vld [vmem:[%s1659 + $0x4c] sm:$0xf]
        %v1680 = vld [vmem:[%s1659 + $0x50] sm:$0xf]
        %v1681 = vld [vmem:[%s1659 + $0x54] sm:$0xf]
        %v1682 = vld [vmem:[%s1659 + $0x58] sm:$0xf]
        %v1683 = vld [vmem:[%s1659 + $0x5c] sm:$0xf]
        %v1684 = vld [vmem:[%s1659 + $0x60] sm:$0xf]
        %v1685 = vld [vmem:[%s1659 + $0x64] sm:$0xf]
        %v1686 = vld [vmem:[%s1659 + $0x68] sm:$0xf]
        %v1687 = vld [vmem:[%s1659 + $0x6c] sm:$0xf]
        %v1688 = vld [vmem:[%s1659 + $0x70] sm:$0xf]
        %v1689 = vld [vmem:[%s1659 + $0x74] sm:$0xf]
        %v1690 = vld [vmem:[%s1659 + $0x78] sm:$0xf]
        %v1691 = vld [vmem:[%s1659 + $0x7c] sm:$0xf]
        %v1692 = vld [vmem:[%s1659 + $0x80] sm:$0xf]
        %v1693 = vld [vmem:[%s1659 + $0x84] sm:$0xf]
        %v1694 = vld [vmem:[%s1659 + $0x88] sm:$0xf]
        %v1695 = vld [vmem:[%s1659 + $0x8c] sm:$0xf]
        %v1696 = vld [vmem:[%s1659 + $0x90] sm:$0xf]
        %v1697 = vld [vmem:[%s1659 + $0x94] sm:$0xf]
        %v1698 = vld [vmem:[%s1659 + $0x98] sm:$0xf]
        %v1699 = vld [vmem:[%s1659 + $0x9c] sm:$0xf]
        %v1700 = vld [vmem:[%s1659 + $0xa0] sm:$0xf]
        %v1701 = vld [vmem:[%s1659 + $0xa4] sm:$0xf]
        %v1702 = vld [vmem:[%s1659 + $0xa8] sm:$0xf]
        %v1703 = vld [vmem:[%s1659 + $0xac] sm:$0xf]
        %v1704 = vld [vmem:[%s1659 + $0xb0] sm:$0xf]
        %v1705 = vld [vmem:[%s1659 + $0xb4] sm:$0xf]
        %v1706 = vld [vmem:[%s1659 + $0xb8] sm:$0xf]
        %v1707 = vld [vmem:[%s1659 + $0xbc] sm:$0xf]
        %v1756 = vunpack.c.l.b16 %v1660
        %v1757 = vunpack.c.l.b16 %v1661
        %v1758 = vunpack.c.l.b16 %v1662
        %v1759 = vunpack.c.l.b16 %v1663
        %v1760 = vunpack.c.l.b16 %v1664
        %v1761 = vunpack.c.l.b16 %v1665
        %v1762 = vunpack.c.l.b16 %v1666
        %v1763 = vunpack.c.l.b16 %v1667
        %v1764 = vunpack.c.l.b16 %v1668
        %v1765 = vunpack.c.l.b16 %v1669
        %v1766 = vunpack.c.l.b16 %v1670
        %v1767 = vunpack.c.l.b16 %v1671
        %v1768 = vunpack.c.l.b16 %v1672
        %v1769 = vunpack.c.l.b16 %v1673
        %v1770 = vunpack.c.l.b16 %v1674
        %v1771 = vunpack.c.l.b16 %v1675
        %v1772 = vunpack.c.l.b16 %v1676
        %v1773 = vunpack.c.l.b16 %v1677
        %v1774 = vunpack.c.l.b16 %v1678
        %v1775 = vunpack.c.l.b16 %v1679
        %v1776 = vunpack.c.l.b16 %v1680
        %v1777 = vunpack.c.l.b16 %v1681
        %v1778 = vunpack.c.l.b16 %v1682
        %v1779 = vunpack.c.l.b16 %v1683
        %v1780 = vunpack.c.l.b16 %v1684
        %v1781 = vunpack.c.l.b16 %v1685
        %v1782 = vunpack.c.l.b16 %v1686
        %v1783 = vunpack.c.l.b16 %v1687
        %v1784 = vunpack.c.l.b16 %v1688
        %v1785 = vunpack.c.l.b16 %v1689
        %v1786 = vunpack.c.l.b16 %v1690
        %v1787 = vunpack.c.l.b16 %v1691
        %v1788 = vunpack.c.l.b16 %v1692
        %v1789 = vunpack.c.l.b16 %v1693
        %v1790 = vunpack.c.l.b16 %v1694
        %v1791 = vunpack.c.l.b16 %v1695
        %v1792 = vunpack.c.l.b16 %v1696
        %v1793 = vunpack.c.l.b16 %v1697
        %v1794 = vunpack.c.l.b16 %v1698
        %v1795 = vunpack.c.l.b16 %v1699
        %v1796 = vunpack.c.l.b16 %v1700
        %v1797 = vunpack.c.l.b16 %v1701
        %v1798 = vunpack.c.l.b16 %v1702
        %v1799 = vunpack.c.l.b16 %v1703
        %v1800 = vunpack.c.l.b16 %v1704
        %v1801 = vunpack.c.l.b16 %v1705
        %v1802 = vunpack.c.l.b16 %v1706
        %v1803 = vunpack.c.l.b16 %v1707
        %v1804 = vpack.c.b16 %v1757, %v1756
        %v1805 = vpack.c.b16 %v1759, %v1758
        %v1806 = vpack.c.b16 %v1761, %v1760
        %v1807 = vpack.c.b16 %v1763, %v1762
        %v1808 = vpack.c.b16 %v1765, %v1764
        %v1809 = vpack.c.b16 %v1767, %v1766
        %v1810 = vpack.c.b16 %v1769, %v1768
        %v1811 = vpack.c.b16 %v1771, %v1770
        %v1812 = vpack.c.b16 %v1773, %v1772
        %v1813 = vpack.c.b16 %v1775, %v1774
        %v1814 = vpack.c.b16 %v1777, %v1776
        %v1815 = vpack.c.b16 %v1779, %v1778
        %v1816 = vpack.c.b16 %v1781, %v1780
        %v1817 = vpack.c.b16 %v1783, %v1782
        %v1818 = vpack.c.b16 %v1785, %v1784
        %v1819 = vpack.c.b16 %v1787, %v1786
        %v1820 = vpack.c.b16 %v1789, %v1788
        %v1821 = vpack.c.b16 %v1791, %v1790
        %v1822 = vpack.c.b16 %v1793, %v1792
        %v1823 = vpack.c.b16 %v1795, %v1794
        %v1824 = vpack.c.b16 %v1797, %v1796
        %v1825 = vpack.c.b16 %v1799, %v1798
        %v1826 = vpack.c.b16 %v1801, %v1800
        %v1827 = vpack.c.b16 %v1803, %v1802
        %1852 = vmatprep.subr.bf16.mxu0 0
        %1853 = vmatpush1.bf16.msra.mxu0 %v1804
        %1854 = vmatprep.subr.bf16.mxu0 0
        %1855 = vmatpush1.bf16.msra.mxu0 %v1805
        %1856 = vmatprep.subr.bf16.mxu0 0
        %1857 = vmatpush1.bf16.msra.mxu0 %v1806
        %1858 = vmatprep.subr.bf16.mxu0 0
        %1859 = vmatpush1.bf16.msra.mxu0 %v1807
        %1860 = vmatprep.subr.bf16.mxu0 0
        %1861 = vmatpush1.bf16.msra.mxu0 %v1808
        %1862 = vmatprep.subr.bf16.mxu0 0
        %1863 = vmatpush1.bf16.msra.mxu0 %v1809
        %1864 = vmatprep.subr.bf16.mxu0 0
        %1865 = vmatpush1.bf16.msra.mxu0 %v1810
        %1866 = vmatprep.subr.bf16.mxu0 0
        %1867 = vmatpush1.bf16.msra.mxu0 %v1811
        %1868 = vmatprep.subr.bf16.mxu0 0
        %1869 = vmatpush1.bf16.msra.mxu0 %v1812
        %1870 = vmatprep.subr.bf16.mxu0 0
        %1871 = vmatpush1.bf16.msra.mxu0 %v1813
        %1872 = vmatprep.subr.bf16.mxu0 0
        %1873 = vmatpush1.bf16.msra.mxu0 %v1814
        %1874 = vmatprep.subr.bf16.mxu0 0
        %1875 = vmatpush1.bf16.msra.mxu0 %v1815
        %1876 = vmatprep.subr.bf16.mxu0 0
        %1877 = vmatpush1.bf16.msra.mxu0 %v1816
        %1878 = vmatprep.subr.bf16.mxu0 0
        %1879 = vmatpush1.bf16.msra.mxu0 %v1817
        %1880 = vmatprep.subr.bf16.mxu0 0
        %1881 = vmatpush1.bf16.msra.mxu0 %v1818
        %1882 = vmatprep.subr.bf16.mxu0 0
        %1883 = vmatpush1.bf16.msra.mxu0 %v1819
        %1884 = vmatprep.mubr.bf16.mxu0 %v594
        %1885 = vmatmul.mubr.bf16.gmra.mrb[0].mxu0 %v593
        %v1886 = vpop.f32.mrb[0].mxu0
        %v1887 = vadd.f32 0.0, %v1886
        %v1888 = vpop.f32.mrb[0].mxu0
        %v1889 = vpop.f32.mrb[0].mxu0
        %v1890 = vadd.f32 0.0, %v1889
        %v1891 = vpop.f32.mrb[0].mxu0
        %1892 = vmatprep.mubr.bf16.mxu0 %v597
        %1893 = vmatmul.mubr.bf16.gmra.mrb[0].mxu0 %v596
        %v1894 = vpop.f32.mrb[0].mxu0
        %v1895 = vadd.f32 0.0, %v1894
        %v1896 = vpop.f32.mrb[0].mxu0
        %v1897 = vpop.f32.mrb[0].mxu0
        %v1898 = vadd.f32 0.0, %v1897
        %v1899 = vpop.f32.mrb[0].mxu0
        %1900 = vmatprep.mubr.bf16.mxu0 %v600
        %1901 = vmatmul.mubr.bf16.gmra.mrb[0].mxu0 %v599
        %v1902 = vpop.f32.mrb[0].mxu0
        %v1903 = vadd.f32 0.0, %v1902
        %v1904 = vpop.f32.mrb[0].mxu0
        %v1905 = vpop.f32.mrb[0].mxu0
        %v1906 = vadd.f32 0.0, %v1905
        %v1907 = vpop.f32.mrb[0].mxu0
        %1908 = vmatprep.mubr.bf16.mxu0 %v603
        %1909 = vmatmul.mubr.bf16.gmra.mrb[0].mxu0 %v602
        %v1910 = vpop.f32.mrb[0].mxu0
        %v1911 = vadd.f32 0.0, %v1910
        %v1912 = vpop.f32.mrb[0].mxu0
        %v1913 = vpop.f32.mrb[0].mxu0
        %v1914 = vadd.f32 0.0, %v1913
        %v1915 = vpop.f32.mrb[0].mxu0
        %1916 = vmatprep.mubr.bf16.mxu0 %v606
        %1917 = vmatmul.mubr.bf16.gmra.mrb[0].mxu0 %v605
        %v1918 = vpop.f32.mrb[0].mxu0
        %v1919 = vadd.f32 0.0, %v1918
        %v1920 = vpop.f32.mrb[0].mxu0
        %v1921 = vpop.f32.mrb[0].mxu0
        %v1922 = vadd.f32 0.0, %v1921
        %v1923 = vpop.f32.mrb[0].mxu0
        %1924 = vmatprep.mubr.bf16.mxu0 %v609
        %1925 = vmatmul.mubr.bf16.gmra.mrb[0].mxu0 %v608
        %v1926 = vpop.f32.mrb[0].mxu0
        %v1927 = vadd.f32 0.0, %v1926
        %v1928 = vpop.f32.mrb[0].mxu0
        %v1929 = vpop.f32.mrb[0].mxu0
        %v1930 = vadd.f32 0.0, %v1929
        %v1931 = vpop.f32.mrb[0].mxu0
        %1932 = vmatprep.mubr.bf16.mxu0 %v612
        %1933 = vmatmul.mubr.bf16.gmra.mrb[0].mxu0 %v611
        %v1934 = vpop.f32.mrb[0].mxu0
        %v1935 = vadd.f32 0.0, %v1934
        %v1936 = vpop.f32.mrb[0].mxu0
        %v1937 = vpop.f32.mrb[0].mxu0
        %v1938 = vadd.f32 0.0, %v1937
        %v1939 = vpop.f32.mrb[0].mxu0
        %1940 = vmatprep.mubr.bf16.mxu0 %v615
        %1941 = vmatmul.mubr.bf16.gmra.mrb[0].mxu0 %v614
        %v1942 = vpop.f32.mrb[0].mxu0
        %v1943 = vadd.f32 0.0, %v1942
        %v1944 = vpop.f32.mrb[0].mxu0
        %v1945 = vpop.f32.mrb[0].mxu0
        %v1946 = vadd.f32 0.0, %v1945
        %v1947 = vpop.f32.mrb[0].mxu0
        %1948 = vmatprep.mubr.bf16.mxu0 %v618
        %1949 = vmatmul.mubr.bf16.gmra.mrb[0].mxu0 %v617
        %v1950 = vpop.f32.mrb[0].mxu0
        %v1951 = vadd.f32 0.0, %v1950
        %v1952 = vpop.f32.mrb[0].mxu0
        %v1953 = vpop.f32.mrb[0].mxu0
        %v1954 = vadd.f32 0.0, %v1953
        %v1955 = vpop.f32.mrb[0].mxu0
        %1956 = vmatprep.mubr.bf16.mxu0 %v621
        %1957 = vmatmul.mubr.bf16.gmra.mrb[0].mxu0 %v620
        %v1958 = vpop.f32.mrb[0].mxu0
        %v1959 = vadd.f32 0.0, %v1958
        %v1960 = vpop.f32.mrb[0].mxu0
        %v1961 = vpop.f32.mrb[0].mxu0
        %v1962 = vadd.f32 0.0, %v1961
        %v1963 = vpop.f32.mrb[0].mxu0
        %1964 = vmatprep.mubr.bf16.mxu0 %v624
        %1965 = vmatmul.mubr.bf16.gmra.mrb[0].mxu0 %v623
        %v1966 = vpop.f32.mrb[0].mxu0
        %v1967 = vadd.f32 0.0, %v1966
        %v1968 = vpop.f32.mrb[0].mxu0
        %v1969 = vpop.f32.mrb[0].mxu0
        %v1970 = vadd.f32 0.0, %v1969
        %v1971 = vpop.f32.mrb[0].mxu0
        %1972 = vmatprep.mubr.bf16.mxu0 %v627
        %1973 = vmatmul.mubr.bf16.gmra.mrb[0].mxu0 %v626
        %v1974 = vpop.f32.mrb[0].mxu0
        %v1975 = vadd.f32 0.0, %v1974
        %v1976 = vpop.f32.mrb[0].mxu0
        %v1977 = vpop.f32.mrb[0].mxu0
        %v1978 = vadd.f32 0.0, %v1977
        %v1979 = vpop.f32.mrb[0].mxu0
        %1980 = vmatprep.mubr.bf16.mxu0 %v630
        %1981 = vmatmul.mubr.bf16.gmra.mrb[0].mxu0 %v629
        %v1982 = vpop.f32.mrb[0].mxu0
        %v1983 = vadd.f32 0.0, %v1982
        %v1984 = vpop.f32.mrb[0].mxu0
        %v1985 = vpop.f32.mrb[0].mxu0
        %v1986 = vadd.f32 0.0, %v1985
        %v1987 = vpop.f32.mrb[0].mxu0
        %1988 = vmatprep.mubr.bf16.mxu0 %v633
        %1989 = vmatmul.mubr.bf16.gmra.mrb[0].mxu0 %v632
        %v1990 = vpop.f32.mrb[0].mxu0
        %v1991 = vadd.f32 0.0, %v1990
        %v1992 = vpop.f32.mrb[0].mxu0
        %v1993 = vpop.f32.mrb[0].mxu0
        %v1994 = vadd.f32 0.0, %v1993
        %v1995 = vpop.f32.mrb[0].mxu0
        %1996 = vdwg.mxu0
        %1997 = vmatprep.subr.bf16.mxu0 0
        %1998 = vmatpush1.bf16.msra.mxu0 %v1820
        %1999 = vmatprep.subr.bf16.mxu0 0
        %2000 = vmatpush1.bf16.msra.mxu0 %v1821
        %2001 = vmatprep.subr.bf16.mxu0 0
        %2002 = vmatpush1.bf16.msra.mxu0 %v1822
        %2003 = vmatprep.subr.bf16.mxu0 0
        %2004 = vmatpush1.bf16.msra.mxu0 %v1823
        %2005 = vmatprep.subr.bf16.mxu0 0
        %2006 = vmatpush1.bf16.msra.mxu0 %v1824
        %2007 = vmatprep.subr.bf16.mxu0 0
        %2008 = vmatpush1.bf16.msra.mxu0 %v1825
        %2009 = vmatprep.subr.bf16.mxu0 0
        %2010 = vmatpush1.bf16.msra.mxu0 %v1826
        %2011 = vmatprep.subr.bf16.mxu0 0
        %2012 = vmatpush1.bf16.msra.mxu0 %v1827
        %2013 = vmatprep.subr.bf16.mxu0 0
        %2014 = vmatpush1.bf16.msra.mxu0 0
        %2015 = vmatprep.subr.bf16.mxu0 0
        %2016 = vmatpush1.bf16.msra.mxu0 0
        %2017 = vmatprep.subr.bf16.mxu0 0
        %2018 = vmatpush1.bf16.msra.mxu0 0
        %2019 = vmatprep.subr.bf16.mxu0 0
        %2020 = vmatpush1.bf16.msra.mxu0 0
        %2021 = vmatprep.subr.bf16.mxu0 0
        %2022 = vmatpush1.bf16.msra.mxu0 0
        %2023 = vmatprep.subr.bf16.mxu0 0
        %2024 = vmatpush1.bf16.msra.mxu0 0
        %2025 = vmatprep.subr.bf16.mxu0 0
        %2026 = vmatpush1.bf16.msra.mxu0 0
        %2027 = vmatprep.subr.bf16.mxu0 0
        %2028 = vmatpush1.bf16.msra.mxu0 0
        %2029 = vmatprep.mubr.bf16.mxu0 0
        %2030 = vmatmul.mubr.bf16.gmra.mrb[0].mxu0 %v595
        %v2031 = vpop.f32.mrb[0].mxu0
        %v2032 = vadd.f32 %v1887, %v2031
        %v2033 = vpop.f32.mrb[0].mxu0
        %v2034 = vpop.f32.mrb[0].mxu0
        %v2035 = vadd.f32 %v1890, %v2034
        %v2036 = vpop.f32.mrb[0].mxu0
        %2037 = vmatprep.mubr.bf16.mxu0 0
        %2038 = vmatmul.mubr.bf16.gmra.mrb[0].mxu0 %v598
        %v2039 = vpop.f32.mrb[0].mxu0
        %v2040 = vadd.f32 %v1895, %v2039
        %v2041 = vpop.f32.mrb[0].mxu0
        %v2042 = vpop.f32.mrb[0].mxu0
        %v2043 = vadd.f32 %v1898, %v2042
        %v2044 = vpop.f32.mrb[0].mxu0
        %2045 = vmatprep.mubr.bf16.mxu0 0
        %2046 = vmatmul.mubr.bf16.gmra.mrb[0].mxu0 %v601
        %v2047 = vpop.f32.mrb[0].mxu0
        %v2048 = vadd.f32 %v1903, %v2047
        %v2049 = vpop.f32.mrb[0].mxu0
        %v2050 = vpop.f32.mrb[0].mxu0
        %v2051 = vadd.f32 %v1906, %v2050
        %v2052 = vpop.f32.mrb[0].mxu0
        %2053 = vmatprep.mubr.bf16.mxu0 0
        %2054 = vmatmul.mubr.bf16.gmra.mrb[0].mxu0 %v604
        %v2055 = vpop.f32.mrb[0].mxu0
        %v2056 = vadd.f32 %v1911, %v2055
        %v2057 = vpop.f32.mrb[0].mxu0
        %v2058 = vpop.f32.mrb[0].mxu0
        %v2059 = vadd.f32 %v1914, %v2058
        %v2060 = vpop.f32.mrb[0].mxu0
        %2061 = vmatprep.mubr.bf16.mxu0 0
        %2062 = vmatmul.mubr.bf16.gmra.mrb[0].mxu0 %v607
        %v2063 = vpop.f32.mrb[0].mxu0
        %v2064 = vadd.f32 %v1919, %v2063
        %v2065 = vpop.f32.mrb[0].mxu0
        %v2066 = vpop.f32.mrb[0].mxu0
        %v2067 = vadd.f32 %v1922, %v2066
        %v2068 = vpop.f32.mrb[0].mxu0
        %2069 = vmatprep.mubr.bf16.mxu0 0
        %2070 = vmatmul.mubr.bf16.gmra.mrb[0].mxu0 %v610
        %v2071 = vpop.f32.mrb[0].mxu0
        %v2072 = vadd.f32 %v1927, %v2071
        %v2073 = vpop.f32.mrb[0].mxu0
        %v2074 = vpop.f32.mrb[0].mxu0
        %v2075 = vadd.f32 %v1930, %v2074
        %v2076 = vpop.f32.mrb[0].mxu0
        %2077 = vmatprep.mubr.bf16.mxu0 0
        %2078 = vmatmul.mubr.bf16.gmra.mrb[0].mxu0 %v613
        %v2079 = vpop.f32.mrb[0].mxu0
        %v2080 = vadd.f32 %v1935, %v2079
        %v2081 = vpop.f32.mrb[0].mxu0
        %v2082 = vpop.f32.mrb[0].mxu0
        %v2083 = vadd.f32 %v1938, %v2082
        %v2084 = vpop.f32.mrb[0].mxu0
        %2085 = vmatprep.mubr.bf16.mxu0 0
        %2086 = vmatmul.mubr.bf16.gmra.mrb[0].mxu0 %v616
        %v2087 = vpop.f32.mrb[0].mxu0
        %v2088 = vadd.f32 %v1943, %v2087
        %v2089 = vpop.f32.mrb[0].mxu0
        %v2090 = vpop.f32.mrb[0].mxu0
        %v2091 = vadd.f32 %v1946, %v2090
        %v2092 = vpop.f32.mrb[0].mxu0
        %2093 = vmatprep.mubr.bf16.mxu0 0
        %2094 = vmatmul.mubr.bf16.gmra.mrb[0].mxu0 %v619
        %v2095 = vpop.f32.mrb[0].mxu0
        %v2096 = vadd.f32 %v1951, %v2095
        %v2097 = vpop.f32.mrb[0].mxu0
        %v2098 = vpop.f32.mrb[0].mxu0
        %v2099 = vadd.f32 %v1954, %v2098
        %v2100 = vpop.f32.mrb[0].mxu0
        %2101 = vmatprep.mubr.bf16.mxu0 0
        %2102 = vmatmul.mubr.bf16.gmra.mrb[0].mxu0 %v622
        %v2103 = vpop.f32.mrb[0].mxu0
        %v2104 = vadd.f32 %v1959, %v2103
        %v2105 = vpop.f32.mrb[0].mxu0
        %v2106 = vpop.f32.mrb[0].mxu0
        %v2107 = vadd.f32 %v1962, %v2106
        %v2108 = vpop.f32.mrb[0].mxu0
        %2109 = vmatprep.mubr.bf16.mxu0 0
        %2110 = vmatmul.mubr.bf16.gmra.mrb[0].mxu0 %v625
        %v2111 = vpop.f32.mrb[0].mxu0
        %v2112 = vadd.f32 %v1967, %v2111
        %v2113 = vpop.f32.mrb[0].mxu0
        %v2114 = vpop.f32.mrb[0].mxu0
        %v2115 = vadd.f32 %v1970, %v2114
        %v2116 = vpop.f32.mrb[0].mxu0
        %2117 = vmatprep.mubr.bf16.mxu0 0
        %2118 = vmatmul.mubr.bf16.gmra.mrb[0].mxu0 %v628
        %v2119 = vpop.f32.mrb[0].mxu0
        %v2120 = vadd.f32 %v1975, %v2119
        %v2121 = vpop.f32.mrb[0].mxu0
        %v2122 = vpop.f32.mrb[0].mxu0
        %v2123 = vadd.f32 %v1978, %v2122
        %v2124 = vpop.f32.mrb[0].mxu0
        %2125 = vmatprep.mubr.bf16.mxu0 0
        %2126 = vmatmul.mubr.bf16.gmra.mrb[0].mxu0 %v631
        %v2127 = vpop.f32.mrb[0].mxu0
        %v2128 = vadd.f32 %v1983, %v2127
        %v2129 = vpop.f32.mrb[0].mxu0
        %v2130 = vpop.f32.mrb[0].mxu0
        %v2131 = vadd.f32 %v1986, %v2130
        %v2132 = vpop.f32.mrb[0].mxu0
        %2133 = vmatprep.mubr.bf16.mxu0 0
        %2134 = vmatmul.mubr.bf16.gmra.mrb[0].mxu0 %v634
        %v2135 = vpop.f32.mrb[0].mxu0
        %v2136 = vadd.f32 %v1991, %v2135
        %v2137 = vpop.f32.mrb[0].mxu0
        %v2138 = vpop.f32.mrb[0].mxu0
        %v2139 = vadd.f32 %v1994, %v2138
        %v2140 = vpop.f32.mrb[0].mxu0
        %2141 = vdwg.mxu0
        %v2142 = vrot.slane %v2032, 2
        %v2143 = vrot.slane %v2035, 2
        %v2144 = vrot.slane %v2040, 2
        %v2145 = vrot.slane %v2043, 2
        %v2146 = vrot.slane %v2048, 2
        %v2147 = vrot.slane %v2051, 2
        %v2148 = vrot.slane %v2056, 2
        %v2149 = vrot.slane %v2059, 2
        %v2150 = vrot.slane %v2064, 2
        %v2151 = vrot.slane %v2067, 2
        %v2152 = vrot.slane %v2072, 2
        %v2153 = vrot.slane %v2075, 2
        %v2154 = vrot.slane %v2080, 2
        %v2155 = vrot.slane %v2083, 2
        %v2156 = vrot.slane %v2088, 2
        %v2157 = vrot.slane %v2091, 2
        %v2158 = vrot.slane %v2096, 2
        %v2159 = vrot.slane %v2099, 2
        %v2160 = vrot.slane %v2104, 2
        %v2161 = vrot.slane %v2107, 2
        %v2162 = vrot.slane %v2112, 2
        %v2163 = vrot.slane %v2115, 2
        %v2164 = vrot.slane %v2120, 2
        %v2165 = vrot.slane %v2123, 2
        %v2166 = vrot.slane %v2128, 2
        %v2167 = vrot.slane %v2131, 2
        %v2168 = vrot.slane %v2136, 2
        %v2169 = vrot.slane %v2139, 2
        %vm2170 = vcmp.lt.s32.totalorder %v1195, 6
        %v2171 = vsel %vm2170, %v2168, %v2169
        %v2172 = vsel %vm2170, %v2167, %v2168
        %v2173 = vsel %vm2170, %v2166, %v2167
        %v2174 = vsel %vm2170, %v2165, %v2166
        %v2175 = vsel %vm2170, %v2164, %v2165
        %v2176 = vsel %vm2170, %v2163, %v2164
        %v2177 = vsel %vm2170, %v2162, %v2163
        %v2178 = vsel %vm2170, %v2161, %v2162
        %v2179 = vsel %vm2170, %v2160, %v2161
        %v2180 = vsel %vm2170, %v2159, %v2160
        %v2181 = vsel %vm2170, %v2158, %v2159
        %v2182 = vsel %vm2170, %v2157, %v2158
        %v2183 = vsel %vm2170, %v2156, %v2157
        %v2184 = vsel %vm2170, %v2155, %v2156
        %v2185 = vsel %vm2170, %v2154, %v2155
        %v2186 = vsel %vm2170, %v2153, %v2154
        %v2187 = vsel %vm2170, %v2152, %v2153
        %v2188 = vsel %vm2170, %v2151, %v2152
        %v2189 = vsel %vm2170, %v2150, %v2151
        %v2190 = vsel %vm2170, %v2149, %v2150
        %v2191 = vsel %vm2170, %v2148, %v2149
        %v2192 = vsel %vm2170, %v2147, %v2148
        %v2193 = vsel %vm2170, %v2146, %v2147
        %v2194 = vsel %vm2170, %v2145, %v2146
        %v2195 = vsel %vm2170, %v2144, %v2145
        %v2196 = vsel %vm2170, %v2143, %v2144
        %v2197 = vsel %vm2170, %v2142, %v2143
        %v2198 = vsel %vm2170, %v2169, %v2142
        %v2199 = vadd.f32 %v1549, %v2197
        %v2200 = vadd.f32 %v1552, %v2196
        %v2201 = vadd.f32 %v1557, %v2195
        %v2202 = vadd.f32 %v1560, %v2194
        %v2203 = vadd.f32 %v1565, %v2193
        %v2204 = vadd.f32 %v1568, %v2192
        %v2205 = vadd.f32 %v1573, %v2191
        %v2206 = vadd.f32 %v1576, %v2190
        %v2207 = vadd.f32 %v1581, %v2189
        %v2208 = vadd.f32 %v1584, %v2188
        %v2209 = vadd.f32 %v1589, %v2187
        %v2210 = vadd.f32 %v1592, %v2186
        %v2211 = vadd.f32 %v1597, %v2185
        %v2212 = vadd.f32 %v1600, %v2184
        %v2213 = vadd.f32 %v1605, %v2183
        %v2214 = vadd.f32 %v1608, %v2182
        %v2215 = vadd.f32 %v1613, %v2181
        %v2216 = vadd.f32 %v1616, %v2180
        %v2217 = vadd.f32 %v1621, %v2179
        %v2218 = vadd.f32 %v1624, %v2178
        %v2219 = vadd.f32 %v1629, %v2177
        %v2220 = vadd.f32 %v1632, %v2176
        %v2221 = vadd.f32 %v1637, %v2175
        %v2222 = vadd.f32 %v1640, %v2174
        %v2223 = vadd.f32 %v1645, %v2173
        %v2224 = vadd.f32 %v1648, %v2172
        %v2225 = vadd.f32 %v1653, %v2171
        %v2226 = vadd.f32 %v1656, %v2198
        %v2227 = vld [vmem:[%s2] sm:$0x1]
        %v2229 = vlaneseq
        %v2230 = vshrl.u32 %v2229, 7
        %v2231 = vsub.s32 0, %v2230
        %v2232 = vrot.slane %v2227, %v2231
        %v2234 = vadd.f32 %v2199, %v2232
        %v2235 = vadd.f32 %v2200, %v2232
        %v2236 = vadd.f32 %v2201, %v2232
        %v2237 = vadd.f32 %v2202, %v2232
        %v2238 = vadd.f32 %v2203, %v2232
        %v2239 = vadd.f32 %v2204, %v2232
        %v2240 = vadd.f32 %v2205, %v2232
        %v2241 = vadd.f32 %v2206, %v2232
        %v2242 = vadd.f32 %v2207, %v2232
        %v2243 = vadd.f32 %v2208, %v2232
        %v2244 = vadd.f32 %v2209, %v2232
        %v2245 = vadd.f32 %v2210, %v2232
        %v2246 = vadd.f32 %v2211, %v2232
        %v2247 = vadd.f32 %v2212, %v2232
        %v2248 = vadd.f32 %v2213, %v2232
        %v2249 = vadd.f32 %v2214, %v2232
        %v2250 = vadd.f32 %v2215, %v2232
        %v2251 = vadd.f32 %v2216, %v2232
        %v2252 = vadd.f32 %v2217, %v2232
        %v2253 = vadd.f32 %v2218, %v2232
        %v2254 = vadd.f32 %v2219, %v2232
        %v2255 = vadd.f32 %v2220, %v2232
        %v2256 = vadd.f32 %v2221, %v2232
        %v2257 = vadd.f32 %v2222, %v2232
        %v2258 = vadd.f32 %v2223, %v2232
        %v2259 = vadd.f32 %v2224, %v2232
        %v2260 = vadd.f32 %v2225, %v2232
        %v2261 = vadd.f32 %v2226, %v2232
        %2262 = vst [vmem:[%s200] sm:$0xff] %v2234
        %2263 = vst [vmem:[%s200 + $0x8] sm:$0xff] %v2235
        %2264 = vst [vmem:[%s200 + $0x10] sm:$0xff] %v2236
        %2265 = vst [vmem:[%s200 + $0x18] sm:$0xff] %v2237
        %2266 = vst [vmem:[%s200 + $0x20] sm:$0xff] %v2238
        %2267 = vst [vmem:[%s200 + $0x28] sm:$0xff] %v2239
        %2268 = vst [vmem:[%s200 + $0x30] sm:$0xff] %v2240
        %2269 = vst [vmem:[%s200 + $0x38] sm:$0xff] %v2241
        %2270 = vst [vmem:[%s200 + $0x40] sm:$0xff] %v2242
        %2271 = vst [vmem:[%s200 + $0x48] sm:$0xff] %v2243
        %2272 = vst [vmem:[%s200 + $0x50] sm:$0xff] %v2244
        %2273 = vst [vmem:[%s200 + $0x58] sm:$0xff] %v2245
        %2274 = vst [vmem:[%s200 + $0x60] sm:$0xff] %v2246
        %2275 = vst [vmem:[%s200 + $0x68] sm:$0xff] %v2247
        %2276 = vst [vmem:[%s200 + $0x70] sm:$0xff] %v2248
        %2277 = vst [vmem:[%s200 + $0x78] sm:$0xff] %v2249
        %2278 = vst [vmem:[%s200 + $0x80] sm:$0xff] %v2250
        %2279 = vst [vmem:[%s200 + $0x88] sm:$0xff] %v2251
        %2280 = vst [vmem:[%s200 + $0x90] sm:$0xff] %v2252
        %2281 = vst [vmem:[%s200 + $0x98] sm:$0xff] %v2253
        %2282 = vst [vmem:[%s200 + $0xa0] sm:$0xff] %v2254
        %2283 = vst [vmem:[%s200 + $0xa8] sm:$0xff] %v2255
        %2284 = vst [vmem:[%s200 + $0xb0] sm:$0xff] %v2256
        %2285 = vst [vmem:[%s200 + $0xb8] sm:$0xff] %v2257
        %2286 = vst [vmem:[%s200 + $0xc0] sm:$0xff] %v2258
        %2287 = vst [vmem:[%s200 + $0xc8] sm:$0xff] %v2259
        %2288 = vst [vmem:[%s200 + $0xd0] sm:$0xff] %v2260
        %2289 = vst [vmem:[%s200 + $0xd8] sm:$0xff] %v2261
        %s2290 = sand.u32 %s109, 1
        %s2291 = scalar_lea.sflag [#allocation5], %s2290
        %s2292 = sand.u32 %s109, 1
        %s2293 = smul.addr %s2292, 224
        %s2294 = scalar_lea.vmem [#allocation8], %s2293
        // Predicated region
        $region41: #{tpu_custom_call.1} parent=31 // pred_check
          %p2295 = pneg %p119
        $region42: #{tpu_custom_call.1} parent=31 // pred_check_branch
          %2297 = sbr.rel (%p2295) target = $region44
        $region43: #{tpu_custom_call.1} parent=31 // pred_region
          %s2298 = smul.u32 14, %s24
          %s2300 = ssub.s32 3584, 3584
          %2301 = vsyncadd %s2291, %s2300
          %s2302 = smul.addr %s2298, 2
          %s2303 = smul.addr %s23, 28
          %s2304 = sadd.s32 %s2302, %s2303
          %s2305 = smul.addr %s2304, 128
          %s2306 = scalar_lea.hbm %s3, %s2305
          %s2307 = sshll.u32 %s2294, 4
          %s2308 = int_to_ptr.vmem [resolvable:$true] %s2307
          %2313 = dma.vmem_to_hbm [thread:$0]  %s2308, 3584, %s2306, %s2291, 128, 128, 8
        $region44: #{tpu_custom_call.1} parent=31 // pred_fallthru
          _
      $region32: #{tpu_custom_call.1} parent=5 // pred_fallthru
        _
      %p2314 = scmp.le.s32.totalorder 2, %s14
      // Predicated region
      $region45: #{tpu_custom_call.1} parent=5 // pred_check
        %p2315 = pneg %p2314
      $region46: #{tpu_custom_call.1} parent=5 // pred_check_branch
        %2317 = sbr.rel (%p2315) target = $region48
      $region47: #{tpu_custom_call.1} parent=5 // pred_region
        %s2318 = ssub.s32 %s14, 2
        // Predicated region
        $region49: #{tpu_custom_call.1} parent=47 // pred_check
          %p2319 = pneg %p125
        $region50: #{tpu_custom_call.1} parent=47 // pred_check_branch
          %2321 = sbr.rel (%p2319) target = $region52
        $region51: #{tpu_custom_call.1} parent=47 // pred_region
          %s2322 = sand.u32 %s110, 1
          %s2323 = scalar_lea.sflag [#allocation5], %s2322
          %s2324 = sand.u32 %s110, 1
          %s2325 = smul.addr %s2324, 224
          %s2326 = scalar_lea.vmem [#allocation8], %s2325
          %2327 = dma.done %s2323, 3584
        $region52: #{tpu_custom_call.1} parent=47 // pred_fallthru
          _
      $region48: #{tpu_custom_call.1} parent=5 // pred_fallthru
        _
    $region6: #{tpu_custom_call.1} parent=1 // loop_footer
      %s18 = sadd.s32 1, %s14
    $region7: #{tpu_custom_call.1} parent=1 // loop_footer_branch
      %13 = sbr.rel target = $region3
    $region8: #{tpu_custom_call.1} parent=1 // loop_exit
      _
    %2328 = vsyncpa [#allocation4], 1
    %s2329 = scalar_lea.sflag [#allocation4], 1
    %2330 = vsyncpa %s2329, 1
    %2331 = vsyncpa [#allocation7], 1
    %2332 = vsyncpa [#allocation5], 1
    %s2333 = scalar_lea.sflag [#allocation5], 1
    %2334 = vsyncpa %s2333, 1

// kernel: tpu_custom_call.1
$region0: #{tpu_custom_call.1}
  #allocation0 [shape = 'u32[]', space=smem, size = 0x4, offset = 0x4, fixed_abs, tag = 'smem constant byte address 0x4 - core index']
  #allocation1 [shape = 'u32[144,128]{1,0:T(1,128)}', space=vmem, size = 0x12000, scoped, tag = 'internal scratch']
  #allocation2 [shape = 'bf16[1,14,16,384]{3,2,1,0:T(16,128)(2,1)}', space=vmem, size = 0x2a000, scoped, tag = 'scratch operand']
  %s0 = inlined_call_operand.hbm [shape: bf16[2,16,16,128], index: 0, kind: input, shape index: {}]
  %s1 = inlined_call_operand.hbm [shape: bf16[3,384,128], index: 1, kind: input, shape index: {}]
  %s2 = inlined_call_operand.vmem [shape: f32[1,128], index: 2, kind: input, shape index: {}]
  %s3 = inlined_call_operand.hbm [shape: f32[2,14,16,128], index: 3, kind: output, shape index: {}]
  %s4 = sld [smem:[#allocation0]]
  $region53: #{tpu_custom_call.1} parent=0
    _
  %s6 = ssub.s32 1, %s4
  %s7 = scalar_select 0, %s6, %s4
  $region1: #{tpu_custom_call.1} parent=0
    #allocation3 [shape = 'u8[131072]{0}', space=vmem, size = 0x20000, scoped, tag = 'input window, operand 0']
    #allocation4 [shape = 's32[2]{0}', space=sflag, size = 0x8, scoped, tag = 'scoped memory for tpu_custom_call.1']
    #allocation5 [shape = 's32[2]{0}', space=sflag, size = 0x8, scoped, tag = 'scoped memory for tpu_custom_call.1']
    #allocation6 [shape = 'u8[294912]{0}', space=vmem, size = 0x48000, scoped, tag = 'input window, operand 1, single buffered']
    #allocation7 [shape = 's32[1]{0}', space=sflag, size = 0x4, scoped, tag = 'scoped memory for tpu_custom_call.1']
    #allocation8 [shape = 'u8[229376]{0}', space=vmem, size = 0x38000, scoped, tag = 'output window, operand 0']
    %8 = vsyncpa [#allocation4], 0
    %s9 = scalar_lea.sflag [#allocation4], 1
    %10 = vsyncpa %s9, 0
    %11 = vsyncpa [#allocation7], 0
    %12 = vsyncpa [#allocation5], 0
    %s13 = scalar_lea.sflag [#allocation5], 1
    %14 = vsyncpa %s13, 0
    loop: start=0, step=1, limit=4
    $region2: #{tpu_custom_call.1} parent=1 // loop_pre_header
      _
    $region3: #{tpu_custom_call.1} parent=1 // loop_header
      %s16 = sphi 0, %s20
      %p17 = scmp.ge.s32.totalorder %s16, 4
      %s23 = sphi 0, %s35
      %s24 = sphi 0, %s31
      %s25 = sphi 0, %s23
      %s26 = sphi 0, %s24
      %s27 = sphi 0, %s25
      %s28 = sphi 0, %s26
      %s38 = sphi 0, %s40
      %s41 = sphi 0, %s38
      %s42 = sphi 0, %s41
      %s58 = sphi 0, %s42
      %s62 = sphi 0, %s62
      %s64 = sphi 0, %s62
      %s65 = sphi 0, %s64
      %s79 = sphi 0, %s65
      %s83 = sphi 0, %s83
      %s85 = sphi 0, %s83
      %s86 = sphi 0, %s85
      %s100 = sphi 0, %s86
      %s108 = sphi 0, %s110
      %s111 = sphi 0, %s108
      %s112 = sphi 0, %s111
      %s128 = sphi 0, %s112
    $region4: #{tpu_custom_call.1} parent=1 // loop_header_branch
      %19 = sbr.rel (%p17) target = $region8
    $region5: #{tpu_custom_call.1} parent=1 // loop_body
      %s21 = ssub.s32 %s16, 1
      %s22 = ssub.s32 %s16, 2
      %s29 = sadd.s32 1, %s24
      %p30 = scmp.ge.s32.totalorder %s29, 1
      %s31 = scalar_select %p30, 0, %s29
      %s32 = sadd.s32 1, %s23
      %s33 = scalar_select %p30, %s32, %s23
      %p34 = scmp.ge.s32.totalorder %s33, 2
      %s35 = scalar_select %p34, 0, %s33
      %s36 = ssub.s32 %s23, %s35
      %p37 = scmp.eq.s32.totalorder %s36, 0
      %s39 = sadd.s32 %s38, 1
      %s40 = scalar_select %p37, %s38, %s39
      %p43 = pneg %p37
      %p44 = scmp.eq.s32.totalorder %s16, 1
      %p45 = por %p43, %p44
      %p46 = scmp.ne.s32.totalorder %s38, %s41
      %p47 = scmp.eq.s32.totalorder %s16, 0
      %p48 = por %p46, %p47
      %p49 = scmp.ne.s32.totalorder %s38, %s41
      %p50 = scmp.eq.s32.totalorder %s21, 1
      %p51 = por %p49, %p50
      %p52 = scmp.ne.s32.totalorder %s41, %s42
      %p53 = scmp.eq.s32.totalorder %s21, 0
      %p54 = por %p52, %p53
      %p55 = scmp.ne.s32.totalorder %s41, %s42
      %p56 = scmp.eq.s32.totalorder %s22, 1
      %p57 = por %p55, %p56
      %p59 = scmp.ne.s32.totalorder %s42, %s58
      %p60 = scmp.eq.s32.totalorder %s22, 0
      %p61 = por %p59, %p60
      %s63 = sadd.s32 %s62, 1
      %p66 = scmp.eq.s32.totalorder %s16, 1
      %p67 = scmp.ne.s32.totalorder %s62, %s64
      %p68 = scmp.eq.s32.totalorder %s16, 0
      %p69 = por %p67, %p68
      %p70 = scmp.ne.s32.totalorder %s62, %s64
      %p71 = scmp.eq.s32.totalorder %s21, 1
      %p72 = por %p70, %p71
      %p73 = scmp.ne.s32.totalorder %s64, %s65
      %p74 = scmp.eq.s32.totalorder %s21, 0
      %p75 = por %p73, %p74
      %p76 = scmp.ne.s32.totalorder %s64, %s65
      %p77 = scmp.eq.s32.totalorder %s22, 1
      %p78 = por %p76, %p77
      %p80 = scmp.ne.s32.totalorder %s65, %s79
      %p81 = scmp.eq.s32.totalorder %s22, 0
      %p82 = por %p80, %p81
      %s84 = sadd.s32 %s83, 1
      %p87 = scmp.eq.s32.totalorder %s16, 1
      %p88 = scmp.ne.s32.totalorder %s83, %s85
      %p89 = scmp.eq.s32.totalorder %s16, 0
      %p90 = por %p88, %p89
      %p91 = scmp.ne.s32.totalorder %s83, %s85
      %p92 = scmp.eq.s32.totalorder %s21, 1
      %p93 = por %p91, %p92
      %p94 = scmp.ne.s32.totalorder %s85, %s86
      %p95 = scmp.eq.s32.totalorder %s21, 0
      %p96 = por %p94, %p95
      %p97 = scmp.ne.s32.totalorder %s85, %s86
      %p98 = scmp.eq.s32.totalorder %s22, 1
      %p99 = por %p97, %p98
      %p101 = scmp.ne.s32.totalorder %s86, %s100
      %p102 = scmp.eq.s32.totalorder %s22, 0
      %p103 = por %p101, %p102
      %s104 = ssub.s32 %s23, %s35
      %s105 = ssub.s32 %s24, %s31
      %s106 = sor.u32 %s104, %s105
      %p107 = scmp.eq.s32.totalorder %s106, 0
      %s109 = sadd.s32 %s108, 1
      %s110 = scalar_select %p107, %s108, %s109
      %p113 = pneg %p107
      %p114 = scmp.eq.s32.totalorder %s16, 1
      %p115 = por %p113, %p114
      %p116 = scmp.ne.s32.totalorder %s108, %s111
      %p117 = scmp.eq.s32.totalorder %s16, 0
      %p118 = por %p116, %p117
      %p119 = scmp.ne.s32.totalorder %s108, %s111
      %p120 = scmp.eq.s32.totalorder %s21, 1
      %p121 = por %p119, %p120
      %p122 = scmp.ne.s32.totalorder %s111, %s112
      %p123 = scmp.eq.s32.totalorder %s21, 0
      %p124 = por %p122, %p123
      %p125 = scmp.ne.s32.totalorder %s111, %s112
      %p126 = scmp.eq.s32.totalorder %s22, 1
      %p127 = por %p125, %p126
      %p129 = scmp.ne.s32.totalorder %s112, %s128
      %p130 = scmp.eq.s32.totalorder %s22, 0
      %p131 = por %p129, %p130
      %p132 = scmp.le.s32.totalorder 1, %s16
      %p133 = scmp.lt.s32.totalorder %s16, 3
      %p134 = pnand %p132, %p133
      %p135 = pneg %p134
      // Predicated region
      $region9: #{tpu_custom_call.1} parent=5 // pred_check
        _
      $region10: #{tpu_custom_call.1} parent=5 // pred_check_branch
        %137 = sbr.rel (%p134) target = $region12
      $region11: #{tpu_custom_call.1} parent=5 // pred_region
        %s138 = ssub.s32 %s16, 1
        // Predicated region
        $region13: #{tpu_custom_call.1} parent=11 // pred_check
          %p139 = pneg %p75
        $region14: #{tpu_custom_call.1} parent=11 // pred_check_branch
          %141 = sbr.rel (%p139) target = $region16
        $region15: #{tpu_custom_call.1} parent=11 // pred_region
          %s143 = ssub.s32 9216, 9216
          %144 = vsyncadd [#allocation7], %s143
          %s145 = sshll.u32 [#allocation6], 4
          %s146 = int_to_ptr.vmem [resolvable:$true] %s145
          %151 = dma.hbm_to_vmem [thread:$0]  %s1, 9216, %s146, [#allocation7], 64, 64, 4
        $region16: #{tpu_custom_call.1} parent=11 // pred_fallthru
          _
        // Predicated region
        $region17: #{tpu_custom_call.1} parent=11 // pred_check
          %p152 = pneg %p96
        $region18: #{tpu_custom_call.1} parent=11 // pred_check_branch
          %154 = sbr.rel (%p152) target = $region20
        $region19: #{tpu_custom_call.1} parent=11 // pred_region
          _
        $region20: #{tpu_custom_call.1} parent=11 // pred_fallthru
          _
      $region12: #{tpu_custom_call.1} parent=5 // pred_fallthru
        _
      %p155 = scmp.lt.s32.totalorder %s16, 2
      // Predicated region
      $region21: #{tpu_custom_call.1} parent=5 // pred_check
        %p156 = pneg %p155
      $region22: #{tpu_custom_call.1} parent=5 // pred_check_branch
        %158 = sbr.rel (%p156) target = $region24
      $region23: #{tpu_custom_call.1} parent=5 // pred_region
        // Predicated region
        $region25: #{tpu_custom_call.1} parent=23 // pred_check
          %p159 = pneg %p48
        $region26: #{tpu_custom_call.1} parent=23 // pred_check_branch
          %161 = sbr.rel (%p159) target = $region28
        $region27: #{tpu_custom_call.1} parent=23 // pred_region
          %s162 = sand.u32 %s38, 1
          %s163 = scalar_lea.sflag [#allocation4], %s162
          %s164 = sand.u32 %s38, 1
          %s165 = smul.addr %s164, 128
          %s166 = scalar_lea.vmem [#allocation3], %s165
          %s168 = ssub.s32 2048, 2048
          %169 = vsyncadd %s163, %s168
          %s170 = smul.addr %s23, 32
          %s171 = smul.addr %s170, 64
          %s172 = scalar_lea.hbm %s0, %s171
          %s173 = sshll.u32 %s166, 4
          %s174 = int_to_ptr.vmem [resolvable:$true] %s173
          %179 = dma.hbm_to_vmem [thread:$0]  %s172, 2048, %s174, %s163, 64, 64, 4
        $region28: #{tpu_custom_call.1} parent=23 // pred_fallthru
          _
      $region24: #{tpu_custom_call.1} parent=5 // pred_fallthru
        _
      %p180 = scmp.le.s32.totalorder 1, %s16
      %p181 = scmp.lt.s32.totalorder %s16, 3
      %p182 = pnand %p180, %p181
      %p183 = pneg %p182
      // Predicated region
      $region29: #{tpu_custom_call.1} parent=5 // pred_check
        _
      $region30: #{tpu_custom_call.1} parent=5 // pred_check_branch
        %185 = sbr.rel (%p182) target = $region32
      $region31: #{tpu_custom_call.1} parent=5 // pred_region
        %s186 = ssub.s32 %s16, 1
        %s187 = sand.u32 %s41, 1
        %s188 = scalar_lea.sflag [#allocation4], %s187
        %s189 = sand.u32 %s41, 1
        %s190 = smul.addr %s189, 128
        %s191 = scalar_lea.vmem [#allocation3], %s190
        // Predicated region
        $region33: #{tpu_custom_call.1} parent=31 // pred_check
          %p192 = pneg %p54
        $region34: #{tpu_custom_call.1} parent=31 // pred_check_branch
          %194 = sbr.rel (%p192) target = $region36
        $region35: #{tpu_custom_call.1} parent=31 // pred_region
          %195 = dma.done %s188, 2048
        $region36: #{tpu_custom_call.1} parent=31 // pred_fallthru
          _
        // Predicated region
        $region37: #{tpu_custom_call.1} parent=31 // pred_check
          %p196 = pneg %p75
        $region38: #{tpu_custom_call.1} parent=31 // pred_check_branch
          %198 = sbr.rel (%p196) target = $region40
        $region39: #{tpu_custom_call.1} parent=31 // pred_region
          %199 = dma.done [#allocation7], 9216
        $region40: #{tpu_custom_call.1} parent=31 // pred_fallthru
          _
        %s200 = sand.u32 %s41, 1
        %s201 = scalar_lea.sflag [#allocation4], %s200
        %s202 = sand.u32 %s41, 1
        %s203 = smul.addr %s202, 128
        %s204 = scalar_lea.vmem [#allocation3], %s203
        %p205 = pneg %p54
        %p206 = pneg %p51
        %p207 = pneg %p75
        %p208 = pneg %p72
        %p209 = pneg %p96
        %p210 = pneg %p93
        %p211 = pneg %p124
        %p212 = pneg %p121
        %s213 = sand.u32 %s111, 1
        %s214 = scalar_lea.sflag [#allocation5], %s213
        %s215 = sand.u32 %s111, 1
        %s216 = smul.addr %s215, 224
        %s217 = scalar_lea.vmem [#allocation8], %s216
        %s218 = smul.u32 14, %s26
        %s220 = smul.u32 %s26, 14
        %s221 = smul.u32 %s220, 2
        %s222 = smul.addr %s221, 4
        %s223 = scalar_lea.vmem %s191, %s222 [#allocation3]
        %v224 = vld [vmem:[%s223] sm:$0xf]
        %v225 = vld [vmem:[%s223 + $0x4] sm:$0xf]
        %v226 = vld [vmem:[%s223 + $0x8] sm:$0xf]
        %v227 = vld [vmem:[%s223 + $0xc] sm:$0xf]
        %v228 = vld [vmem:[%s223 + $0x10] sm:$0xf]
        %v229 = vld [vmem:[%s223 + $0x14] sm:$0xf]
        %v230 = vld [vmem:[%s223 + $0x18] sm:$0xf]
        %v231 = vld [vmem:[%s223 + $0x1c] sm:$0xf]
        %v232 = vld [vmem:[%s223 + $0x20] sm:$0xf]
        %v233 = vld [vmem:[%s223 + $0x24] sm:$0xf]
        %v234 = vld [vmem:[%s223 + $0x28] sm:$0xf]
        %v235 = vld [vmem:[%s223 + $0x2c] sm:$0xf]
        %v236 = vld [vmem:[%s223 + $0x30] sm:$0xf]
        %v237 = vld [vmem:[%s223 + $0x34] sm:$0xf]
        %v238 = vld [vmem:[%s223 + $0x38] sm:$0xf]
        %v239 = vld [vmem:[%s223 + $0x3c] sm:$0xf]
        %v240 = vld [vmem:[%s223 + $0x40] sm:$0xf]
        %v241 = vld [vmem:[%s223 + $0x44] sm:$0xf]
        %v242 = vld [vmem:[%s223 + $0x48] sm:$0xf]
        %v243 = vld [vmem:[%s223 + $0x4c] sm:$0xf]
        %v244 = vld [vmem:[%s223 + $0x50] sm:$0xf]
        %v245 = vld [vmem:[%s223 + $0x54] sm:$0xf]
        %v246 = vld [vmem:[%s223 + $0x58] sm:$0xf]
        %v247 = vld [vmem:[%s223 + $0x5c] sm:$0xf]
        %v248 = vld [vmem:[%s223 + $0x60] sm:$0xf]
        %v249 = vld [vmem:[%s223 + $0x64] sm:$0xf]
        %v250 = vld [vmem:[%s223 + $0x68] sm:$0xf]
        %v251 = vld [vmem:[%s223 + $0x6c] sm:$0xf]
        %v280 = vunpack.c.l.b16 %v224
        %v281 = vunpack.c.l.b16 %v225
        %v282 = vunpack.c.l.b16 %v226
        %v283 = vunpack.c.l.b16 %v227
        %v284 = vunpack.c.l.b16 %v228
        %v285 = vunpack.c.l.b16 %v229
        %v286 = vunpack.c.l.b16 %v230
        %v287 = vunpack.c.l.b16 %v231
        %v288 = vunpack.c.l.b16 %v232
        %v289 = vunpack.c.l.b16 %v233
        %v290 = vunpack.c.l.b16 %v234
        %v291 = vunpack.c.l.b16 %v235
        %v292 = vunpack.c.l.b16 %v236
        %v293 = vunpack.c.l.b16 %v237
        %v294 = vunpack.c.l.b16 %v238
        %v295 = vunpack.c.l.b16 %v239
        %v296 = vunpack.c.l.b16 %v240
        %v297 = vunpack.c.l.b16 %v241
        %v298 = vunpack.c.l.b16 %v242
        %v299 = vunpack.c.l.b16 %v243
        %v300 = vunpack.c.l.b16 %v244
        %v301 = vunpack.c.l.b16 %v245
        %v302 = vunpack.c.l.b16 %v246
        %v303 = vunpack.c.l.b16 %v247
        %v304 = vunpack.c.l.b16 %v248
        %v305 = vunpack.c.l.b16 %v249
        %v306 = vunpack.c.l.b16 %v250
        %v307 = vunpack.c.l.b16 %v251
        %v308 = vpack.c.b16 %v281, %v280
        %v309 = vpack.c.b16 %v283, %v282
        %v310 = vpack.c.b16 %v285, %v284
        %v311 = vpack.c.b16 %v287, %v286
        %v312 = vpack.c.b16 %v289, %v288
        %v313 = vpack.c.b16 %v291, %v290
        %v314 = vpack.c.b16 %v293, %v292
        %v315 = vpack.c.b16 %v295, %v294
        %v316 = vpack.c.b16 %v297, %v296
        %v317 = vpack.c.b16 %v299, %v298
        %v318 = vpack.c.b16 %v301, %v300
        %v319 = vpack.c.b16 %v303, %v302
        %v320 = vpack.c.b16 %v305, %v304
        %v321 = vpack.c.b16 %v307, %v306
        %336 = vst [vmem:[#allocation2] sm:$0xff] %v308
        %337 = vst [vmem:[#allocation2 + $0x18] sm:$0xff] %v309
        %338 = vst [vmem:[#allocation2 + $0x30] sm:$0xff] %v310
        %339 = vst [vmem:[#allocation2 + $0x48] sm:$0xff] %v311
        %340 = vst [vmem:[#allocation2 + $0x60] sm:$0xff] %v312
        %341 = vst [vmem:[#allocation2 + $0x78] sm:$0xff] %v313
        %342 = vst [vmem:[#allocation2 + $0x90] sm:$0xff] %v314
        %343 = vst [vmem:[#allocation2 + $0xa8] sm:$0xff] %v315
        %344 = vst [vmem:[#allocation2 + $0xc0] sm:$0xff] %v316
        %345 = vst [vmem:[#allocation2 + $0xd8] sm:$0xff] %v317
        %346 = vst [vmem:[#allocation2 + $0xf0] sm:$0xff] %v318
        %347 = vst [vmem:[#allocation2 + $0x108] sm:$0xff] %v319
        %348 = vst [vmem:[#allocation2 + $0x120] sm:$0xff] %v320
        %349 = vst [vmem:[#allocation2 + $0x138] sm:$0xff] %v321
        %s350 = sadd.s32 %s220, 1
        %s351 = smul.u32 %s350, 2
        %s352 = smul.addr %s351, 4
        %s353 = scalar_lea.vmem %s191, %s352 [#allocation3]
        %v354 = vld [vmem:[%s353] sm:$0xf]
        %v355 = vld [vmem:[%s353 + $0x4] sm:$0xf]
        %v356 = vld [vmem:[%s353 + $0x8] sm:$0xf]
        %v357 = vld [vmem:[%s353 + $0xc] sm:$0xf]
        %v358 = vld [vmem:[%s353 + $0x10] sm:$0xf]
        %v359 = vld [vmem:[%s353 + $0x14] sm:$0xf]
        %v360 = vld [vmem:[%s353 + $0x18] sm:$0xf]
        %v361 = vld [vmem:[%s353 + $0x1c] sm:$0xf]
        %v362 = vld [vmem:[%s353 + $0x20] sm:$0xf]
        %v363 = vld [vmem:[%s353 + $0x24] sm:$0xf]
        %v364 = vld [vmem:[%s353 + $0x28] sm:$0xf]
        %v365 = vld [vmem:[%s353 + $0x2c] sm:$0xf]
        %v366 = vld [vmem:[%s353 + $0x30] sm:$0xf]
        %v367 = vld [vmem:[%s353 + $0x34] sm:$0xf]
        %v368 = vld [vmem:[%s353 + $0x38] sm:$0xf]
        %v369 = vld [vmem:[%s353 + $0x3c] sm:$0xf]
        %v370 = vld [vmem:[%s353 + $0x40] sm:$0xf]
        %v371 = vld [vmem:[%s353 + $0x44] sm:$0xf]
        %v372 = vld [vmem:[%s353 + $0x48] sm:$0xf]
        %v373 = vld [vmem:[%s353 + $0x4c] sm:$0xf]
        %v374 = vld [vmem:[%s353 + $0x50] sm:$0xf]
        %v375 = vld [vmem:[%s353 + $0x54] sm:$0xf]
        %v376 = vld [vmem:[%s353 + $0x58] sm:$0xf]
        %v377 = vld [vmem:[%s353 + $0x5c] sm:$0xf]
        %v378 = vld [vmem:[%s353 + $0x60] sm:$0xf]
        %v379 = vld [vmem:[%s353 + $0x64] sm:$0xf]
        %v380 = vld [vmem:[%s353 + $0x68] sm:$0xf]
        %v381 = vld [vmem:[%s353 + $0x6c] sm:$0xf]
        %v410 = vunpack.c.l.b16 %v354
        %v411 = vunpack.c.l.b16 %v355
        %v412 = vunpack.c.l.b16 %v356
        %v413 = vunpack.c.l.b16 %v357
        %v414 = vunpack.c.l.b16 %v358
        %v415 = vunpack.c.l.b16 %v359
        %v416 = vunpack.c.l.b16 %v360
        %v417 = vunpack.c.l.b16 %v361
        %v418 = vunpack.c.l.b16 %v362
        %v419 = vunpack.c.l.b16 %v363
        %v420 = vunpack.c.l.b16 %v364
        %v421 = vunpack.c.l.b16 %v365
        %v422 = vunpack.c.l.b16 %v366
        %v423 = vunpack.c.l.b16 %v367
        %v424 = vunpack.c.l.b16 %v368
        %v425 = vunpack.c.l.b16 %v369
        %v426 = vunpack.c.l.b16 %v370
        %v427 = vunpack.c.l.b16 %v371
        %v428 = vunpack.c.l.b16 %v372
        %v429 = vunpack.c.l.b16 %v373
        %v430 = vunpack.c.l.b16 %v374
        %v431 = vunpack.c.l.b16 %v375
        %v432 = vunpack.c.l.b16 %v376
        %v433 = vunpack.c.l.b16 %v377
        %v434 = vunpack.c.l.b16 %v378
        %v435 = vunpack.c.l.b16 %v379
        %v436 = vunpack.c.l.b16 %v380
        %v437 = vunpack.c.l.b16 %v381
        %v438 = vpack.c.b16 %v411, %v410
        %v439 = vpack.c.b16 %v413, %v412
        %v440 = vpack.c.b16 %v415, %v414
        %v441 = vpack.c.b16 %v417, %v416
        %v442 = vpack.c.b16 %v419, %v418
        %v443 = vpack.c.b16 %v421, %v420
        %v444 = vpack.c.b16 %v423, %v422
        %v445 = vpack.c.b16 %v425, %v424
        %v446 = vpack.c.b16 %v427, %v426
        %v447 = vpack.c.b16 %v429, %v428
        %v448 = vpack.c.b16 %v431, %v430
        %v449 = vpack.c.b16 %v433, %v432
        %v450 = vpack.c.b16 %v435, %v434
        %v451 = vpack.c.b16 %v437, %v436
        %466 = vst [vmem:[#allocation2 + $0x8] sm:$0xff] %v438
        %467 = vst [vmem:[#allocation2 + $0x20] sm:$0xff] %v439
        %468 = vst [vmem:[#allocation2 + $0x38] sm:$0xff] %v440
        %469 = vst [vmem:[#allocation2 + $0x50] sm:$0xff] %v441
        %470 = vst [vmem:[#allocation2 + $0x68] sm:$0xff] %v442
        %471 = vst [vmem:[#allocation2 + $0x80] sm:$0xff] %v443
        %472 = vst [vmem:[#allocation2 + $0x98] sm:$0xff] %v444
        %473 = vst [vmem:[#allocation2 + $0xb0] sm:$0xff] %v445
        %474 = vst [vmem:[#allocation2 + $0xc8] sm:$0xff] %v446
        %475 = vst [vmem:[#allocation2 + $0xe0] sm:$0xff] %v447
        %476 = vst [vmem:[#allocation2 + $0xf8] sm:$0xff] %v448
        %477 = vst [vmem:[#allocation2 + $0x110] sm:$0xff] %v449
        %478 = vst [vmem:[#allocation2 + $0x128] sm:$0xff] %v450
        %479 = vst [vmem:[#allocation2 + $0x140] sm:$0xff] %v451
        %s480 = sadd.s32 %s220, 2
        %s481 = smul.u32 %s480, 2
        %s482 = smul.addr %s481, 4
        %s483 = scalar_lea.vmem %s191, %s482 [#allocation3]
        %v484 = vld [vmem:[%s483] sm:$0xf]
        %v485 = vld [vmem:[%s483 + $0x4] sm:$0xf]
        %v486 = vld [vmem:[%s483 + $0x8] sm:$0xf]
        %v487 = vld [vmem:[%s483 + $0xc] sm:$0xf]
        %v488 = vld [vmem:[%s483 + $0x10] sm:$0xf]
        %v489 = vld [vmem:[%s483 + $0x14] sm:$0xf]
        %v490 = vld [vmem:[%s483 + $0x18] sm:$0xf]
        %v491 = vld [vmem:[%s483 + $0x1c] sm:$0xf]
        %v492 = vld [vmem:[%s483 + $0x20] sm:$0xf]
        %v493 = vld [vmem:[%s483 + $0x24] sm:$0xf]
        %v494 = vld [vmem:[%s483 + $0x28] sm:$0xf]
        %v495 = vld [vmem:[%s483 + $0x2c] sm:$0xf]
        %v496 = vld [vmem:[%s483 + $0x30] sm:$0xf]
        %v497 = vld [vmem:[%s483 + $0x34] sm:$0xf]
        %v498 = vld [vmem:[%s483 + $0x38] sm:$0xf]
        %v499 = vld [vmem:[%s483 + $0x3c] sm:$0xf]
        %v500 = vld [vmem:[%s483 + $0x40] sm:$0xf]
        %v501 = vld [vmem:[%s483 + $0x44] sm:$0xf]
        %v502 = vld [vmem:[%s483 + $0x48] sm:$0xf]
        %v503 = vld [vmem:[%s483 + $0x4c] sm:$0xf]
        %v504 = vld [vmem:[%s483 + $0x50] sm:$0xf]
        %v505 = vld [vmem:[%s483 + $0x54] sm:$0xf]
        %v506 = vld [vmem:[%s483 + $0x58] sm:$0xf]
        %v507 = vld [vmem:[%s483 + $0x5c] sm:$0xf]
        %v508 = vld [vmem:[%s483 + $0x60] sm:$0xf]
        %v509 = vld [vmem:[%s483 + $0x64] sm:$0xf]
        %v510 = vld [vmem:[%s483 + $0x68] sm:$0xf]
        %v511 = vld [vmem:[%s483 + $0x6c] sm:$0xf]
        %v540 = vunpack.c.l.b16 %v484
        %v541 = vunpack.c.l.b16 %v485
        %v542 = vunpack.c.l.b16 %v486
        %v543 = vunpack.c.l.b16 %v487
        %v544 = vunpack.c.l.b16 %v488
        %v545 = vunpack.c.l.b16 %v489
        %v546 = vunpack.c.l.b16 %v490
        %v547 = vunpack.c.l.b16 %v491
        %v548 = vunpack.c.l.b16 %v492
        %v549 = vunpack.c.l.b16 %v493
        %v550 = vunpack.c.l.b16 %v494
        %v551 = vunpack.c.l.b16 %v495
        %v552 = vunpack.c.l.b16 %v496
        %v553 = vunpack.c.l.b16 %v497
        %v554 = vunpack.c.l.b16 %v498
        %v555 = vunpack.c.l.b16 %v499
        %v556 = vunpack.c.l.b16 %v500
        %v557 = vunpack.c.l.b16 %v501
        %v558 = vunpack.c.l.b16 %v502
        %v559 = vunpack.c.l.b16 %v503
        %v560 = vunpack.c.l.b16 %v504
        %v561 = vunpack.c.l.b16 %v505
        %v562 = vunpack.c.l.b16 %v506
        %v563 = vunpack.c.l.b16 %v507
        %v564 = vunpack.c.l.b16 %v508
        %v565 = vunpack.c.l.b16 %v509
        %v566 = vunpack.c.l.b16 %v510
        %v567 = vunpack.c.l.b16 %v511
        %v568 = vpack.c.b16 %v541, %v540
        %v569 = vpack.c.b16 %v543, %v542
        %v570 = vpack.c.b16 %v545, %v544
        %v571 = vpack.c.b16 %v547, %v546
        %v572 = vpack.c.b16 %v549, %v548
        %v573 = vpack.c.b16 %v551, %v550
        %v574 = vpack.c.b16 %v553, %v552
        %v575 = vpack.c.b16 %v555, %v554
        %v576 = vpack.c.b16 %v557, %v556
        %v577 = vpack.c.b16 %v559, %v558
        %v578 = vpack.c.b16 %v561, %v560
        %v579 = vpack.c.b16 %v563, %v562
        %v580 = vpack.c.b16 %v565, %v564
        %v581 = vpack.c.b16 %v567, %v566
        %596 = vst [vmem:[#allocation2 + $0x10] sm:$0xff] %v568
        %597 = vst [vmem:[#allocation2 + $0x28] sm:$0xff] %v569
        %598 = vst [vmem:[#allocation2 + $0x40] sm:$0xff] %v570
        %599 = vst [vmem:[#allocation2 + $0x58] sm:$0xff] %v571
        %600 = vst [vmem:[#allocation2 + $0x70] sm:$0xff] %v572
        %601 = vst [vmem:[#allocation2 + $0x88] sm:$0xff] %v573
        %602 = vst [vmem:[#allocation2 + $0xa0] sm:$0xff] %v574
        %603 = vst [vmem:[#allocation2 + $0xb8] sm:$0xff] %v575
        %604 = vst [vmem:[#allocation2 + $0xd0] sm:$0xff] %v576
        %605 = vst [vmem:[#allocation2 + $0xe8] sm:$0xff] %v577
        %606 = vst [vmem:[#allocation2 + $0x100] sm:$0xff] %v578
        %607 = vst [vmem:[#allocation2 + $0x118] sm:$0xff] %v579
        %608 = vst [vmem:[#allocation2 + $0x130] sm:$0xff] %v580
        %609 = vst [vmem:[#allocation2 + $0x148] sm:$0xff] %v581
        %v610 = vld [vmem:[#allocation2] sm:$0xff]
        %v611 = vld [vmem:[#allocation2 + $0x8] sm:$0xff]
        %v612 = vld [vmem:[#allocation2 + $0x10] sm:$0xff]
        %v613 = vld [vmem:[#allocation2 + $0x18] sm:$0xff]
        %v614 = vld [vmem:[#allocation2 + $0x20] sm:$0xff]
        %v615 = vld [vmem:[#allocation2 + $0x28] sm:$0xff]
        %v616 = vld [vmem:[#allocation2 + $0x30] sm:$0xff]
        %v617 = vld [vmem:[#allocation2 + $0x38] sm:$0xff]
        %v618 = vld [vmem:[#allocation2 + $0x40] sm:$0xff]
        %v619 = vld [vmem:[#allocation2 + $0x48] sm:$0xff]
        %v620 = vld [vmem:[#allocation2 + $0x50] sm:$0xff]
        %v621 = vld [vmem:[#allocation2 + $0x58] sm:$0xff]
        %v622 = vld [vmem:[#allocation2 + $0x60] sm:$0xff]
        %v623 = vld [vmem:[#allocation2 + $0x68] sm:$0xff]
        %v624 = vld [vmem:[#allocation2 + $0x70] sm:$0xff]
        %v625 = vld [vmem:[#allocation2 + $0x78] sm:$0xff]
        %v626 = vld [vmem:[#allocation2 + $0x80] sm:$0xff]
        %v627 = vld [vmem:[#allocation2 + $0x88] sm:$0xff]
        %v628 = vld [vmem:[#allocation2 + $0x90] sm:$0xff]
        %v629 = vld [vmem:[#allocation2 + $0x98] sm:$0xff]
        %v630 = vld [vmem:[#allocation2 + $0xa0] sm:$0xff]
        %v631 = vld [vmem:[#allocation2 + $0xa8] sm:$0xff]
        %v632 = vld [vmem:[#allocation2 + $0xb0] sm:$0xff]
        %v633 = vld [vmem:[#allocation2 + $0xb8] sm:$0xff]
        %v634 = vld [vmem:[#allocation2 + $0xc0] sm:$0xff]
        %v635 = vld [vmem:[#allocation2 + $0xc8] sm:$0xff]
        %v636 = vld [vmem:[#allocation2 + $0xd0] sm:$0xff]
        %v637 = vld [vmem:[#allocation2 + $0xd8] sm:$0xff]
        %v638 = vld [vmem:[#allocation2 + $0xe0] sm:$0xff]
        %v639 = vld [vmem:[#allocation2 + $0xe8] sm:$0xff]
        %v640 = vld [vmem:[#allocation2 + $0xf0] sm:$0xff]
        %v641 = vld [vmem:[#allocation2 + $0xf8] sm:$0xff]
        %v642 = vld [vmem:[#allocation2 + $0x100] sm:$0xff]
        %v643 = vld [vmem:[#allocation2 + $0x108] sm:$0xff]
        %v644 = vld [vmem:[#allocation2 + $0x110] sm:$0xff]
        %v645 = vld [vmem:[#allocation2 + $0x118] sm:$0xff]
        %v646 = vld [vmem:[#allocation2 + $0x120] sm:$0xff]
        %v647 = vld [vmem:[#allocation2 + $0x128] sm:$0xff]
        %v648 = vld [vmem:[#allocation2 + $0x130] sm:$0xff]
        %v649 = vld [vmem:[#allocation2 + $0x138] sm:$0xff]
        %v650 = vld [vmem:[#allocation2 + $0x140] sm:$0xff]
        %v651 = vld [vmem:[#allocation2 + $0x148] sm:$0xff]
        %v652 = vld [vmem:[#allocation6] sm:$0xf]
        %v653 = vld [vmem:[#allocation6 + $0x4] sm:$0xf]
        %v654 = vld [vmem:[#allocation6 + $0x8] sm:$0xf]
        %v655 = vld [vmem:[#allocation6 + $0xc] sm:$0xf]
        %v656 = vld [vmem:[#allocation6 + $0x10] sm:$0xf]
        %v657 = vld [vmem:[#allocation6 + $0x14] sm:$0xf]
        %v658 = vld [vmem:[#allocation6 + $0x18] sm:$0xf]
        %v659 = vld [vmem:[#allocation6 + $0x1c] sm:$0xf]
        %v660 = vld [vmem:[#allocation6 + $0x20] sm:$0xf]
        %v661 = vld [vmem:[#allocation6 + $0x24] sm:$0xf]
        %v662 = vld [vmem:[#allocation6 + $0x28] sm:$0xf]
        %v663 = vld [vmem:[#allocation6 + $0x2c] sm:$0xf]
        %v664 = vld [vmem:[#allocation6 + $0x30] sm:$0xf]
        %v665 = vld [vmem:[#allocation6 + $0x34] sm:$0xf]
        %v666 = vld [vmem:[#allocation6 + $0x38] sm:$0xf]
        %v667 = vld [vmem:[#allocation6 + $0x3c] sm:$0xf]
        %v668 = vld [vmem:[#allocation6 + $0x40] sm:$0xf]
        %v669 = vld [vmem:[#allocation6 + $0x44] sm:$0xf]
        %v670 = vld [vmem:[#allocation6 + $0x48] sm:$0xf]
        %v671 = vld [vmem:[#allocation6 + $0x4c] sm:$0xf]
        %v672 = vld [vmem:[#allocation6 + $0x50] sm:$0xf]
        %v673 = vld [vmem:[#allocation6 + $0x54] sm:$0xf]
        %v674 = vld [vmem:[#allocation6 + $0x58] sm:$0xf]
        %v675 = vld [vmem:[#allocation6 + $0x5c] sm:$0xf]
        %v676 = vld [vmem:[#allocation6 + $0x60] sm:$0xf]
        %v677 = vld [vmem:[#allocation6 + $0x64] sm:$0xf]
        %v678 = vld [vmem:[#allocation6 + $0x68] sm:$0xf]
        %v679 = vld [vmem:[#allocation6 + $0x6c] sm:$0xf]
        %v680 = vld [vmem:[#allocation6 + $0x70] sm:$0xf]
        %v681 = vld [vmem:[#allocation6 + $0x74] sm:$0xf]
        %v682 = vld [vmem:[#allocation6 + $0x78] sm:$0xf]
        %v683 = vld [vmem:[#allocation6 + $0x7c] sm:$0xf]
        %v684 = vld [vmem:[#allocation6 + $0x80] sm:$0xf]
        %v685 = vld [vmem:[#allocation6 + $0x84] sm:$0xf]
        %v686 = vld [vmem:[#allocation6 + $0x88] sm:$0xf]
        %v687 = vld [vmem:[#allocation6 + $0x8c] sm:$0xf]
        %v688 = vld [vmem:[#allocation6 + $0x90] sm:$0xf]
        %v689 = vld [vmem:[#allocation6 + $0x94] sm:$0xf]
        %v690 = vld [vmem:[#allocation6 + $0x98] sm:$0xf]
        %v691 = vld [vmem:[#allocation6 + $0x9c] sm:$0xf]
        %v692 = vld [vmem:[#allocation6 + $0xa0] sm:$0xf]
        %v693 = vld [vmem:[#allocation6 + $0xa4] sm:$0xf]
        %v694 = vld [vmem:[#allocation6 + $0xa8] sm:$0xf]
        %v695 = vld [vmem:[#allocation6 + $0xac] sm:$0xf]
        %v696 = vld [vmem:[#allocation6 + $0xb0] sm:$0xf]
        %v697 = vld [vmem:[#allocation6 + $0xb4] sm:$0xf]
        %v698 = vld [vmem:[#allocation6 + $0xb8] sm:$0xf]
        %v699 = vld [vmem:[#allocation6 + $0xbc] sm:$0xf]
        %s700 = scalar_lea.vmem [#allocation6], 192
        %v701 = vld [vmem:[%s700] sm:$0xf]
        %v702 = vld [vmem:[%s700 + $0x4] sm:$0xf]
        %v703 = vld [vmem:[%s700 + $0x8] sm:$0xf]
        %v704 = vld [vmem:[%s700 + $0xc] sm:$0xf]
        %v705 = vld [vmem:[%s700 + $0x10] sm:$0xf]
        %v706 = vld [vmem:[%s700 + $0x14] sm:$0xf]
        %v707 = vld [vmem:[%s700 + $0x18] sm:$0xf]
        %v708 = vld [vmem:[%s700 + $0x1c] sm:$0xf]
        %v709 = vld [vmem:[%s700 + $0x20] sm:$0xf]
        %v710 = vld [vmem:[%s700 + $0x24] sm:$0xf]
        %v711 = vld [vmem:[%s700 + $0x28] sm:$0xf]
        %v712 = vld [vmem:[%s700 + $0x2c] sm:$0xf]
        %v713 = vld [vmem:[%s700 + $0x30] sm:$0xf]
        %v714 = vld [vmem:[%s700 + $0x34] sm:$0xf]
        %v715 = vld [vmem:[%s700 + $0x38] sm:$0xf]
        %v716 = vld [vmem:[%s700 + $0x3c] sm:$0xf]
        %v717 = vld [vmem:[%s700 + $0x40] sm:$0xf]
        %v718 = vld [vmem:[%s700 + $0x44] sm:$0xf]
        %v719 = vld [vmem:[%s700 + $0x48] sm:$0xf]
        %v720 = vld [vmem:[%s700 + $0x4c] sm:$0xf]
        %v721 = vld [vmem:[%s700 + $0x50] sm:$0xf]
        %v722 = vld [vmem:[%s700 + $0x54] sm:$0xf]
        %v723 = vld [vmem:[%s700 + $0x58] sm:$0xf]
        %v724 = vld [vmem:[%s700 + $0x5c] sm:$0xf]
        %v725 = vld [vmem:[%s700 + $0x60] sm:$0xf]
        %v726 = vld [vmem:[%s700 + $0x64] sm:$0xf]
        %v727 = vld [vmem:[%s700 + $0x68] sm:$0xf]
        %v728 = vld [vmem:[%s700 + $0x6c] sm:$0xf]
        %v729 = vld [vmem:[%s700 + $0x70] sm:$0xf]
        %v730 = vld [vmem:[%s700 + $0x74] sm:$0xf]
        %v731 = vld [vmem:[%s700 + $0x78] sm:$0xf]
        %v732 = vld [vmem:[%s700 + $0x7c] sm:$0xf]
        %v733 = vld [vmem:[%s700 + $0x80] sm:$0xf]
        %v734 = vld [vmem:[%s700 + $0x84] sm:$0xf]
        %v735 = vld [vmem:[%s700 + $0x88] sm:$0xf]
        %v736 = vld [vmem:[%s700 + $0x8c] sm:$0xf]
        %v737 = vld [vmem:[%s700 + $0x90] sm:$0xf]
        %v738 = vld [vmem:[%s700 + $0x94] sm:$0xf]
        %v739 = vld [vmem:[%s700 + $0x98] sm:$0xf]
        %v740 = vld [vmem:[%s700 + $0x9c] sm:$0xf]
        %v741 = vld [vmem:[%s700 + $0xa0] sm:$0xf]
        %v742 = vld [vmem:[%s700 + $0xa4] sm:$0xf]
        %v743 = vld [vmem:[%s700 + $0xa8] sm:$0xf]
        %v744 = vld [vmem:[%s700 + $0xac] sm:$0xf]
        %v745 = vld [vmem:[%s700 + $0xb0] sm:$0xf]
        %v746 = vld [vmem:[%s700 + $0xb4] sm:$0xf]
        %v747 = vld [vmem:[%s700 + $0xb8] sm:$0xf]
        %v748 = vld [vmem:[%s700 + $0xbc] sm:$0xf]
        %v797 = vunpack.c.l.b16 %v701
        %v798 = vunpack.c.l.b16 %v702
        %v799 = vunpack.c.l.b16 %v703
        %v800 = vunpack.c.l.b16 %v704
        %v801 = vunpack.c.l.b16 %v705
        %v802 = vunpack.c.l.b16 %v706
        %v803 = vunpack.c.l.b16 %v707
        %v804 = vunpack.c.l.b16 %v708
        %v805 = vunpack.c.l.b16 %v709
        %v806 = vunpack.c.l.b16 %v710
        %v807 = vunpack.c.l.b16 %v711
        %v808 = vunpack.c.l.b16 %v712
        %v809 = vunpack.c.l.b16 %v713
        %v810 = vunpack.c.l.b16 %v714
        %v811 = vunpack.c.l.b16 %v715
        %v812 = vunpack.c.l.b16 %v716
        %v813 = vunpack.c.l.b16 %v717
        %v814 = vunpack.c.l.b16 %v718
        %v815 = vunpack.c.l.b16 %v719
        %v816 = vunpack.c.l.b16 %v720
        %v817 = vunpack.c.l.b16 %v721
        %v818 = vunpack.c.l.b16 %v722
        %v819 = vunpack.c.l.b16 %v723
        %v820 = vunpack.c.l.b16 %v724
        %v821 = vunpack.c.l.b16 %v725
        %v822 = vunpack.c.l.b16 %v726
        %v823 = vunpack.c.l.b16 %v727
        %v824 = vunpack.c.l.b16 %v728
        %v825 = vunpack.c.l.b16 %v729
        %v826 = vunpack.c.l.b16 %v730
        %v827 = vunpack.c.l.b16 %v731
        %v828 = vunpack.c.l.b16 %v732
        %v829 = vunpack.c.l.b16 %v733
        %v830 = vunpack.c.l.b16 %v734
        %v831 = vunpack.c.l.b16 %v735
        %v832 = vunpack.c.l.b16 %v736
        %v833 = vunpack.c.l.b16 %v737
        %v834 = vunpack.c.l.b16 %v738
        %v835 = vunpack.c.l.b16 %v739
        %v836 = vunpack.c.l.b16 %v740
        %v837 = vunpack.c.l.b16 %v741
        %v838 = vunpack.c.l.b16 %v742
        %v839 = vunpack.c.l.b16 %v743
        %v840 = vunpack.c.l.b16 %v744
        %v841 = vunpack.c.l.b16 %v745
        %v842 = vunpack.c.l.b16 %v746
        %v843 = vunpack.c.l.b16 %v747
        %v844 = vunpack.c.l.b16 %v748
        %v845 = vpack.c.b16 %v798, %v797
        %v846 = vpack.c.b16 %v800, %v799
        %v847 = vpack.c.b16 %v802, %v801
        %v848 = vpack.c.b16 %v804, %v803
        %v849 = vpack.c.b16 %v806, %v805
        %v850 = vpack.c.b16 %v808, %v807
        %v851 = vpack.c.b16 %v810, %v809
        %v852 = vpack.c.b16 %v812, %v811
        %v853 = vpack.c.b16 %v814, %v813
        %v854 = vpack.c.b16 %v816, %v815
        %v855 = vpack.c.b16 %v818, %v817
        %v856 = vpack.c.b16 %v820, %v819
        %v857 = vpack.c.b16 %v822, %v821
        %v858 = vpack.c.b16 %v824, %v823
        %v859 = vpack.c.b16 %v826, %v825
        %v860 = vpack.c.b16 %v828, %v827
        %v861 = vpack.c.b16 %v830, %v829
        %v862 = vpack.c.b16 %v832, %v831
        %v863 = vpack.c.b16 %v834, %v833
        %v864 = vpack.c.b16 %v836, %v835
        %v865 = vpack.c.b16 %v838, %v837
        %v866 = vpack.c.b16 %v840, %v839
        %v867 = vpack.c.b16 %v842, %v841
        %v868 = vpack.c.b16 %v844, %v843
        %893 = vmatprep.subr.bf16.mxu0 0
        %894 = vmatpush1.bf16.msra.mxu0 %v845
        %895 = vmatprep.subr.bf16.mxu0 0
        %896 = vmatpush1.bf16.msra.mxu0 %v846
        %897 = vmatprep.subr.bf16.mxu0 0
        %898 = vmatpush1.bf16.msra.mxu0 %v847
        %899 = vmatprep.subr.bf16.mxu0 0
        %900 = vmatpush1.bf16.msra.mxu0 %v848
        %901 = vmatprep.subr.bf16.mxu0 0
        %902 = vmatpush1.bf16.msra.mxu0 %v849
        %903 = vmatprep.subr.bf16.mxu0 0
        %904 = vmatpush1.bf16.msra.mxu0 %v850
        %905 = vmatprep.subr.bf16.mxu0 0
        %906 = vmatpush1.bf16.msra.mxu0 %v851
        %907 = vmatprep.subr.bf16.mxu0 0
        %908 = vmatpush1.bf16.msra.mxu0 %v852
        %909 = vmatprep.subr.bf16.mxu0 0
        %910 = vmatpush1.bf16.msra.mxu0 %v853
        %911 = vmatprep.subr.bf16.mxu0 0
        %912 = vmatpush1.bf16.msra.mxu0 %v854
        %913 = vmatprep.subr.bf16.mxu0 0
        %914 = vmatpush1.bf16.msra.mxu0 %v855
        %915 = vmatprep.subr.bf16.mxu0 0
        %916 = vmatpush1.bf16.msra.mxu0 %v856
        %917 = vmatprep.subr.bf16.mxu0 0
        %918 = vmatpush1.bf16.msra.mxu0 %v857
        %919 = vmatprep.subr.bf16.mxu0 0
        %920 = vmatpush1.bf16.msra.mxu0 %v858
        %921 = vmatprep.subr.bf16.mxu0 0
        %922 = vmatpush1.bf16.msra.mxu0 %v859
        %923 = vmatprep.subr.bf16.mxu0 0
        %924 = vmatpush1.bf16.msra.mxu0 %v860
        %925 = vmatprep.mubr.bf16.mxu0 %v611
        %926 = vmatmul.mubr.bf16.gmra.mrb[0].mxu0 %v610
        %v927 = vpop.f32.mrb[0].mxu0
        %v928 = vadd.f32 0.0, %v927
        %v929 = vpop.f32.mrb[0].mxu0
        %v930 = vpop.f32.mrb[0].mxu0
        %v931 = vadd.f32 0.0, %v930
        %v932 = vpop.f32.mrb[0].mxu0
        %933 = vmatprep.mubr.bf16.mxu0 %v614
        %934 = vmatmul.mubr.bf16.gmra.mrb[0].mxu0 %v613
        %v935 = vpop.f32.mrb[0].mxu0
        %v936 = vadd.f32 0.0, %v935
        %v937 = vpop.f32.mrb[0].mxu0
        %v938 = vpop.f32.mrb[0].mxu0
        %v939 = vadd.f32 0.0, %v938
        %v940 = vpop.f32.mrb[0].mxu0
        %941 = vmatprep.mubr.bf16.mxu0 %v617
        %942 = vmatmul.mubr.bf16.gmra.mrb[0].mxu0 %v616
        %v943 = vpop.f32.mrb[0].mxu0
        %v944 = vadd.f32 0.0, %v943
        %v945 = vpop.f32.mrb[0].mxu0
        %v946 = vpop.f32.mrb[0].mxu0
        %v947 = vadd.f32 0.0, %v946
        %v948 = vpop.f32.mrb[0].mxu0
        %949 = vmatprep.mubr.bf16.mxu0 %v620
        %950 = vmatmul.mubr.bf16.gmra.mrb[0].mxu0 %v619
        %v951 = vpop.f32.mrb[0].mxu0
        %v952 = vadd.f32 0.0, %v951
        %v953 = vpop.f32.mrb[0].mxu0
        %v954 = vpop.f32.mrb[0].mxu0
        %v955 = vadd.f32 0.0, %v954
        %v956 = vpop.f32.mrb[0].mxu0
        %957 = vmatprep.mubr.bf16.mxu0 %v623
        %958 = vmatmul.mubr.bf16.gmra.mrb[0].mxu0 %v622
        %v959 = vpop.f32.mrb[0].mxu0
        %v960 = vadd.f32 0.0, %v959
        %v961 = vpop.f32.mrb[0].mxu0
        %v962 = vpop.f32.mrb[0].mxu0
        %v963 = vadd.f32 0.0, %v962
        %v964 = vpop.f32.mrb[0].mxu0
        %965 = vmatprep.mubr.bf16.mxu0 %v626
        %966 = vmatmul.mubr.bf16.gmra.mrb[0].mxu0 %v625
        %v967 = vpop.f32.mrb[0].mxu0
        %v968 = vadd.f32 0.0, %v967
        %v969 = vpop.f32.mrb[0].mxu0
        %v970 = vpop.f32.mrb[0].mxu0
        %v971 = vadd.f32 0.0, %v970
        %v972 = vpop.f32.mrb[0].mxu0
        %973 = vmatprep.mubr.bf16.mxu0 %v629
        %974 = vmatmul.mubr.bf16.gmra.mrb[0].mxu0 %v628
        %v975 = vpop.f32.mrb[0].mxu0
        %v976 = vadd.f32 0.0, %v975
        %v977 = vpop.f32.mrb[0].mxu0
        %v978 = vpop.f32.mrb[0].mxu0
        %v979 = vadd.f32 0.0, %v978
        %v980 = vpop.f32.mrb[0].mxu0
        %981 = vmatprep.mubr.bf16.mxu0 %v632
        %982 = vmatmul.mubr.bf16.gmra.mrb[0].mxu0 %v631
        %v983 = vpop.f32.mrb[0].mxu0
        %v984 = vadd.f32 0.0, %v983
        %v985 = vpop.f32.mrb[0].mxu0
        %v986 = vpop.f32.mrb[0].mxu0
        %v987 = vadd.f32 0.0, %v986
        %v988 = vpop.f32.mrb[0].mxu0
        %989 = vmatprep.mubr.bf16.mxu0 %v635
        %990 = vmatmul.mubr.bf16.gmra.mrb[0].mxu0 %v634
        %v991 = vpop.f32.mrb[0].mxu0
        %v992 = vadd.f32 0.0, %v991
        %v993 = vpop.f32.mrb[0].mxu0
        %v994 = vpop.f32.mrb[0].mxu0
        %v995 = vadd.f32 0.0, %v994
        %v996 = vpop.f32.mrb[0].mxu0
        %997 = vmatprep.mubr.bf16.mxu0 %v638
        %998 = vmatmul.mubr.bf16.gmra.mrb[0].mxu0 %v637
        %v999 = vpop.f32.mrb[0].mxu0
        %v1000 = vadd.f32 0.0, %v999
        %v1001 = vpop.f32.mrb[0].mxu0
        %v1002 = vpop.f32.mrb[0].mxu0
        %v1003 = vadd.f32 0.0, %v1002
        %v1004 = vpop.f32.mrb[0].mxu0
        %1005 = vmatprep.mubr.bf16.mxu0 %v641
        %1006 = vmatmul.mubr.bf16.gmra.mrb[0].mxu0 %v640
        %v1007 = vpop.f32.mrb[0].mxu0
        %v1008 = vadd.f32 0.0, %v1007
        %v1009 = vpop.f32.mrb[0].mxu0
        %v1010 = vpop.f32.mrb[0].mxu0
        %v1011 = vadd.f32 0.0, %v1010
        %v1012 = vpop.f32.mrb[0].mxu0
        %1013 = vmatprep.mubr.bf16.mxu0 %v644
        %1014 = vmatmul.mubr.bf16.gmra.mrb[0].mxu0 %v643
        %v1015 = vpop.f32.mrb[0].mxu0
        %v1016 = vadd.f32 0.0, %v1015
        %v1017 = vpop.f32.mrb[0].mxu0
        %v1018 = vpop.f32.mrb[0].mxu0
        %v1019 = vadd.f32 0.0, %v1018
        %v1020 = vpop.f32.mrb[0].mxu0
        %1021 = vmatprep.mubr.bf16.mxu0 %v647
        %1022 = vmatmul.mubr.bf16.gmra.mrb[0].mxu0 %v646
        %v1023 = vpop.f32.mrb[0].mxu0
        %v1024 = vadd.f32 0.0, %v1023
        %v1025 = vpop.f32.mrb[0].mxu0
        %v1026 = vpop.f32.mrb[0].mxu0
        %v1027 = vadd.f32 0.0, %v1026
        %v1028 = vpop.f32.mrb[0].mxu0
        %1029 = vmatprep.mubr.bf16.mxu0 %v650
        %1030 = vmatmul.mubr.bf16.gmra.mrb[0].mxu0 %v649
        %v1031 = vpop.f32.mrb[0].mxu0
        %v1032 = vadd.f32 0.0, %v1031
        %v1033 = vpop.f32.mrb[0].mxu0
        %v1034 = vpop.f32.mrb[0].mxu0
        %v1035 = vadd.f32 0.0, %v1034
        %v1036 = vpop.f32.mrb[0].mxu0
        %1037 = vdwg.mxu0
        %1038 = vmatprep.subr.bf16.mxu0 0
        %1039 = vmatpush1.bf16.msra.mxu0 %v861
        %1040 = vmatprep.subr.bf16.mxu0 0
        %1041 = vmatpush1.bf16.msra.mxu0 %v862
        %1042 = vmatprep.subr.bf16.mxu0 0
        %1043 = vmatpush1.bf16.msra.mxu0 %v863
        %1044 = vmatprep.subr.bf16.mxu0 0
        %1045 = vmatpush1.bf16.msra.mxu0 %v864
        %1046 = vmatprep.subr.bf16.mxu0 0
        %1047 = vmatpush1.bf16.msra.mxu0 %v865
        %1048 = vmatprep.subr.bf16.mxu0 0
        %1049 = vmatpush1.bf16.msra.mxu0 %v866
        %1050 = vmatprep.subr.bf16.mxu0 0
        %1051 = vmatpush1.bf16.msra.mxu0 %v867
        %1052 = vmatprep.subr.bf16.mxu0 0
        %1053 = vmatpush1.bf16.msra.mxu0 %v868
        %1054 = vmatprep.subr.bf16.mxu0 0
        %1055 = vmatpush1.bf16.msra.mxu0 0
        %1056 = vmatprep.subr.bf16.mxu0 0
        %1057 = vmatpush1.bf16.msra.mxu0 0
        %1058 = vmatprep.subr.bf16.mxu0 0
        %1059 = vmatpush1.bf16.msra.mxu0 0
        %1060 = vmatprep.subr.bf16.mxu0 0
        %1061 = vmatpush1.bf16.msra.mxu0 0
        %1062 = vmatprep.subr.bf16.mxu0 0
        %1063 = vmatpush1.bf16.msra.mxu0 0
        %1064 = vmatprep.subr.bf16.mxu0 0
        %1065 = vmatpush1.bf16.msra.mxu0 0
        %1066 = vmatprep.subr.bf16.mxu0 0
        %1067 = vmatpush1.bf16.msra.mxu0 0
        %1068 = vmatprep.subr.bf16.mxu0 0
        %1069 = vmatpush1.bf16.msra.mxu0 0
        %1070 = vmatprep.mubr.bf16.mxu0 0
        %1071 = vmatmul.mubr.bf16.gmra.mrb[0].mxu0 %v612
        %v1072 = vpop.f32.mrb[0].mxu0
        %v1073 = vadd.f32 %v928, %v1072
        %v1074 = vpop.f32.mrb[0].mxu0
        %v1075 = vpop.f32.mrb[0].mxu0
        %v1076 = vadd.f32 %v931, %v1075
        %v1077 = vpop.f32.mrb[0].mxu0
        %1078 = vmatprep.mubr.bf16.mxu0 0
        %1079 = vmatmul.mubr.bf16.gmra.mrb[0].mxu0 %v615
        %v1080 = vpop.f32.mrb[0].mxu0
        %v1081 = vadd.f32 %v936, %v1080
        %v1082 = vpop.f32.mrb[0].mxu0
        %v1083 = vpop.f32.mrb[0].mxu0
        %v1084 = vadd.f32 %v939, %v1083
        %v1085 = vpop.f32.mrb[0].mxu0
        %1086 = vmatprep.mubr.bf16.mxu0 0
        %1087 = vmatmul.mubr.bf16.gmra.mrb[0].mxu0 %v618
        %v1088 = vpop.f32.mrb[0].mxu0
        %v1089 = vadd.f32 %v944, %v1088
        %v1090 = vpop.f32.mrb[0].mxu0
        %v1091 = vpop.f32.mrb[0].mxu0
        %v1092 = vadd.f32 %v947, %v1091
        %v1093 = vpop.f32.mrb[0].mxu0
        %1094 = vmatprep.mubr.bf16.mxu0 0
        %1095 = vmatmul.mubr.bf16.gmra.mrb[0].mxu0 %v621
        %v1096 = vpop.f32.mrb[0].mxu0
        %v1097 = vadd.f32 %v952, %v1096
        %v1098 = vpop.f32.mrb[0].mxu0
        %v1099 = vpop.f32.mrb[0].mxu0
        %v1100 = vadd.f32 %v955, %v1099
        %v1101 = vpop.f32.mrb[0].mxu0
        %1102 = vmatprep.mubr.bf16.mxu0 0
        %1103 = vmatmul.mubr.bf16.gmra.mrb[0].mxu0 %v624
        %v1104 = vpop.f32.mrb[0].mxu0
        %v1105 = vadd.f32 %v960, %v1104
        %v1106 = vpop.f32.mrb[0].mxu0
        %v1107 = vpop.f32.mrb[0].mxu0
        %v1108 = vadd.f32 %v963, %v1107
        %v1109 = vpop.f32.mrb[0].mxu0
        %1110 = vmatprep.mubr.bf16.mxu0 0
        %1111 = vmatmul.mubr.bf16.gmra.mrb[0].mxu0 %v627
        %v1112 = vpop.f32.mrb[0].mxu0
        %v1113 = vadd.f32 %v968, %v1112
        %v1114 = vpop.f32.mrb[0].mxu0
        %v1115 = vpop.f32.mrb[0].mxu0
        %v1116 = vadd.f32 %v971, %v1115
        %v1117 = vpop.f32.mrb[0].mxu0
        %1118 = vmatprep.mubr.bf16.mxu0 0
        %1119 = vmatmul.mubr.bf16.gmra.mrb[0].mxu0 %v630
        %v1120 = vpop.f32.mrb[0].mxu0
        %v1121 = vadd.f32 %v976, %v1120
        %v1122 = vpop.f32.mrb[0].mxu0
        %v1123 = vpop.f32.mrb[0].mxu0
        %v1124 = vadd.f32 %v979, %v1123
        %v1125 = vpop.f32.mrb[0].mxu0
        %1126 = vmatprep.mubr.bf16.mxu0 0
        %1127 = vmatmul.mubr.bf16.gmra.mrb[0].mxu0 %v633
        %v1128 = vpop.f32.mrb[0].mxu0
        %v1129 = vadd.f32 %v984, %v1128
        %v1130 = vpop.f32.mrb[0].mxu0
        %v1131 = vpop.f32.mrb[0].mxu0
        %v1132 = vadd.f32 %v987, %v1131
        %v1133 = vpop.f32.mrb[0].mxu0
        %1134 = vmatprep.mubr.bf16.mxu0 0
        %1135 = vmatmul.mubr.bf16.gmra.mrb[0].mxu0 %v636
        %v1136 = vpop.f32.mrb[0].mxu0
        %v1137 = vadd.f32 %v992, %v1136
        %v1138 = vpop.f32.mrb[0].mxu0
        %v1139 = vpop.f32.mrb[0].mxu0
        %v1140 = vadd.f32 %v995, %v1139
        %v1141 = vpop.f32.mrb[0].mxu0
        %1142 = vmatprep.mubr.bf16.mxu0 0
        %1143 = vmatmul.mubr.bf16.gmra.mrb[0].mxu0 %v639
        %v1144 = vpop.f32.mrb[0].mxu0
        %v1145 = vadd.f32 %v1000, %v1144
        %v1146 = vpop.f32.mrb[0].mxu0
        %v1147 = vpop.f32.mrb[0].mxu0
        %v1148 = vadd.f32 %v1003, %v1147
        %v1149 = vpop.f32.mrb[0].mxu0
        %1150 = vmatprep.mubr.bf16.mxu0 0
        %1151 = vmatmul.mubr.bf16.gmra.mrb[0].mxu0 %v642
        %v1152 = vpop.f32.mrb[0].mxu0
        %v1153 = vadd.f32 %v1008, %v1152
        %v1154 = vpop.f32.mrb[0].mxu0
        %v1155 = vpop.f32.mrb[0].mxu0
        %v1156 = vadd.f32 %v1011, %v1155
        %v1157 = vpop.f32.mrb[0].mxu0
        %1158 = vmatprep.mubr.bf16.mxu0 0
        %1159 = vmatmul.mubr.bf16.gmra.mrb[0].mxu0 %v645
        %v1160 = vpop.f32.mrb[0].mxu0
        %v1161 = vadd.f32 %v1016, %v1160
        %v1162 = vpop.f32.mrb[0].mxu0
        %v1163 = vpop.f32.mrb[0].mxu0
        %v1164 = vadd.f32 %v1019, %v1163
        %v1165 = vpop.f32.mrb[0].mxu0
        %1166 = vmatprep.mubr.bf16.mxu0 0
        %1167 = vmatmul.mubr.bf16.gmra.mrb[0].mxu0 %v648
        %v1168 = vpop.f32.mrb[0].mxu0
        %v1169 = vadd.f32 %v1024, %v1168
        %v1170 = vpop.f32.mrb[0].mxu0
        %v1171 = vpop.f32.mrb[0].mxu0
        %v1172 = vadd.f32 %v1027, %v1171
        %v1173 = vpop.f32.mrb[0].mxu0
        %1174 = vmatprep.mubr.bf16.mxu0 0
        %1175 = vmatmul.mubr.bf16.gmra.mrb[0].mxu0 %v651
        %v1176 = vpop.f32.mrb[0].mxu0
        %v1177 = vadd.f32 %v1032, %v1176
        %v1178 = vpop.f32.mrb[0].mxu0
        %v1179 = vpop.f32.mrb[0].mxu0
        %v1180 = vadd.f32 %v1035, %v1179
        %v1181 = vpop.f32.mrb[0].mxu0
        %1182 = vdwg.mxu0
        %v1183 = vrot.slane %v1073, 1
        %v1184 = vrot.slane %v1076, 1
        %v1185 = vrot.slane %v1081, 1
        %v1186 = vrot.slane %v1084, 1
        %v1187 = vrot.slane %v1089, 1
        %v1188 = vrot.slane %v1092, 1
        %v1189 = vrot.slane %v1097, 1
        %v1190 = vrot.slane %v1100, 1
        %v1191 = vrot.slane %v1105, 1
        %v1192 = vrot.slane %v1108, 1
        %v1193 = vrot.slane %v1113, 1
        %v1194 = vrot.slane %v1116, 1
        %v1195 = vrot.slane %v1121, 1
        %v1196 = vrot.slane %v1124, 1
        %v1197 = vrot.slane %v1129, 1
        %v1198 = vrot.slane %v1132, 1
        %v1199 = vrot.slane %v1137, 1
        %v1200 = vrot.slane %v1140, 1
        %v1201 = vrot.slane %v1145, 1
        %v1202 = vrot.slane %v1148, 1
        %v1203 = vrot.slane %v1153, 1
        %v1204 = vrot.slane %v1156, 1
        %v1205 = vrot.slane %v1161, 1
        %v1206 = vrot.slane %v1164, 1
        %v1207 = vrot.slane %v1169, 1
        %v1208 = vrot.slane %v1172, 1
        %v1209 = vrot.slane %v1177, 1
        %v1210 = vrot.slane %v1180, 1
        %v1211 = vlaneseq
        %v1212 = vshrl.u32 %v1211, 7
        %vm1213 = vcmp.lt.s32.totalorder %v1212, 7
        %v1214 = vsel %vm1213, %v1209, %v1210
        %v1215 = vsel %vm1213, %v1208, %v1209
        %v1216 = vsel %vm1213, %v1207, %v1208
        %v1217 = vsel %vm1213, %v1206, %v1207
        %v1218 = vsel %vm1213, %v1205, %v1206
        %v1219 = vsel %vm1213, %v1204, %v1205
        %v1220 = vsel %vm1213, %v1203, %v1204
        %v1221 = vsel %vm1213, %v1202, %v1203
        %v1222 = vsel %vm1213, %v1201, %v1202
        %v1223 = vsel %vm1213, %v1200, %v1201
        %v1224 = vsel %vm1213, %v1199, %v1200
        %v1225 = vsel %vm1213, %v1198, %v1199
        %v1226 = vsel %vm1213, %v1197, %v1198
        %v1227 = vsel %vm1213, %v1196, %v1197
        %v1228 = vsel %vm1213, %v1195, %v1196
        %v1229 = vsel %vm1213, %v1194, %v1195
        %v1230 = vsel %vm1213, %v1193, %v1194
        %v1231 = vsel %vm1213, %v1192, %v1193
        %v1232 = vsel %vm1213, %v1191, %v1192
        %v1233 = vsel %vm1213, %v1190, %v1191
        %v1234 = vsel %vm1213, %v1189, %v1190
        %v1235 = vsel %vm1213, %v1188, %v1189
        %v1236 = vsel %vm1213, %v1187, %v1188
        %v1237 = vsel %vm1213, %v1186, %v1187
        %v1238 = vsel %vm1213, %v1185, %v1186
        %v1239 = vsel %vm1213, %v1184, %v1185
        %v1240 = vsel %vm1213, %v1183, %v1184
        %v1241 = vsel %vm1213, %v1210, %v1183
        %v1290 = vunpack.c.l.b16 %v652
        %v1291 = vunpack.c.l.b16 %v653
        %v1292 = vunpack.c.l.b16 %v654
        %v1293 = vunpack.c.l.b16 %v655
        %v1294 = vunpack.c.l.b16 %v656
        %v1295 = vunpack.c.l.b16 %v657
        %v1296 = vunpack.c.l.b16 %v658
        %v1297 = vunpack.c.l.b16 %v659
        %v1298 = vunpack.c.l.b16 %v660
        %v1299 = vunpack.c.l.b16 %v661
        %v1300 = vunpack.c.l.b16 %v662
        %v1301 = vunpack.c.l.b16 %v663
        %v1302 = vunpack.c.l.b16 %v664
        %v1303 = vunpack.c.l.b16 %v665
        %v1304 = vunpack.c.l.b16 %v666
        %v1305 = vunpack.c.l.b16 %v667
        %v1306 = vunpack.c.l.b16 %v668
        %v1307 = vunpack.c.l.b16 %v669
        %v1308 = vunpack.c.l.b16 %v670
        %v1309 = vunpack.c.l.b16 %v671
        %v1310 = vunpack.c.l.b16 %v672
        %v1311 = vunpack.c.l.b16 %v673
        %v1312 = vunpack.c.l.b16 %v674
        %v1313 = vunpack.c.l.b16 %v675
        %v1314 = vunpack.c.l.b16 %v676
        %v1315 = vunpack.c.l.b16 %v677
        %v1316 = vunpack.c.l.b16 %v678
        %v1317 = vunpack.c.l.b16 %v679
        %v1318 = vunpack.c.l.b16 %v680
        %v1319 = vunpack.c.l.b16 %v681
        %v1320 = vunpack.c.l.b16 %v682
        %v1321 = vunpack.c.l.b16 %v683
        %v1322 = vunpack.c.l.b16 %v684
        %v1323 = vunpack.c.l.b16 %v685
        %v1324 = vunpack.c.l.b16 %v686
        %v1325 = vunpack.c.l.b16 %v687
        %v1326 = vunpack.c.l.b16 %v688
        %v1327 = vunpack.c.l.b16 %v689
        %v1328 = vunpack.c.l.b16 %v690
        %v1329 = vunpack.c.l.b16 %v691
        %v1330 = vunpack.c.l.b16 %v692
        %v1331 = vunpack.c.l.b16 %v693
        %v1332 = vunpack.c.l.b16 %v694
        %v1333 = vunpack.c.l.b16 %v695
        %v1334 = vunpack.c.l.b16 %v696
        %v1335 = vunpack.c.l.b16 %v697
        %v1336 = vunpack.c.l.b16 %v698
        %v1337 = vunpack.c.l.b16 %v699
        %v1338 = vpack.c.b16 %v1291, %v1290
        %v1339 = vpack.c.b16 %v1293, %v1292
        %v1340 = vpack.c.b16 %v1295, %v1294
        %v1341 = vpack.c.b16 %v1297, %v1296
        %v1342 = vpack.c.b16 %v1299, %v1298
        %v1343 = vpack.c.b16 %v1301, %v1300
        %v1344 = vpack.c.b16 %v1303, %v1302
        %v1345 = vpack.c.b16 %v1305, %v1304
        %v1346 = vpack.c.b16 %v1307, %v1306
        %v1347 = vpack.c.b16 %v1309, %v1308
        %v1348 = vpack.c.b16 %v1311, %v1310
        %v1349 = vpack.c.b16 %v1313, %v1312
        %v1350 = vpack.c.b16 %v1315, %v1314
        %v1351 = vpack.c.b16 %v1317, %v1316
        %v1352 = vpack.c.b16 %v1319, %v1318
        %v1353 = vpack.c.b16 %v1321, %v1320
        %v1354 = vpack.c.b16 %v1323, %v1322
        %v1355 = vpack.c.b16 %v1325, %v1324
        %v1356 = vpack.c.b16 %v1327, %v1326
        %v1357 = vpack.c.b16 %v1329, %v1328
        %v1358 = vpack.c.b16 %v1331, %v1330
        %v1359 = vpack.c.b16 %v1333, %v1332
        %v1360 = vpack.c.b16 %v1335, %v1334
        %v1361 = vpack.c.b16 %v1337, %v1336
        %1386 = vmatprep.subr.bf16.mxu0 0
        %1387 = vmatpush1.bf16.msra.mxu0 %v1338
        %1388 = vmatprep.subr.bf16.mxu0 0
        %1389 = vmatpush1.bf16.msra.mxu0 %v1339
        %1390 = vmatprep.subr.bf16.mxu0 0
        %1391 = vmatpush1.bf16.msra.mxu0 %v1340
        %1392 = vmatprep.subr.bf16.mxu0 0
        %1393 = vmatpush1.bf16.msra.mxu0 %v1341
        %1394 = vmatprep.subr.bf16.mxu0 0
        %1395 = vmatpush1.bf16.msra.mxu0 %v1342
        %1396 = vmatprep.subr.bf16.mxu0 0
        %1397 = vmatpush1.bf16.msra.mxu0 %v1343
        %1398 = vmatprep.subr.bf16.mxu0 0
        %1399 = vmatpush1.bf16.msra.mxu0 %v1344
        %1400 = vmatprep.subr.bf16.mxu0 0
        %1401 = vmatpush1.bf16.msra.mxu0 %v1345
        %1402 = vmatprep.subr.bf16.mxu0 0
        %1403 = vmatpush1.bf16.msra.mxu0 %v1346
        %1404 = vmatprep.subr.bf16.mxu0 0
        %1405 = vmatpush1.bf16.msra.mxu0 %v1347
        %1406 = vmatprep.subr.bf16.mxu0 0
        %1407 = vmatpush1.bf16.msra.mxu0 %v1348
        %1408 = vmatprep.subr.bf16.mxu0 0
        %1409 = vmatpush1.bf16.msra.mxu0 %v1349
        %1410 = vmatprep.subr.bf16.mxu0 0
        %1411 = vmatpush1.bf16.msra.mxu0 %v1350
        %1412 = vmatprep.subr.bf16.mxu0 0
        %1413 = vmatpush1.bf16.msra.mxu0 %v1351
        %1414 = vmatprep.subr.bf16.mxu0 0
        %1415 = vmatpush1.bf16.msra.mxu0 %v1352
        %1416 = vmatprep.subr.bf16.mxu0 0
        %1417 = vmatpush1.bf16.msra.mxu0 %v1353
        %1418 = vmatprep.mubr.bf16.mxu0 %v611
        %1419 = vmatmul.mubr.bf16.gmra.mrb[0].mxu0 %v610
        %v1420 = vpop.f32.mrb[0].mxu0
        %v1421 = vadd.f32 %v1240, %v1420
        %v1422 = vpop.f32.mrb[0].mxu0
        %v1423 = vpop.f32.mrb[0].mxu0
        %v1424 = vadd.f32 %v1239, %v1423
        %v1425 = vpop.f32.mrb[0].mxu0
        %1426 = vmatprep.mubr.bf16.mxu0 %v614
        %1427 = vmatmul.mubr.bf16.gmra.mrb[0].mxu0 %v613
        %v1428 = vpop.f32.mrb[0].mxu0
        %v1429 = vadd.f32 %v1238, %v1428
        %v1430 = vpop.f32.mrb[0].mxu0
        %v1431 = vpop.f32.mrb[0].mxu0
        %v1432 = vadd.f32 %v1237, %v1431
        %v1433 = vpop.f32.mrb[0].mxu0
        %1434 = vmatprep.mubr.bf16.mxu0 %v617
        %1435 = vmatmul.mubr.bf16.gmra.mrb[0].mxu0 %v616
        %v1436 = vpop.f32.mrb[0].mxu0
        %v1437 = vadd.f32 %v1236, %v1436
        %v1438 = vpop.f32.mrb[0].mxu0
        %v1439 = vpop.f32.mrb[0].mxu0
        %v1440 = vadd.f32 %v1235, %v1439
        %v1441 = vpop.f32.mrb[0].mxu0
        %1442 = vmatprep.mubr.bf16.mxu0 %v620
        %1443 = vmatmul.mubr.bf16.gmra.mrb[0].mxu0 %v619
        %v1444 = vpop.f32.mrb[0].mxu0
        %v1445 = vadd.f32 %v1234, %v1444
        %v1446 = vpop.f32.mrb[0].mxu0
        %v1447 = vpop.f32.mrb[0].mxu0
        %v1448 = vadd.f32 %v1233, %v1447
        %v1449 = vpop.f32.mrb[0].mxu0
        %1450 = vmatprep.mubr.bf16.mxu0 %v623
        %1451 = vmatmul.mubr.bf16.gmra.mrb[0].mxu0 %v622
        %v1452 = vpop.f32.mrb[0].mxu0
        %v1453 = vadd.f32 %v1232, %v1452
        %v1454 = vpop.f32.mrb[0].mxu0
        %v1455 = vpop.f32.mrb[0].mxu0
        %v1456 = vadd.f32 %v1231, %v1455
        %v1457 = vpop.f32.mrb[0].mxu0
        %1458 = vmatprep.mubr.bf16.mxu0 %v626
        %1459 = vmatmul.mubr.bf16.gmra.mrb[0].mxu0 %v625
        %v1460 = vpop.f32.mrb[0].mxu0
        %v1461 = vadd.f32 %v1230, %v1460
        %v1462 = vpop.f32.mrb[0].mxu0
        %v1463 = vpop.f32.mrb[0].mxu0
        %v1464 = vadd.f32 %v1229, %v1463
        %v1465 = vpop.f32.mrb[0].mxu0
        %1466 = vmatprep.mubr.bf16.mxu0 %v629
        %1467 = vmatmul.mubr.bf16.gmra.mrb[0].mxu0 %v628
        %v1468 = vpop.f32.mrb[0].mxu0
        %v1469 = vadd.f32 %v1228, %v1468
        %v1470 = vpop.f32.mrb[0].mxu0
        %v1471 = vpop.f32.mrb[0].mxu0
        %v1472 = vadd.f32 %v1227, %v1471
        %v1473 = vpop.f32.mrb[0].mxu0
        %1474 = vmatprep.mubr.bf16.mxu0 %v632
        %1475 = vmatmul.mubr.bf16.gmra.mrb[0].mxu0 %v631
        %v1476 = vpop.f32.mrb[0].mxu0
        %v1477 = vadd.f32 %v1226, %v1476
        %v1478 = vpop.f32.mrb[0].mxu0
        %v1479 = vpop.f32.mrb[0].mxu0
        %v1480 = vadd.f32 %v1225, %v1479
        %v1481 = vpop.f32.mrb[0].mxu0
        %1482 = vmatprep.mubr.bf16.mxu0 %v635
        %1483 = vmatmul.mubr.bf16.gmra.mrb[0].mxu0 %v634
        %v1484 = vpop.f32.mrb[0].mxu0
        %v1485 = vadd.f32 %v1224, %v1484
        %v1486 = vpop.f32.mrb[0].mxu0
        %v1487 = vpop.f32.mrb[0].mxu0
        %v1488 = vadd.f32 %v1223, %v1487
        %v1489 = vpop.f32.mrb[0].mxu0
        %1490 = vmatprep.mubr.bf16.mxu0 %v638
        %1491 = vmatmul.mubr.bf16.gmra.mrb[0].mxu0 %v637
        %v1492 = vpop.f32.mrb[0].mxu0
        %v1493 = vadd.f32 %v1222, %v1492
        %v1494 = vpop.f32.mrb[0].mxu0
        %v1495 = vpop.f32.mrb[0].mxu0
        %v1496 = vadd.f32 %v1221, %v1495
        %v1497 = vpop.f32.mrb[0].mxu0
        %1498 = vmatprep.mubr.bf16.mxu0 %v641
        %1499 = vmatmul.mubr.bf16.gmra.mrb[0].mxu0 %v640
        %v1500 = vpop.f32.mrb[0].mxu0
        %v1501 = vadd.f32 %v1220, %v1500
        %v1502 = vpop.f32.mrb[0].mxu0
        %v1503 = vpop.f32.mrb[0].mxu0
        %v1504 = vadd.f32 %v1219, %v1503
        %v1505 = vpop.f32.mrb[0].mxu0
        %1506 = vmatprep.mubr.bf16.mxu0 %v644
        %1507 = vmatmul.mubr.bf16.gmra.mrb[0].mxu0 %v643
        %v1508 = vpop.f32.mrb[0].mxu0
        %v1509 = vadd.f32 %v1218, %v1508
        %v1510 = vpop.f32.mrb[0].mxu0
        %v1511 = vpop.f32.mrb[0].mxu0
        %v1512 = vadd.f32 %v1217, %v1511
        %v1513 = vpop.f32.mrb[0].mxu0
        %1514 = vmatprep.mubr.bf16.mxu0 %v647
        %1515 = vmatmul.mubr.bf16.gmra.mrb[0].mxu0 %v646
        %v1516 = vpop.f32.mrb[0].mxu0
        %v1517 = vadd.f32 %v1216, %v1516
        %v1518 = vpop.f32.mrb[0].mxu0
        %v1519 = vpop.f32.mrb[0].mxu0
        %v1520 = vadd.f32 %v1215, %v1519
        %v1521 = vpop.f32.mrb[0].mxu0
        %1522 = vmatprep.mubr.bf16.mxu0 %v650
        %1523 = vmatmul.mubr.bf16.gmra.mrb[0].mxu0 %v649
        %v1524 = vpop.f32.mrb[0].mxu0
        %v1525 = vadd.f32 %v1214, %v1524
        %v1526 = vpop.f32.mrb[0].mxu0
        %v1527 = vpop.f32.mrb[0].mxu0
        %v1528 = vadd.f32 %v1241, %v1527
        %v1529 = vpop.f32.mrb[0].mxu0
        %1530 = vdwg.mxu0
        %1531 = vmatprep.subr.bf16.mxu0 0
        %1532 = vmatpush1.bf16.msra.mxu0 %v1354
        %1533 = vmatprep.subr.bf16.mxu0 0
        %1534 = vmatpush1.bf16.msra.mxu0 %v1355
        %1535 = vmatprep.subr.bf16.mxu0 0
        %1536 = vmatpush1.bf16.msra.mxu0 %v1356
        %1537 = vmatprep.subr.bf16.mxu0 0
        %1538 = vmatpush1.bf16.msra.mxu0 %v1357
        %1539 = vmatprep.subr.bf16.mxu0 0
        %1540 = vmatpush1.bf16.msra.mxu0 %v1358
        %1541 = vmatprep.subr.bf16.mxu0 0
        %1542 = vmatpush1.bf16.msra.mxu0 %v1359
        %1543 = vmatprep.subr.bf16.mxu0 0
        %1544 = vmatpush1.bf16.msra.mxu0 %v1360
        %1545 = vmatprep.subr.bf16.mxu0 0
        %1546 = vmatpush1.bf16.msra.mxu0 %v1361
        %1547 = vmatprep.subr.bf16.mxu0 0
        %1548 = vmatpush1.bf16.msra.mxu0 0
        %1549 = vmatprep.subr.bf16.mxu0 0
        %1550 = vmatpush1.bf16.msra.mxu0 0
        %1551 = vmatprep.subr.bf16.mxu0 0
        %1552 = vmatpush1.bf16.msra.mxu0 0
        %1553 = vmatprep.subr.bf16.mxu0 0
        %1554 = vmatpush1.bf16.msra.mxu0 0
        %1555 = vmatprep.subr.bf16.mxu0 0
        %1556 = vmatpush1.bf16.msra.mxu0 0
        %1557 = vmatprep.subr.bf16.mxu0 0
        %1558 = vmatpush1.bf16.msra.mxu0 0
        %1559 = vmatprep.subr.bf16.mxu0 0
        %1560 = vmatpush1.bf16.msra.mxu0 0
        %1561 = vmatprep.subr.bf16.mxu0 0
        %1562 = vmatpush1.bf16.msra.mxu0 0
        %1563 = vmatprep.mubr.bf16.mxu0 0
        %1564 = vmatmul.mubr.bf16.gmra.mrb[0].mxu0 %v612
        %v1565 = vpop.f32.mrb[0].mxu0
        %v1566 = vadd.f32 %v1421, %v1565
        %v1567 = vpop.f32.mrb[0].mxu0
        %v1568 = vpop.f32.mrb[0].mxu0
        %v1569 = vadd.f32 %v1424, %v1568
        %v1570 = vpop.f32.mrb[0].mxu0
        %1571 = vmatprep.mubr.bf16.mxu0 0
        %1572 = vmatmul.mubr.bf16.gmra.mrb[0].mxu0 %v615
        %v1573 = vpop.f32.mrb[0].mxu0
        %v1574 = vadd.f32 %v1429, %v1573
        %v1575 = vpop.f32.mrb[0].mxu0
        %v1576 = vpop.f32.mrb[0].mxu0
        %v1577 = vadd.f32 %v1432, %v1576
        %v1578 = vpop.f32.mrb[0].mxu0
        %1579 = vmatprep.mubr.bf16.mxu0 0
        %1580 = vmatmul.mubr.bf16.gmra.mrb[0].mxu0 %v618
        %v1581 = vpop.f32.mrb[0].mxu0
        %v1582 = vadd.f32 %v1437, %v1581
        %v1583 = vpop.f32.mrb[0].mxu0
        %v1584 = vpop.f32.mrb[0].mxu0
        %v1585 = vadd.f32 %v1440, %v1584
        %v1586 = vpop.f32.mrb[0].mxu0
        %1587 = vmatprep.mubr.bf16.mxu0 0
        %1588 = vmatmul.mubr.bf16.gmra.mrb[0].mxu0 %v621
        %v1589 = vpop.f32.mrb[0].mxu0
        %v1590 = vadd.f32 %v1445, %v1589
        %v1591 = vpop.f32.mrb[0].mxu0
        %v1592 = vpop.f32.mrb[0].mxu0
        %v1593 = vadd.f32 %v1448, %v1592
        %v1594 = vpop.f32.mrb[0].mxu0
        %1595 = vmatprep.mubr.bf16.mxu0 0
        %1596 = vmatmul.mubr.bf16.gmra.mrb[0].mxu0 %v624
        %v1597 = vpop.f32.mrb[0].mxu0
        %v1598 = vadd.f32 %v1453, %v1597
        %v1599 = vpop.f32.mrb[0].mxu0
        %v1600 = vpop.f32.mrb[0].mxu0
        %v1601 = vadd.f32 %v1456, %v1600
        %v1602 = vpop.f32.mrb[0].mxu0
        %1603 = vmatprep.mubr.bf16.mxu0 0
        %1604 = vmatmul.mubr.bf16.gmra.mrb[0].mxu0 %v627
        %v1605 = vpop.f32.mrb[0].mxu0
        %v1606 = vadd.f32 %v1461, %v1605
        %v1607 = vpop.f32.mrb[0].mxu0
        %v1608 = vpop.f32.mrb[0].mxu0
        %v1609 = vadd.f32 %v1464, %v1608
        %v1610 = vpop.f32.mrb[0].mxu0
        %1611 = vmatprep.mubr.bf16.mxu0 0
        %1612 = vmatmul.mubr.bf16.gmra.mrb[0].mxu0 %v630
        %v1613 = vpop.f32.mrb[0].mxu0
        %v1614 = vadd.f32 %v1469, %v1613
        %v1615 = vpop.f32.mrb[0].mxu0
        %v1616 = vpop.f32.mrb[0].mxu0
        %v1617 = vadd.f32 %v1472, %v1616
        %v1618 = vpop.f32.mrb[0].mxu0
        %1619 = vmatprep.mubr.bf16.mxu0 0
        %1620 = vmatmul.mubr.bf16.gmra.mrb[0].mxu0 %v633
        %v1621 = vpop.f32.mrb[0].mxu0
        %v1622 = vadd.f32 %v1477, %v1621
        %v1623 = vpop.f32.mrb[0].mxu0
        %v1624 = vpop.f32.mrb[0].mxu0
        %v1625 = vadd.f32 %v1480, %v1624
        %v1626 = vpop.f32.mrb[0].mxu0
        %1627 = vmatprep.mubr.bf16.mxu0 0
        %1628 = vmatmul.mubr.bf16.gmra.mrb[0].mxu0 %v636
        %v1629 = vpop.f32.mrb[0].mxu0
        %v1630 = vadd.f32 %v1485, %v1629
        %v1631 = vpop.f32.mrb[0].mxu0
        %v1632 = vpop.f32.mrb[0].mxu0
        %v1633 = vadd.f32 %v1488, %v1632
        %v1634 = vpop.f32.mrb[0].mxu0
        %1635 = vmatprep.mubr.bf16.mxu0 0
        %1636 = vmatmul.mubr.bf16.gmra.mrb[0].mxu0 %v639
        %v1637 = vpop.f32.mrb[0].mxu0
        %v1638 = vadd.f32 %v1493, %v1637
        %v1639 = vpop.f32.mrb[0].mxu0
        %v1640 = vpop.f32.mrb[0].mxu0
        %v1641 = vadd.f32 %v1496, %v1640
        %v1642 = vpop.f32.mrb[0].mxu0
        %1643 = vmatprep.mubr.bf16.mxu0 0
        %1644 = vmatmul.mubr.bf16.gmra.mrb[0].mxu0 %v642
        %v1645 = vpop.f32.mrb[0].mxu0
        %v1646 = vadd.f32 %v1501, %v1645
        %v1647 = vpop.f32.mrb[0].mxu0
        %v1648 = vpop.f32.mrb[0].mxu0
        %v1649 = vadd.f32 %v1504, %v1648
        %v1650 = vpop.f32.mrb[0].mxu0
        %1651 = vmatprep.mubr.bf16.mxu0 0
        %1652 = vmatmul.mubr.bf16.gmra.mrb[0].mxu0 %v645
        %v1653 = vpop.f32.mrb[0].mxu0
        %v1654 = vadd.f32 %v1509, %v1653
        %v1655 = vpop.f32.mrb[0].mxu0
        %v1656 = vpop.f32.mrb[0].mxu0
        %v1657 = vadd.f32 %v1512, %v1656
        %v1658 = vpop.f32.mrb[0].mxu0
        %1659 = vmatprep.mubr.bf16.mxu0 0
        %1660 = vmatmul.mubr.bf16.gmra.mrb[0].mxu0 %v648
        %v1661 = vpop.f32.mrb[0].mxu0
        %v1662 = vadd.f32 %v1517, %v1661
        %v1663 = vpop.f32.mrb[0].mxu0
        %v1664 = vpop.f32.mrb[0].mxu0
        %v1665 = vadd.f32 %v1520, %v1664
        %v1666 = vpop.f32.mrb[0].mxu0
        %1667 = vmatprep.mubr.bf16.mxu0 0
        %1668 = vmatmul.mubr.bf16.gmra.mrb[0].mxu0 %v651
        %v1669 = vpop.f32.mrb[0].mxu0
        %v1670 = vadd.f32 %v1525, %v1669
        %v1671 = vpop.f32.mrb[0].mxu0
        %v1672 = vpop.f32.mrb[0].mxu0
        %v1673 = vadd.f32 %v1528, %v1672
        %v1674 = vpop.f32.mrb[0].mxu0
        %1675 = vdwg.mxu0
        %s1676 = scalar_lea.vmem [#allocation6], 384
        %v1677 = vld [vmem:[%s1676] sm:$0xf]
        %v1678 = vld [vmem:[%s1676 + $0x4] sm:$0xf]
        %v1679 = vld [vmem:[%s1676 + $0x8] sm:$0xf]
        %v1680 = vld [vmem:[%s1676 + $0xc] sm:$0xf]
        %v1681 = vld [vmem:[%s1676 + $0x10] sm:$0xf]
        %v1682 = vld [vmem:[%s1676 + $0x14] sm:$0xf]
        %v1683 = vld [vmem:[%s1676 + $0x18] sm:$0xf]
        %v1684 = vld [vmem:[%s1676 + $0x1c] sm:$0xf]
        %v1685 = vld [vmem:[%s1676 + $0x20] sm:$0xf]
        %v1686 = vld [vmem:[%s1676 + $0x24] sm:$0xf]
        %v1687 = vld [vmem:[%s1676 + $0x28] sm:$0xf]
        %v1688 = vld [vmem:[%s1676 + $0x2c] sm:$0xf]
        %v1689 = vld [vmem:[%s1676 + $0x30] sm:$0xf]
        %v1690 = vld [vmem:[%s1676 + $0x34] sm:$0xf]
        %v1691 = vld [vmem:[%s1676 + $0x38] sm:$0xf]
        %v1692 = vld [vmem:[%s1676 + $0x3c] sm:$0xf]
        %v1693 = vld [vmem:[%s1676 + $0x40] sm:$0xf]
        %v1694 = vld [vmem:[%s1676 + $0x44] sm:$0xf]
        %v1695 = vld [vmem:[%s1676 + $0x48] sm:$0xf]
        %v1696 = vld [vmem:[%s1676 + $0x4c] sm:$0xf]
        %v1697 = vld [vmem:[%s1676 + $0x50] sm:$0xf]
        %v1698 = vld [vmem:[%s1676 + $0x54] sm:$0xf]
        %v1699 = vld [vmem:[%s1676 + $0x58] sm:$0xf]
        %v1700 = vld [vmem:[%s1676 + $0x5c] sm:$0xf]
        %v1701 = vld [vmem:[%s1676 + $0x60] sm:$0xf]
        %v1702 = vld [vmem:[%s1676 + $0x64] sm:$0xf]
        %v1703 = vld [vmem:[%s1676 + $0x68] sm:$0xf]
        %v1704 = vld [vmem:[%s1676 + $0x6c] sm:$0xf]
        %v1705 = vld [vmem:[%s1676 + $0x70] sm:$0xf]
        %v1706 = vld [vmem:[%s1676 + $0x74] sm:$0xf]
        %v1707 = vld [vmem:[%s1676 + $0x78] sm:$0xf]
        %v1708 = vld [vmem:[%s1676 + $0x7c] sm:$0xf]
        %v1709 = vld [vmem:[%s1676 + $0x80] sm:$0xf]
        %v1710 = vld [vmem:[%s1676 + $0x84] sm:$0xf]
        %v1711 = vld [vmem:[%s1676 + $0x88] sm:$0xf]
        %v1712 = vld [vmem:[%s1676 + $0x8c] sm:$0xf]
        %v1713 = vld [vmem:[%s1676 + $0x90] sm:$0xf]
        %v1714 = vld [vmem:[%s1676 + $0x94] sm:$0xf]
        %v1715 = vld [vmem:[%s1676 + $0x98] sm:$0xf]
        %v1716 = vld [vmem:[%s1676 + $0x9c] sm:$0xf]
        %v1717 = vld [vmem:[%s1676 + $0xa0] sm:$0xf]
        %v1718 = vld [vmem:[%s1676 + $0xa4] sm:$0xf]
        %v1719 = vld [vmem:[%s1676 + $0xa8] sm:$0xf]
        %v1720 = vld [vmem:[%s1676 + $0xac] sm:$0xf]
        %v1721 = vld [vmem:[%s1676 + $0xb0] sm:$0xf]
        %v1722 = vld [vmem:[%s1676 + $0xb4] sm:$0xf]
        %v1723 = vld [vmem:[%s1676 + $0xb8] sm:$0xf]
        %v1724 = vld [vmem:[%s1676 + $0xbc] sm:$0xf]
        %v1773 = vunpack.c.l.b16 %v1677
        %v1774 = vunpack.c.l.b16 %v1678
        %v1775 = vunpack.c.l.b16 %v1679
        %v1776 = vunpack.c.l.b16 %v1680
        %v1777 = vunpack.c.l.b16 %v1681
        %v1778 = vunpack.c.l.b16 %v1682
        %v1779 = vunpack.c.l.b16 %v1683
        %v1780 = vunpack.c.l.b16 %v1684
        %v1781 = vunpack.c.l.b16 %v1685
        %v1782 = vunpack.c.l.b16 %v1686
        %v1783 = vunpack.c.l.b16 %v1687
        %v1784 = vunpack.c.l.b16 %v1688
        %v1785 = vunpack.c.l.b16 %v1689
        %v1786 = vunpack.c.l.b16 %v1690
        %v1787 = vunpack.c.l.b16 %v1691
        %v1788 = vunpack.c.l.b16 %v1692
        %v1789 = vunpack.c.l.b16 %v1693
        %v1790 = vunpack.c.l.b16 %v1694
        %v1791 = vunpack.c.l.b16 %v1695
        %v1792 = vunpack.c.l.b16 %v1696
        %v1793 = vunpack.c.l.b16 %v1697
        %v1794 = vunpack.c.l.b16 %v1698
        %v1795 = vunpack.c.l.b16 %v1699
        %v1796 = vunpack.c.l.b16 %v1700
        %v1797 = vunpack.c.l.b16 %v1701
        %v1798 = vunpack.c.l.b16 %v1702
        %v1799 = vunpack.c.l.b16 %v1703
        %v1800 = vunpack.c.l.b16 %v1704
        %v1801 = vunpack.c.l.b16 %v1705
        %v1802 = vunpack.c.l.b16 %v1706
        %v1803 = vunpack.c.l.b16 %v1707
        %v1804 = vunpack.c.l.b16 %v1708
        %v1805 = vunpack.c.l.b16 %v1709
        %v1806 = vunpack.c.l.b16 %v1710
        %v1807 = vunpack.c.l.b16 %v1711
        %v1808 = vunpack.c.l.b16 %v1712
        %v1809 = vunpack.c.l.b16 %v1713
        %v1810 = vunpack.c.l.b16 %v1714
        %v1811 = vunpack.c.l.b16 %v1715
        %v1812 = vunpack.c.l.b16 %v1716
        %v1813 = vunpack.c.l.b16 %v1717
        %v1814 = vunpack.c.l.b16 %v1718
        %v1815 = vunpack.c.l.b16 %v1719
        %v1816 = vunpack.c.l.b16 %v1720
        %v1817 = vunpack.c.l.b16 %v1721
        %v1818 = vunpack.c.l.b16 %v1722
        %v1819 = vunpack.c.l.b16 %v1723
        %v1820 = vunpack.c.l.b16 %v1724
        %v1821 = vpack.c.b16 %v1774, %v1773
        %v1822 = vpack.c.b16 %v1776, %v1775
        %v1823 = vpack.c.b16 %v1778, %v1777
        %v1824 = vpack.c.b16 %v1780, %v1779
        %v1825 = vpack.c.b16 %v1782, %v1781
        %v1826 = vpack.c.b16 %v1784, %v1783
        %v1827 = vpack.c.b16 %v1786, %v1785
        %v1828 = vpack.c.b16 %v1788, %v1787
        %v1829 = vpack.c.b16 %v1790, %v1789
        %v1830 = vpack.c.b16 %v1792, %v1791
        %v1831 = vpack.c.b16 %v1794, %v1793
        %v1832 = vpack.c.b16 %v1796, %v1795
        %v1833 = vpack.c.b16 %v1798, %v1797
        %v1834 = vpack.c.b16 %v1800, %v1799
        %v1835 = vpack.c.b16 %v1802, %v1801
        %v1836 = vpack.c.b16 %v1804, %v1803
        %v1837 = vpack.c.b16 %v1806, %v1805
        %v1838 = vpack.c.b16 %v1808, %v1807
        %v1839 = vpack.c.b16 %v1810, %v1809
        %v1840 = vpack.c.b16 %v1812, %v1811
        %v1841 = vpack.c.b16 %v1814, %v1813
        %v1842 = vpack.c.b16 %v1816, %v1815
        %v1843 = vpack.c.b16 %v1818, %v1817
        %v1844 = vpack.c.b16 %v1820, %v1819
        %1869 = vmatprep.subr.bf16.mxu0 0
        %1870 = vmatpush1.bf16.msra.mxu0 %v1821
        %1871 = vmatprep.subr.bf16.mxu0 0
        %1872 = vmatpush1.bf16.msra.mxu0 %v1822
        %1873 = vmatprep.subr.bf16.mxu0 0
        %1874 = vmatpush1.bf16.msra.mxu0 %v1823
        %1875 = vmatprep.subr.bf16.mxu0 0
        %1876 = vmatpush1.bf16.msra.mxu0 %v1824
        %1877 = vmatprep.subr.bf16.mxu0 0
        %1878 = vmatpush1.bf16.msra.mxu0 %v1825
        %1879 = vmatprep.subr.bf16.mxu0 0
        %1880 = vmatpush1.bf16.msra.mxu0 %v1826
        %1881 = vmatprep.subr.bf16.mxu0 0
        %1882 = vmatpush1.bf16.msra.mxu0 %v1827
        %1883 = vmatprep.subr.bf16.mxu0 0
        %1884 = vmatpush1.bf16.msra.mxu0 %v1828
        %1885 = vmatprep.subr.bf16.mxu0 0
        %1886 = vmatpush1.bf16.msra.mxu0 %v1829
        %1887 = vmatprep.subr.bf16.mxu0 0
        %1888 = vmatpush1.bf16.msra.mxu0 %v1830
        %1889 = vmatprep.subr.bf16.mxu0 0
        %1890 = vmatpush1.bf16.msra.mxu0 %v1831
        %1891 = vmatprep.subr.bf16.mxu0 0
        %1892 = vmatpush1.bf16.msra.mxu0 %v1832
        %1893 = vmatprep.subr.bf16.mxu0 0
        %1894 = vmatpush1.bf16.msra.mxu0 %v1833
        %1895 = vmatprep.subr.bf16.mxu0 0
        %1896 = vmatpush1.bf16.msra.mxu0 %v1834
        %1897 = vmatprep.subr.bf16.mxu0 0
        %1898 = vmatpush1.bf16.msra.mxu0 %v1835
        %1899 = vmatprep.subr.bf16.mxu0 0
        %1900 = vmatpush1.bf16.msra.mxu0 %v1836
        %1901 = vmatprep.mubr.bf16.mxu0 %v611
        %1902 = vmatmul.mubr.bf16.gmra.mrb[0].mxu0 %v610
        %v1903 = vpop.f32.mrb[0].mxu0
        %v1904 = vadd.f32 0.0, %v1903
        %v1905 = vpop.f32.mrb[0].mxu0
        %v1906 = vpop.f32.mrb[0].mxu0
        %v1907 = vadd.f32 0.0, %v1906
        %v1908 = vpop.f32.mrb[0].mxu0
        %1909 = vmatprep.mubr.bf16.mxu0 %v614
        %1910 = vmatmul.mubr.bf16.gmra.mrb[0].mxu0 %v613
        %v1911 = vpop.f32.mrb[0].mxu0
        %v1912 = vadd.f32 0.0, %v1911
        %v1913 = vpop.f32.mrb[0].mxu0
        %v1914 = vpop.f32.mrb[0].mxu0
        %v1915 = vadd.f32 0.0, %v1914
        %v1916 = vpop.f32.mrb[0].mxu0
        %1917 = vmatprep.mubr.bf16.mxu0 %v617
        %1918 = vmatmul.mubr.bf16.gmra.mrb[0].mxu0 %v616
        %v1919 = vpop.f32.mrb[0].mxu0
        %v1920 = vadd.f32 0.0, %v1919
        %v1921 = vpop.f32.mrb[0].mxu0
        %v1922 = vpop.f32.mrb[0].mxu0
        %v1923 = vadd.f32 0.0, %v1922
        %v1924 = vpop.f32.mrb[0].mxu0
        %1925 = vmatprep.mubr.bf16.mxu0 %v620
        %1926 = vmatmul.mubr.bf16.gmra.mrb[0].mxu0 %v619
        %v1927 = vpop.f32.mrb[0].mxu0
        %v1928 = vadd.f32 0.0, %v1927
        %v1929 = vpop.f32.mrb[0].mxu0
        %v1930 = vpop.f32.mrb[0].mxu0
        %v1931 = vadd.f32 0.0, %v1930
        %v1932 = vpop.f32.mrb[0].mxu0
        %1933 = vmatprep.mubr.bf16.mxu0 %v623
        %1934 = vmatmul.mubr.bf16.gmra.mrb[0].mxu0 %v622
        %v1935 = vpop.f32.mrb[0].mxu0
        %v1936 = vadd.f32 0.0, %v1935
        %v1937 = vpop.f32.mrb[0].mxu0
        %v1938 = vpop.f32.mrb[0].mxu0
        %v1939 = vadd.f32 0.0, %v1938
        %v1940 = vpop.f32.mrb[0].mxu0
        %1941 = vmatprep.mubr.bf16.mxu0 %v626
        %1942 = vmatmul.mubr.bf16.gmra.mrb[0].mxu0 %v625
        %v1943 = vpop.f32.mrb[0].mxu0
        %v1944 = vadd.f32 0.0, %v1943
        %v1945 = vpop.f32.mrb[0].mxu0
        %v1946 = vpop.f32.mrb[0].mxu0
        %v1947 = vadd.f32 0.0, %v1946
        %v1948 = vpop.f32.mrb[0].mxu0
        %1949 = vmatprep.mubr.bf16.mxu0 %v629
        %1950 = vmatmul.mubr.bf16.gmra.mrb[0].mxu0 %v628
        %v1951 = vpop.f32.mrb[0].mxu0
        %v1952 = vadd.f32 0.0, %v1951
        %v1953 = vpop.f32.mrb[0].mxu0
        %v1954 = vpop.f32.mrb[0].mxu0
        %v1955 = vadd.f32 0.0, %v1954
        %v1956 = vpop.f32.mrb[0].mxu0
        %1957 = vmatprep.mubr.bf16.mxu0 %v632
        %1958 = vmatmul.mubr.bf16.gmra.mrb[0].mxu0 %v631
        %v1959 = vpop.f32.mrb[0].mxu0
        %v1960 = vadd.f32 0.0, %v1959
        %v1961 = vpop.f32.mrb[0].mxu0
        %v1962 = vpop.f32.mrb[0].mxu0
        %v1963 = vadd.f32 0.0, %v1962
        %v1964 = vpop.f32.mrb[0].mxu0
        %1965 = vmatprep.mubr.bf16.mxu0 %v635
        %1966 = vmatmul.mubr.bf16.gmra.mrb[0].mxu0 %v634
        %v1967 = vpop.f32.mrb[0].mxu0
        %v1968 = vadd.f32 0.0, %v1967
        %v1969 = vpop.f32.mrb[0].mxu0
        %v1970 = vpop.f32.mrb[0].mxu0
        %v1971 = vadd.f32 0.0, %v1970
        %v1972 = vpop.f32.mrb[0].mxu0
        %1973 = vmatprep.mubr.bf16.mxu0 %v638
        %1974 = vmatmul.mubr.bf16.gmra.mrb[0].mxu0 %v637
        %v1975 = vpop.f32.mrb[0].mxu0
        %v1976 = vadd.f32 0.0, %v1975
        %v1977 = vpop.f32.mrb[0].mxu0
        %v1978 = vpop.f32.mrb[0].mxu0
        %v1979 = vadd.f32 0.0, %v1978
        %v1980 = vpop.f32.mrb[0].mxu0
        %1981 = vmatprep.mubr.bf16.mxu0 %v641
        %1982 = vmatmul.mubr.bf16.gmra.mrb[0].mxu0 %v640
        %v1983 = vpop.f32.mrb[0].mxu0
        %v1984 = vadd.f32 0.0, %v1983
        %v1985 = vpop.f32.mrb[0].mxu0
        %v1986 = vpop.f32.mrb[0].mxu0
        %v1987 = vadd.f32 0.0, %v1986
        %v1988 = vpop.f32.mrb[0].mxu0
        %1989 = vmatprep.mubr.bf16.mxu0 %v644
        %1990 = vmatmul.mubr.bf16.gmra.mrb[0].mxu0 %v643
        %v1991 = vpop.f32.mrb[0].mxu0
        %v1992 = vadd.f32 0.0, %v1991
        %v1993 = vpop.f32.mrb[0].mxu0
        %v1994 = vpop.f32.mrb[0].mxu0
        %v1995 = vadd.f32 0.0, %v1994
        %v1996 = vpop.f32.mrb[0].mxu0
        %1997 = vmatprep.mubr.bf16.mxu0 %v647
        %1998 = vmatmul.mubr.bf16.gmra.mrb[0].mxu0 %v646
        %v1999 = vpop.f32.mrb[0].mxu0
        %v2000 = vadd.f32 0.0, %v1999
        %v2001 = vpop.f32.mrb[0].mxu0
        %v2002 = vpop.f32.mrb[0].mxu0
        %v2003 = vadd.f32 0.0, %v2002
        %v2004 = vpop.f32.mrb[0].mxu0
        %2005 = vmatprep.mubr.bf16.mxu0 %v650
        %2006 = vmatmul.mubr.bf16.gmra.mrb[0].mxu0 %v649
        %v2007 = vpop.f32.mrb[0].mxu0
        %v2008 = vadd.f32 0.0, %v2007
        %v2009 = vpop.f32.mrb[0].mxu0
        %v2010 = vpop.f32.mrb[0].mxu0
        %v2011 = vadd.f32 0.0, %v2010
        %v2012 = vpop.f32.mrb[0].mxu0
        %2013 = vdwg.mxu0
        %2014 = vmatprep.subr.bf16.mxu0 0
        %2015 = vmatpush1.bf16.msra.mxu0 %v1837
        %2016 = vmatprep.subr.bf16.mxu0 0
        %2017 = vmatpush1.bf16.msra.mxu0 %v1838
        %2018 = vmatprep.subr.bf16.mxu0 0
        %2019 = vmatpush1.bf16.msra.mxu0 %v1839
        %2020 = vmatprep.subr.bf16.mxu0 0
        %2021 = vmatpush1.bf16.msra.mxu0 %v1840
        %2022 = vmatprep.subr.bf16.mxu0 0
        %2023 = vmatpush1.bf16.msra.mxu0 %v1841
        %2024 = vmatprep.subr.bf16.mxu0 0
        %2025 = vmatpush1.bf16.msra.mxu0 %v1842
        %2026 = vmatprep.subr.bf16.mxu0 0
        %2027 = vmatpush1.bf16.msra.mxu0 %v1843
        %2028 = vmatprep.subr.bf16.mxu0 0
        %2029 = vmatpush1.bf16.msra.mxu0 %v1844
        %2030 = vmatprep.subr.bf16.mxu0 0
        %2031 = vmatpush1.bf16.msra.mxu0 0
        %2032 = vmatprep.subr.bf16.mxu0 0
        %2033 = vmatpush1.bf16.msra.mxu0 0
        %2034 = vmatprep.subr.bf16.mxu0 0
        %2035 = vmatpush1.bf16.msra.mxu0 0
        %2036 = vmatprep.subr.bf16.mxu0 0
        %2037 = vmatpush1.bf16.msra.mxu0 0
        %2038 = vmatprep.subr.bf16.mxu0 0
        %2039 = vmatpush1.bf16.msra.mxu0 0
        %2040 = vmatprep.subr.bf16.mxu0 0
        %2041 = vmatpush1.bf16.msra.mxu0 0
        %2042 = vmatprep.subr.bf16.mxu0 0
        %2043 = vmatpush1.bf16.msra.mxu0 0
        %2044 = vmatprep.subr.bf16.mxu0 0
        %2045 = vmatpush1.bf16.msra.mxu0 0
        %2046 = vmatprep.mubr.bf16.mxu0 0
        %2047 = vmatmul.mubr.bf16.gmra.mrb[0].mxu0 %v612
        %v2048 = vpop.f32.mrb[0].mxu0
        %v2049 = vadd.f32 %v1904, %v2048
        %v2050 = vpop.f32.mrb[0].mxu0
        %v2051 = vpop.f32.mrb[0].mxu0
        %v2052 = vadd.f32 %v1907, %v2051
        %v2053 = vpop.f32.mrb[0].mxu0
        %2054 = vmatprep.mubr.bf16.mxu0 0
        %2055 = vmatmul.mubr.bf16.gmra.mrb[0].mxu0 %v615
        %v2056 = vpop.f32.mrb[0].mxu0
        %v2057 = vadd.f32 %v1912, %v2056
        %v2058 = vpop.f32.mrb[0].mxu0
        %v2059 = vpop.f32.mrb[0].mxu0
        %v2060 = vadd.f32 %v1915, %v2059
        %v2061 = vpop.f32.mrb[0].mxu0
        %2062 = vmatprep.mubr.bf16.mxu0 0
        %2063 = vmatmul.mubr.bf16.gmra.mrb[0].mxu0 %v618
        %v2064 = vpop.f32.mrb[0].mxu0
        %v2065 = vadd.f32 %v1920, %v2064
        %v2066 = vpop.f32.mrb[0].mxu0
        %v2067 = vpop.f32.mrb[0].mxu0
        %v2068 = vadd.f32 %v1923, %v2067
        %v2069 = vpop.f32.mrb[0].mxu0
        %2070 = vmatprep.mubr.bf16.mxu0 0
        %2071 = vmatmul.mubr.bf16.gmra.mrb[0].mxu0 %v621
        %v2072 = vpop.f32.mrb[0].mxu0
        %v2073 = vadd.f32 %v1928, %v2072
        %v2074 = vpop.f32.mrb[0].mxu0
        %v2075 = vpop.f32.mrb[0].mxu0
        %v2076 = vadd.f32 %v1931, %v2075
        %v2077 = vpop.f32.mrb[0].mxu0
        %2078 = vmatprep.mubr.bf16.mxu0 0
        %2079 = vmatmul.mubr.bf16.gmra.mrb[0].mxu0 %v624
        %v2080 = vpop.f32.mrb[0].mxu0
        %v2081 = vadd.f32 %v1936, %v2080
        %v2082 = vpop.f32.mrb[0].mxu0
        %v2083 = vpop.f32.mrb[0].mxu0
        %v2084 = vadd.f32 %v1939, %v2083
        %v2085 = vpop.f32.mrb[0].mxu0
        %2086 = vmatprep.mubr.bf16.mxu0 0
        %2087 = vmatmul.mubr.bf16.gmra.mrb[0].mxu0 %v627
        %v2088 = vpop.f32.mrb[0].mxu0
        %v2089 = vadd.f32 %v1944, %v2088
        %v2090 = vpop.f32.mrb[0].mxu0
        %v2091 = vpop.f32.mrb[0].mxu0
        %v2092 = vadd.f32 %v1947, %v2091
        %v2093 = vpop.f32.mrb[0].mxu0
        %2094 = vmatprep.mubr.bf16.mxu0 0
        %2095 = vmatmul.mubr.bf16.gmra.mrb[0].mxu0 %v630
        %v2096 = vpop.f32.mrb[0].mxu0
        %v2097 = vadd.f32 %v1952, %v2096
        %v2098 = vpop.f32.mrb[0].mxu0
        %v2099 = vpop.f32.mrb[0].mxu0
        %v2100 = vadd.f32 %v1955, %v2099
        %v2101 = vpop.f32.mrb[0].mxu0
        %2102 = vmatprep.mubr.bf16.mxu0 0
        %2103 = vmatmul.mubr.bf16.gmra.mrb[0].mxu0 %v633
        %v2104 = vpop.f32.mrb[0].mxu0
        %v2105 = vadd.f32 %v1960, %v2104
        %v2106 = vpop.f32.mrb[0].mxu0
        %v2107 = vpop.f32.mrb[0].mxu0
        %v2108 = vadd.f32 %v1963, %v2107
        %v2109 = vpop.f32.mrb[0].mxu0
        %2110 = vmatprep.mubr.bf16.mxu0 0
        %2111 = vmatmul.mubr.bf16.gmra.mrb[0].mxu0 %v636
        %v2112 = vpop.f32.mrb[0].mxu0
        %v2113 = vadd.f32 %v1968, %v2112
        %v2114 = vpop.f32.mrb[0].mxu0
        %v2115 = vpop.f32.mrb[0].mxu0
        %v2116 = vadd.f32 %v1971, %v2115
        %v2117 = vpop.f32.mrb[0].mxu0
        %2118 = vmatprep.mubr.bf16.mxu0 0
        %2119 = vmatmul.mubr.bf16.gmra.mrb[0].mxu0 %v639
        %v2120 = vpop.f32.mrb[0].mxu0
        %v2121 = vadd.f32 %v1976, %v2120
        %v2122 = vpop.f32.mrb[0].mxu0
        %v2123 = vpop.f32.mrb[0].mxu0
        %v2124 = vadd.f32 %v1979, %v2123
        %v2125 = vpop.f32.mrb[0].mxu0
        %2126 = vmatprep.mubr.bf16.mxu0 0
        %2127 = vmatmul.mubr.bf16.gmra.mrb[0].mxu0 %v642
        %v2128 = vpop.f32.mrb[0].mxu0
        %v2129 = vadd.f32 %v1984, %v2128
        %v2130 = vpop.f32.mrb[0].mxu0
        %v2131 = vpop.f32.mrb[0].mxu0
        %v2132 = vadd.f32 %v1987, %v2131
        %v2133 = vpop.f32.mrb[0].mxu0
        %2134 = vmatprep.mubr.bf16.mxu0 0
        %2135 = vmatmul.mubr.bf16.gmra.mrb[0].mxu0 %v645
        %v2136 = vpop.f32.mrb[0].mxu0
        %v2137 = vadd.f32 %v1992, %v2136
        %v2138 = vpop.f32.mrb[0].mxu0
        %v2139 = vpop.f32.mrb[0].mxu0
        %v2140 = vadd.f32 %v1995, %v2139
        %v2141 = vpop.f32.mrb[0].mxu0
        %2142 = vmatprep.mubr.bf16.mxu0 0
        %2143 = vmatmul.mubr.bf16.gmra.mrb[0].mxu0 %v648
        %v2144 = vpop.f32.mrb[0].mxu0
        %v2145 = vadd.f32 %v2000, %v2144
        %v2146 = vpop.f32.mrb[0].mxu0
        %v2147 = vpop.f32.mrb[0].mxu0
        %v2148 = vadd.f32 %v2003, %v2147
        %v2149 = vpop.f32.mrb[0].mxu0
        %2150 = vmatprep.mubr.bf16.mxu0 0
        %2151 = vmatmul.mubr.bf16.gmra.mrb[0].mxu0 %v651
        %v2152 = vpop.f32.mrb[0].mxu0
        %v2153 = vadd.f32 %v2008, %v2152
        %v2154 = vpop.f32.mrb[0].mxu0
        %v2155 = vpop.f32.mrb[0].mxu0
        %v2156 = vadd.f32 %v2011, %v2155
        %v2157 = vpop.f32.mrb[0].mxu0
        %2158 = vdwg.mxu0
        %v2159 = vrot.slane %v2049, 2
        %v2160 = vrot.slane %v2052, 2
        %v2161 = vrot.slane %v2057, 2
        %v2162 = vrot.slane %v2060, 2
        %v2163 = vrot.slane %v2065, 2
        %v2164 = vrot.slane %v2068, 2
        %v2165 = vrot.slane %v2073, 2
        %v2166 = vrot.slane %v2076, 2
        %v2167 = vrot.slane %v2081, 2
        %v2168 = vrot.slane %v2084, 2
        %v2169 = vrot.slane %v2089, 2
        %v2170 = vrot.slane %v2092, 2
        %v2171 = vrot.slane %v2097, 2
        %v2172 = vrot.slane %v2100, 2
        %v2173 = vrot.slane %v2105, 2
        %v2174 = vrot.slane %v2108, 2
        %v2175 = vrot.slane %v2113, 2
        %v2176 = vrot.slane %v2116, 2
        %v2177 = vrot.slane %v2121, 2
        %v2178 = vrot.slane %v2124, 2
        %v2179 = vrot.slane %v2129, 2
        %v2180 = vrot.slane %v2132, 2
        %v2181 = vrot.slane %v2137, 2
        %v2182 = vrot.slane %v2140, 2
        %v2183 = vrot.slane %v2145, 2
        %v2184 = vrot.slane %v2148, 2
        %v2185 = vrot.slane %v2153, 2
        %v2186 = vrot.slane %v2156, 2
        %vm2187 = vcmp.lt.s32.totalorder %v1212, 6
        %v2188 = vsel %vm2187, %v2185, %v2186
        %v2189 = vsel %vm2187, %v2184, %v2185
        %v2190 = vsel %vm2187, %v2183, %v2184
        %v2191 = vsel %vm2187, %v2182, %v2183
        %v2192 = vsel %vm2187, %v2181, %v2182
        %v2193 = vsel %vm2187, %v2180, %v2181
        %v2194 = vsel %vm2187, %v2179, %v2180
        %v2195 = vsel %vm2187, %v2178, %v2179
        %v2196 = vsel %vm2187, %v2177, %v2178
        %v2197 = vsel %vm2187, %v2176, %v2177
        %v2198 = vsel %vm2187, %v2175, %v2176
        %v2199 = vsel %vm2187, %v2174, %v2175
        %v2200 = vsel %vm2187, %v2173, %v2174
        %v2201 = vsel %vm2187, %v2172, %v2173
        %v2202 = vsel %vm2187, %v2171, %v2172
        %v2203 = vsel %vm2187, %v2170, %v2171
        %v2204 = vsel %vm2187, %v2169, %v2170
        %v2205 = vsel %vm2187, %v2168, %v2169
        %v2206 = vsel %vm2187, %v2167, %v2168
        %v2207 = vsel %vm2187, %v2166, %v2167
        %v2208 = vsel %vm2187, %v2165, %v2166
        %v2209 = vsel %vm2187, %v2164, %v2165
        %v2210 = vsel %vm2187, %v2163, %v2164
        %v2211 = vsel %vm2187, %v2162, %v2163
        %v2212 = vsel %vm2187, %v2161, %v2162
        %v2213 = vsel %vm2187, %v2160, %v2161
        %v2214 = vsel %vm2187, %v2159, %v2160
        %v2215 = vsel %vm2187, %v2186, %v2159
        %v2216 = vadd.f32 %v1566, %v2214
        %v2217 = vadd.f32 %v1569, %v2213
        %v2218 = vadd.f32 %v1574, %v2212
        %v2219 = vadd.f32 %v1577, %v2211
        %v2220 = vadd.f32 %v1582, %v2210
        %v2221 = vadd.f32 %v1585, %v2209
        %v2222 = vadd.f32 %v1590, %v2208
        %v2223 = vadd.f32 %v1593, %v2207
        %v2224 = vadd.f32 %v1598, %v2206
        %v2225 = vadd.f32 %v1601, %v2205
        %v2226 = vadd.f32 %v1606, %v2204
        %v2227 = vadd.f32 %v1609, %v2203
        %v2228 = vadd.f32 %v1614, %v2202
        %v2229 = vadd.f32 %v1617, %v2201
        %v2230 = vadd.f32 %v1622, %v2200
        %v2231 = vadd.f32 %v1625, %v2199
        %v2232 = vadd.f32 %v1630, %v2198
        %v2233 = vadd.f32 %v1633, %v2197
        %v2234 = vadd.f32 %v1638, %v2196
        %v2235 = vadd.f32 %v1641, %v2195
        %v2236 = vadd.f32 %v1646, %v2194
        %v2237 = vadd.f32 %v1649, %v2193
        %v2238 = vadd.f32 %v1654, %v2192
        %v2239 = vadd.f32 %v1657, %v2191
        %v2240 = vadd.f32 %v1662, %v2190
        %v2241 = vadd.f32 %v1665, %v2189
        %v2242 = vadd.f32 %v1670, %v2188
        %v2243 = vadd.f32 %v1673, %v2215
        %v2244 = vld [vmem:[%s2] sm:$0x1]
        %v2246 = vlaneseq
        %v2247 = vshrl.u32 %v2246, 7
        %v2248 = vsub.s32 0, %v2247
        %v2249 = vrot.slane %v2244, %v2248
        %v2251 = vadd.f32 %v2216, %v2249
        %v2252 = vadd.f32 %v2217, %v2249
        %v2253 = vadd.f32 %v2218, %v2249
        %v2254 = vadd.f32 %v2219, %v2249
        %v2255 = vadd.f32 %v2220, %v2249
        %v2256 = vadd.f32 %v2221, %v2249
        %v2257 = vadd.f32 %v2222, %v2249
        %v2258 = vadd.f32 %v2223, %v2249
        %v2259 = vadd.f32 %v2224, %v2249
        %v2260 = vadd.f32 %v2225, %v2249
        %v2261 = vadd.f32 %v2226, %v2249
        %v2262 = vadd.f32 %v2227, %v2249
        %v2263 = vadd.f32 %v2228, %v2249
        %v2264 = vadd.f32 %v2229, %v2249
        %v2265 = vadd.f32 %v2230, %v2249
        %v2266 = vadd.f32 %v2231, %v2249
        %v2267 = vadd.f32 %v2232, %v2249
        %v2268 = vadd.f32 %v2233, %v2249
        %v2269 = vadd.f32 %v2234, %v2249
        %v2270 = vadd.f32 %v2235, %v2249
        %v2271 = vadd.f32 %v2236, %v2249
        %v2272 = vadd.f32 %v2237, %v2249
        %v2273 = vadd.f32 %v2238, %v2249
        %v2274 = vadd.f32 %v2239, %v2249
        %v2275 = vadd.f32 %v2240, %v2249
        %v2276 = vadd.f32 %v2241, %v2249
        %v2277 = vadd.f32 %v2242, %v2249
        %v2278 = vadd.f32 %v2243, %v2249
        %2279 = vst [vmem:[%s217] sm:$0xff] %v2251
        %2280 = vst [vmem:[%s217 + $0x8] sm:$0xff] %v2252
        %2281 = vst [vmem:[%s217 + $0x10] sm:$0xff] %v2253
        %2282 = vst [vmem:[%s217 + $0x18] sm:$0xff] %v2254
        %2283 = vst [vmem:[%s217 + $0x20] sm:$0xff] %v2255
        %2284 = vst [vmem:[%s217 + $0x28] sm:$0xff] %v2256
        %2285 = vst [vmem:[%s217 + $0x30] sm:$0xff] %v2257
        %2286 = vst [vmem:[%s217 + $0x38] sm:$0xff] %v2258
        %2287 = vst [vmem:[%s217 + $0x40] sm:$0xff] %v2259
        %2288 = vst [vmem:[%s217 + $0x48] sm:$0xff] %v2260
        %2289 = vst [vmem:[%s217 + $0x50] sm:$0xff] %v2261
        %2290 = vst [vmem:[%s217 + $0x58] sm:$0xff] %v2262
        %2291 = vst [vmem:[%s217 + $0x60] sm:$0xff] %v2263
        %2292 = vst [vmem:[%s217 + $0x68] sm:$0xff] %v2264
        %2293 = vst [vmem:[%s217 + $0x70] sm:$0xff] %v2265
        %2294 = vst [vmem:[%s217 + $0x78] sm:$0xff] %v2266
        %2295 = vst [vmem:[%s217 + $0x80] sm:$0xff] %v2267
        %2296 = vst [vmem:[%s217 + $0x88] sm:$0xff] %v2268
        %2297 = vst [vmem:[%s217 + $0x90] sm:$0xff] %v2269
        %2298 = vst [vmem:[%s217 + $0x98] sm:$0xff] %v2270
        %2299 = vst [vmem:[%s217 + $0xa0] sm:$0xff] %v2271
        %2300 = vst [vmem:[%s217 + $0xa8] sm:$0xff] %v2272
        %2301 = vst [vmem:[%s217 + $0xb0] sm:$0xff] %v2273
        %2302 = vst [vmem:[%s217 + $0xb8] sm:$0xff] %v2274
        %2303 = vst [vmem:[%s217 + $0xc0] sm:$0xff] %v2275
        %2304 = vst [vmem:[%s217 + $0xc8] sm:$0xff] %v2276
        %2305 = vst [vmem:[%s217 + $0xd0] sm:$0xff] %v2277
        %2306 = vst [vmem:[%s217 + $0xd8] sm:$0xff] %v2278
        %s2307 = sand.u32 %s111, 1
        %s2308 = scalar_lea.sflag [#allocation5], %s2307
        %s2309 = sand.u32 %s111, 1
        %s2310 = smul.addr %s2309, 224
        %s2311 = scalar_lea.vmem [#allocation8], %s2310
        // Predicated region
        $region41: #{tpu_custom_call.1} parent=31 // pred_check
          %p2312 = pneg %p121
        $region42: #{tpu_custom_call.1} parent=31 // pred_check_branch
          %2314 = sbr.rel (%p2312) target = $region44
        $region43: #{tpu_custom_call.1} parent=31 // pred_region
          %s2315 = smul.u32 14, %s26
          %s2317 = ssub.s32 3584, 3584
          %2318 = vsyncadd %s2308, %s2317
          %s2319 = smul.addr %s2315, 2
          %s2320 = smul.addr %s25, 28
          %s2321 = sadd.s32 %s2319, %s2320
          %s2322 = smul.addr %s2321, 128
          %s2323 = scalar_lea.hbm %s3, %s2322
          %s2324 = sshll.u32 %s2311, 4
          %s2325 = int_to_ptr.vmem [resolvable:$true] %s2324
          %2330 = dma.vmem_to_hbm [thread:$0]  %s2325, 3584, %s2323, %s2308, 128, 128, 8
        $region44: #{tpu_custom_call.1} parent=31 // pred_fallthru
          _
      $region32: #{tpu_custom_call.1} parent=5 // pred_fallthru
        _
      %p2331 = scmp.le.s32.totalorder 2, %s16
      // Predicated region
      $region45: #{tpu_custom_call.1} parent=5 // pred_check
        %p2332 = pneg %p2331
      $region46: #{tpu_custom_call.1} parent=5 // pred_check_branch
        %2334 = sbr.rel (%p2332) target = $region48
      $region47: #{tpu_custom_call.1} parent=5 // pred_region
        %s2335 = ssub.s32 %s16, 2
        // Predicated region
        $region49: #{tpu_custom_call.1} parent=47 // pred_check
          %p2336 = pneg %p127
        $region50: #{tpu_custom_call.1} parent=47 // pred_check_branch
          %2338 = sbr.rel (%p2336) target = $region52
        $region51: #{tpu_custom_call.1} parent=47 // pred_region
          %s2339 = sand.u32 %s112, 1
          %s2340 = scalar_lea.sflag [#allocation5], %s2339
          %s2341 = sand.u32 %s112, 1
          %s2342 = smul.addr %s2341, 224
          %s2343 = scalar_lea.vmem [#allocation8], %s2342
          %2344 = dma.done %s2340, 3584
        $region52: #{tpu_custom_call.1} parent=47 // pred_fallthru
          _
      $region48: #{tpu_custom_call.1} parent=5 // pred_fallthru
        _
    $region6: #{tpu_custom_call.1} parent=1 // loop_footer
      %s20 = sadd.s32 1, %s16
    $region7: #{tpu_custom_call.1} parent=1 // loop_footer_branch
      %15 = sbr.rel target = $region3
    $region8: #{tpu_custom_call.1} parent=1 // loop_exit
      _
    %2345 = vsyncpa [#allocation4], 1
    %s2346 = scalar_lea.sflag [#allocation4], 1
    %2347 = vsyncpa %s2346, 1
    %2348 = vsyncpa [#allocation7], 1
    %2349 = vsyncpa [#allocation5], 1
    %s2350 = scalar_lea.sflag [#allocation5], 1
    %2351 = vsyncpa %s2350, 1

</llo_original>
